<compile_context>
chip_gen: v6e
topology: v6e:2x2x1
jax: 0.10.0
libtpu: 0.0.40
codegen_flags: <defaults>
</compile_context>

<pallas_src>
import math

import jax
import jax.numpy as jnp
from jax.experimental import pallas as pl
from jax.experimental.pallas import tpu as pltpu


# ----------------------------------------------------------------------------
# Fused conv (+ bias + norm + activation) Pallas kernel
# ----------------------------------------------------------------------------
def _make_fused_conv_kernel(offsets_per_phase, L_out, epilogue):
    """Builds a kernel computing, per output phase p:
         acc_p = W_flat[p] @ concat_k( x[:, off_pk : off_pk + L_out] ) + bias
       followed by a fused epilogue over ALL phases jointly:
         'in_relu'  : InstanceNorm1d(affine=False, eps=1e-5, biased var) + ReLU
         'sigmoid'  : elementwise sigmoid (stable tanh form)
         'none'     : identity
    """
    P = len(offsets_per_phase)
    n_inv = 1.0 / float(P * L_out)

    def kernel(x_ref, w_ref, b_ref, o_ref):
        x = x_ref[0]                                   # (C_in_eff, L_in)  f32
        bias = b_ref[...]                              # (C_out, 1)        f32

        accs = []
        for p in range(P):
            offs = offsets_per_phase[p]
            # Stack the tap-shifted views along the channel (sublane) axis so the
            # whole tap sum becomes a single MXU dot with contraction T*C_in_eff.
            x_stack = jnp.concatenate(
                [x[:, o:o + L_out] for o in offs], axis=0
            ).astype(jnp.bfloat16)                     # (D, L_out) bf16 operand
            acc = jnp.dot(w_ref[p], x_stack,
                          preferred_element_type=jnp.float32)   # f32 accum
            accs.append(acc + bias)

        if epilogue == "in_relu":
            # One-pass stats: mean and E[x^2] over all phases & columns per channel.
            s1 = accs[0].sum(axis=1, keepdims=True)
            s2 = (accs[0] * accs[0]).sum(axis=1, keepdims=True)
            for a in accs[1:]:
                s1 = s1 + a.sum(axis=1, keepdims=True)
                s2 = s2 + (a * a).sum(axis=1, keepdims=True)
            mean = s1 * n_inv
            var = jnp.maximum(s2 * n_inv - mean * mean, 0.0)
            inv = jax.lax.rsqrt(var + 1e-5)
            for p, a in enumerate(accs):
                y = jnp.maximum((a - mean) * inv, 0.0)
                o_ref[0, p] = y.astype(o_ref.dtype)
        elif epilogue == "sigmoid":
            for p, a in enumerate(accs):
                y = 0.5 * (jnp.tanh(0.5 * a) + 1.0)    # stable sigmoid, EUP tanh
                o_ref[0, p] = y.astype(o_ref.dtype)
        else:
            for p, a in enumerate(accs):
                o_ref[0, p] = a.astype(o_ref.dtype)

    return kernel


def _fused_conv(x_eff, w_flat, b, offsets_per_phase, L_out, epilogue):
    """x_eff: (B, C_in_eff, L_in)  f32
       w_flat: (P, C_out, D) where D = (#taps per phase) * C_in_eff
       b: (C_out,)
       Returns (B, P, C_out, L_out) in x_eff.dtype."""
    B, C_eff, L_in = x_eff.shape
    P, C_out, D = w_flat.shape
    kernel = _make_fused_conv_kernel(
        tuple(tuple(o) for o in offsets_per_phase), int(L_out), epilogue)

    return pl.pallas_call(
        kernel,
        out_shape=jax.ShapeDtypeStruct((B, P, C_out, L_out), x_eff.dtype),
        grid=(B,),
        in_specs=[
            pl.BlockSpec((1, C_eff, L_in), lambda i: (i, 0, 0)),
            pl.BlockSpec((P, C_out, D), lambda i: (0, 0, 0)),
            pl.BlockSpec((C_out, 1), lambda i: (0, 0)),
        ],
        out_specs=pl.BlockSpec((1, P, C_out, L_out), lambda i: (i, 0, 0, 0)),
        compiler_params=pltpu.CompilerParams(dimension_semantics=("parallel",)),
    )(x_eff, w_flat.astype(jnp.bfloat16), b.reshape(C_out, 1).astype(jnp.float32))


# ----------------------------------------------------------------------------
# Layer wrappers (JAX glue builds the tap plan, kernel does everything else)
# ----------------------------------------------------------------------------
def conv1d_fused(x, w, b, *, padding, epilogue):
    """Stride-1 Conv1d. x: (B, C_in, L), w: (C_out, C_in, K) [PyTorch], b: (C_out,)."""
    B, C_in, L = x.shape
    C_out, _, K = w.shape
    x_pad = jnp.pad(x, ((0, 0), (0, 0), (padding, padding)))
    L_out = L + 2 * padding - K + 1
    # (C_out, K*C_in) with ordering [W_0 | W_1 | ... | W_{K-1}] matching the kernel stack.
    w_flat = jnp.transpose(w, (0, 2, 1)).reshape(C_out, K * C_in)[None]
    offsets = [list(range(K))]
    out = _fused_conv(x_pad, w_flat, b, offsets, L_out, epilogue)
    return out[:, 0]                                     # (B, C_out, L_out)


def conv1d_s2_fused(x, w, b, *, epilogue):
    """Conv1d kernel_size=3, stride=2, padding=1, computed directly strided
    via an even/odd phase split of the padded input (no compute-then-discard)."""
    B, C_in, L = x.shape
    C_out, _, K = w.shape
    assert K == 3 and L % 2 == 0
    x_pad = jnp.pad(x, ((0, 0), (0, 0), (1, 1)))         # (B, C_in, L+2)
    # phase split: x_e = x_pad[..., 0::2], x_o = x_pad[..., 1::2]
    x_ps = x_pad.reshape(B, C_in, (L + 2) // 2, 2)
    x_eff = jnp.concatenate([x_ps[..., 0], x_ps[..., 1]], axis=1)  # (B, 2*C_in, L/2+1)
    L_out = L // 2
    # y[j] = W0 @ x_e[j] + W1 @ x_o[j] + W2 @ x_e[j+1]
    W0, W1, W2 = w[:, :, 0], w[:, :, 1], w[:, :, 2]
    zeros = jnp.zeros_like(W0)
    # super-tap 0 (offset 0): [W0 | W1]; super-tap 1 (offset 1): [W2 | 0]
    w_flat = jnp.concatenate([W0, W1, W2, zeros], axis=1)[None]    # (1, C_out, 4*C_in)
    offsets = [[0, 1]]
    out = _fused_conv(x_eff, w_flat, b, offsets, L_out, epilogue)
    return out[:, 0]                                     # (B, C_out, L/2)


def conv_transpose1d_fused(x, w, b, *, epilogue):
    """ConvTranspose1d kernel_size=4, stride=2, padding=1 via polyphase decomposition.
    x: (B, C_in, L), w: (C_in, C_out, K) [PyTorch ConvTranspose1d layout]."""
    B, C_in, L = x.shape
    _, C_out, K = w.shape
    assert K == 4
    x_pad = jnp.pad(x, ((0, 0), (0, 0), (1, 1)))         # (B, C_in, L+2), x_pad[m] = x[m-1]
    w_t = jnp.transpose(w, (1, 0, 2))                    # (C_out, C_in, K)
    # y[2j]   = W3 @ x_pad[j]   + W1 @ x_pad[j+1]
    # y[2j+1] = W2 @ x_pad[j+1] + W0 @ x_pad[j+2]
    w_even = jnp.concatenate([w_t[:, :, 3], w_t[:, :, 1]], axis=1)  # (C_out, 2*C_in)
    w_odd = jnp.concatenate([w_t[:, :, 2], w_t[:, :, 0]], axis=1)
    w_flat = jnp.stack([w_even, w_odd], axis=0)          # (2, C_out, 2*C_in)
    offsets = [[0, 1], [1, 2]]
    out = _fused_conv(x_pad, w_flat, b, offsets, L, epilogue)       # (B, 2, C_out, L)
    # interleave even/odd phases -> (B, C_out, 2*L)
    return jnp.transpose(out, (0, 2, 3, 1)).reshape(B, C_out, 2 * L)


# ----------------------------------------------------------------------------
# Parameter init (deterministic, PyTorch-style uniform bounds)
# ----------------------------------------------------------------------------
def _init_conv(key, c_out, c_in, k):
    bound = 1.0 / math.sqrt(c_in * k)
    kw, kb = jax.random.split(key)
    w = jax.random.uniform(kw, (c_out, c_in, k), jnp.float32, -bound, bound)
    b = jax.random.uniform(kb, (c_out,), jnp.float32, -bound, bound)
    return w, b


def _init_convT(key, c_in, c_out, k):
    bound = 1.0 / math.sqrt(c_out * k)   # PyTorch fan_in for ConvTranspose weight (c_in, c_out, k)
    kw, kb = jax.random.split(key)
    w = jax.random.uniform(kw, (c_in, c_out, k), jnp.float32, -bound, bound)
    b = jax.random.uniform(kb, (c_out,), jnp.float32, -bound, bound)
    return w, b


class Generator:
    """Pallas/JAX port of the PyTorch CycleGAN 1-D Generator."""

    def __init__(self, key, input_channels=80, ngf=64, output_channels=80):
        ks = jax.random.split(key, 8)
        # encoder
        self.enc1 = _init_conv(ks[0], ngf, input_channels, 7)        # k7 p3
        self.enc2 = _init_conv(ks[1], ngf * 2, ngf, 3)               # k3 s2 p1
        self.enc3 = _init_conv(ks[2], ngf * 4, ngf * 2, 3)           # k3 s2 p1
        # bottleneck
        self.bot1 = _init_conv(ks[3], ngf * 4, ngf * 4, 3)           # k3 p1
        self.bot2 = _init_conv(ks[4], ngf * 4, ngf * 4, 3)           # k3 p1
        # decoder
        self.dec1 = _init_convT(ks[5], ngf * 4, ngf * 2, 4)          # k4 s2 p1
        self.dec2 = _init_convT(ks[6], ngf * 2, ngf, 4)              # k4 s2 p1
        self.dec3 = _init_conv(ks[7], output_channels, ngf, 7)       # k7 p3

    def __call__(self, x):
        # encoder
        x = conv1d_fused(x, *self.enc1, padding=3, epilogue="in_relu")
        x = conv1d_s2_fused(x, *self.enc2, epilogue="in_relu")
        x = conv1d_s2_fused(x, *self.enc3, epilogue="in_relu")
        # bottleneck
        x = conv1d_fused(x, *self.bot1, padding=1, epilogue="in_relu")
        x = conv1d_fused(x, *self.bot2, padding=1, epilogue="in_relu")
        # decoder
        x = conv_transpose1d_fused(x, *self.dec1, epilogue="in_relu")
        x = conv_transpose1d_fused(x, *self.dec2, epilogue="in_relu")
        x = conv1d_fused(x, *self.dec3, padding=3, epilogue="sigmoid")
        return x


if __name__ == "__main__":
    key = jax.random.PRNGKey(0)
    k_params, k_x = jax.random.split(key)

    # Small shapes consistent with the module: batch=2, channels=8, length=16
    # (length divisible by 4 so the two stride-2 down/up samplings round-trip).
    B, C, L = 2, 8, 16
    model = Generator(k_params, input_channels=C, ngf=8, output_channels=C)
    x = jax.random.normal(k_x, (B, C, L), jnp.float32)    # layout: NCL

    fwd = jax.jit(model.__call__)
    y = jax.block_until_ready(fwd(x))

    assert y.shape == (B, C, L), y.shape
    assert bool(jnp.all(jnp.isfinite(y)))
    assert bool(jnp.all((y >= 0.0) & (y <= 1.0)))          # sigmoid output range
    print("KERNEL_OK")
</pallas_src>

<mosaic_0001>
module attributes {stable_mosaic.version = 11 : i64} {
  func.func @kernel(%arg0: i32, %arg1: memref<1x8x22xf32, #tpu.memory_space<vmem>>, %arg2: memref<1x8x56xbf16, #tpu.memory_space<vmem>>, %arg3: memref<8x1xf32, #tpu.memory_space<vmem>>, %arg4: memref<1x1x8x16xf32, #tpu.memory_space<vmem>>) attributes {dimension_semantics = [#tpu.dimension_semantics<parallel>], iteration_bounds = array<i64: 2>, scalar_prefetch = 0 : i64, scratch_operands = 0 : i64, tpu.core_type = #tpu.core_type<tc>, window_params = [{transform_indices = @transform_0, window_bounds = array<i64: 1, 8, 22>}, {pipeline_mode = #tpu.pipeline_mode<synchronous>, transform_indices = @transform_1, window_bounds = array<i64: 1, 8, 56>}, {pipeline_mode = #tpu.pipeline_mode<synchronous>, transform_indices = @transform_2, window_bounds = array<i64: 8, 1>}, {transform_indices = @transform_3, window_bounds = array<i64: 1, 1, 8, 16>}]} {
    %c0 = arith.constant 0 : index
    %c0_0 = arith.constant 0 : index
    %c0_1 = arith.constant 0 : index
    %0 = vector.load %arg1[%c0, %c0_0, %c0_1] : memref<1x8x22xf32, #tpu.memory_space<vmem>>, vector<1x8x22xf32>
    %1 = vector.shape_cast %0 : vector<1x8x22xf32> to vector<8x22xf32>
    %c0_2 = arith.constant 0 : index
    %c0_3 = arith.constant 0 : index
    %2 = vector.load %arg3[%c0_2, %c0_3] : memref<8x1xf32, #tpu.memory_space<vmem>>, vector<8x1xf32>
    %3 = vector.extract_strided_slice %1 {offsets = [0, 0], sizes = [8, 16], strides = [1, 1]} : vector<8x22xf32> to vector<8x16xf32>
    %4 = vector.extract_strided_slice %1 {offsets = [0, 1], sizes = [8, 16], strides = [1, 1]} : vector<8x22xf32> to vector<8x16xf32>
    %5 = vector.extract_strided_slice %1 {offsets = [0, 2], sizes = [8, 16], strides = [1, 1]} : vector<8x22xf32> to vector<8x16xf32>
    %6 = vector.extract_strided_slice %1 {offsets = [0, 3], sizes = [8, 16], strides = [1, 1]} : vector<8x22xf32> to vector<8x16xf32>
    %7 = vector.extract_strided_slice %1 {offsets = [0, 4], sizes = [8, 16], strides = [1, 1]} : vector<8x22xf32> to vector<8x16xf32>
    %8 = vector.extract_strided_slice %1 {offsets = [0, 5], sizes = [8, 16], strides = [1, 1]} : vector<8x22xf32> to vector<8x16xf32>
    %9 = vector.extract_strided_slice %1 {offsets = [0, 6], sizes = [8, 16], strides = [1, 1]} : vector<8x22xf32> to vector<8x16xf32>
    %10 = tpu.concatenate %3, %4, %5, %6, %7, %8, %9 in 0 : vector<8x16xf32>, vector<8x16xf32>, vector<8x16xf32>, vector<8x16xf32>, vector<8x16xf32>, vector<8x16xf32>, vector<8x16xf32> -> vector<56x16xf32>
    %11 = arith.truncf %10 : vector<56x16xf32> to vector<56x16xbf16>
    %c0_4 = arith.constant 0 : index
    %c0_5 = arith.constant 0 : index
    %c0_6 = arith.constant 0 : index
    %12 = vector.load %arg2[%c0_4, %c0_5, %c0_6] : memref<1x8x56xbf16, #tpu.memory_space<vmem>>, vector<1x8x56xbf16>
    %13 = vector.shape_cast %12 : vector<1x8x56xbf16> to vector<8x56xbf16>
    %cst = arith.constant dense<0.000000e+00> : vector<8x16xf32>
    %14 = tpu.matmul %13, %11, %cst {dimension_numbers = #tpu.dot_dimension_numbers<[1], [0], [0], [1], [0, 0, 1, 1], [], []>} : vector<8x56xbf16>, vector<56x16xbf16>, vector<8x16xf32> -> vector<8x16xf32>
    %15 = vector.broadcast %2 : vector<8x1xf32> to vector<8x16xf32>
    %16 = arith.addf %14, %15 : vector<8x16xf32>
    %cst_7 = arith.constant dense<0.000000e+00> : vector<8xf32>
    %17 = vector.multi_reduction <add>, %16, %cst_7 [1] : vector<8x16xf32> to vector<8xf32>
    %18 = vector.shape_cast %17 : vector<8xf32> to vector<8x1xf32>
    %19 = arith.mulf %16, %16 : vector<8x16xf32>
    %cst_8 = arith.constant dense<0.000000e+00> : vector<8xf32>
    %20 = vector.multi_reduction <add>, %19, %cst_8 [1] : vector<8x16xf32> to vector<8xf32>
    %21 = vector.shape_cast %20 : vector<8xf32> to vector<8x1xf32>
    %cst_9 = arith.constant 6.250000e-02 : f32
    %22 = vector.broadcast %cst_9 : f32 to vector<8x1xf32>
    %23 = arith.mulf %18, %22 : vector<8x1xf32>
    %cst_10 = arith.constant 6.250000e-02 : f32
    %24 = vector.broadcast %cst_10 : f32 to vector<8x1xf32>
    %25 = arith.mulf %21, %24 : vector<8x1xf32>
    %26 = arith.mulf %23, %23 : vector<8x1xf32>
    %27 = arith.subf %25, %26 : vector<8x1xf32>
    %cst_11 = arith.constant 0.000000e+00 : f32
    %28 = vector.broadcast %cst_11 : f32 to vector<8x1xf32>
    %29 = arith.maximumf %27, %28 : vector<8x1xf32>
    %cst_12 = arith.constant 9.99999974E-6 : f32
    %30 = vector.broadcast %cst_12 : f32 to vector<8x1xf32>
    %31 = arith.addf %29, %30 : vector<8x1xf32>
    %32 = math.rsqrt %31 : vector<8x1xf32>
    %33 = vector.broadcast %23 : vector<8x1xf32> to vector<8x16xf32>
    %34 = arith.subf %16, %33 : vector<8x16xf32>
    %35 = vector.broadcast %32 : vector<8x1xf32> to vector<8x16xf32>
    %36 = arith.mulf %34, %35 : vector<8x16xf32>
    %cst_13 = arith.constant 0.000000e+00 : f32
    %37 = vector.broadcast %cst_13 : f32 to vector<8x16xf32>
    %38 = arith.maximumf %36, %37 : vector<8x16xf32>
    %c0_14 = arith.constant 0 : index
    %c0_15 = arith.constant 0 : index
    %c0_16 = arith.constant 0 : index
    %c0_17 = arith.constant 0 : index
    %39 = vector.load %arg4[%c0_14, %c0_15, %c0_16, %c0_17] : memref<1x1x8x16xf32, #tpu.memory_space<vmem>>, vector<1x1x8x16xf32>
    %40 = vector.shape_cast %39 : vector<1x1x8x16xf32> to vector<8x16xf32>
    %41 = vector.shape_cast %38 : vector<8x16xf32> to vector<1x1x8x16xf32>
    tpu.vector_store %arg4[%c0_14, %c0_15, %c0_16, %c0_17], %41 {strides = array<i32>} : memref<1x1x8x16xf32, #tpu.memory_space<vmem>>, vector<1x1x8x16xf32>,
    return
  }
  func.func @transform_0(%arg0: i32) -> (i32, i32, i32) {
    %c0_i32 = arith.constant 0 : i32
    %c0_i32_0 = arith.constant 0 : i32
    %c0_i32_1 = arith.constant 0 : i32
    return %arg0, %c0_i32, %c0_i32_0 : i32, i32, i32
  }
  func.func @transform_1(%arg0: i32) -> (i32, i32, i32) {
    %c0_i32 = arith.constant 0 : i32
    %c0_i32_0 = arith.constant 0 : i32
    %c0_i32_1 = arith.constant 0 : i32
    %c0_i32_2 = arith.constant 0 : i32
    return %c0_i32, %c0_i32_0, %c0_i32_1 : i32, i32, i32
  }
  func.func @transform_2(%arg0: i32) -> (i32, i32) {
    %c0_i32 = arith.constant 0 : i32
    %c0_i32_0 = arith.constant 0 : i32
    %c0_i32_1 = arith.constant 0 : i32
    return %c0_i32, %c0_i32_0 : i32, i32
  }
  func.func @transform_3(%arg0: i32) -> (i32, i32, i32, i32) {
    %c0_i32 = arith.constant 0 : i32
    %c0_i32_0 = arith.constant 0 : i32
    %c0_i32_1 = arith.constant 0 : i32
    %c0_i32_2 = arith.constant 0 : i32
    return %arg0, %c0_i32, %c0_i32_0, %c0_i32_1 : i32, i32, i32, i32
  }
}

module attributes {stable_mosaic.version = 11 : i64} {
  func.func @kernel(%arg0: i32, %arg1: memref<1x16x9xf32, #tpu.memory_space<vmem>>, %arg2: memref<1x16x32xbf16, #tpu.memory_space<vmem>>, %arg3: memref<16x1xf32, #tpu.memory_space<vmem>>, %arg4: memref<1x1x16x8xf32, #tpu.memory_space<vmem>>) attributes {dimension_semantics = [#tpu.dimension_semantics<parallel>], iteration_bounds = array<i64: 2>, scalar_prefetch = 0 : i64, scratch_operands = 0 : i64, tpu.core_type = #tpu.core_type<tc>, window_params = [{transform_indices = @transform_0, window_bounds = array<i64: 1, 16, 9>}, {pipeline_mode = #tpu.pipeline_mode<synchronous>, transform_indices = @transform_1, window_bounds = array<i64: 1, 16, 32>}, {pipeline_mode = #tpu.pipeline_mode<synchronous>, transform_indices = @transform_2, window_bounds = array<i64: 16, 1>}, {transform_indices = @transform_3, window_bounds = array<i64: 1, 1, 16, 8>}]} {
    %c0 = arith.constant 0 : index
    %c0_0 = arith.constant 0 : index
    %c0_1 = arith.constant 0 : index
    %0 = vector.load %arg1[%c0, %c0_0, %c0_1] : memref<1x16x9xf32, #tpu.memory_space<vmem>>, vector<1x16x9xf32>
    %1 = vector.shape_cast %0 : vector<1x16x9xf32> to vector<16x9xf32>
    %c0_2 = arith.constant 0 : index
    %c0_3 = arith.constant 0 : index
    %2 = vector.load %arg3[%c0_2, %c0_3] : memref<16x1xf32, #tpu.memory_space<vmem>>, vector<16x1xf32>
    %3 = vector.extract_strided_slice %1 {offsets = [0, 0], sizes = [16, 8], strides = [1, 1]} : vector<16x9xf32> to vector<16x8xf32>
    %4 = vector.extract_strided_slice %1 {offsets = [0, 1], sizes = [16, 8], strides = [1, 1]} : vector<16x9xf32> to vector<16x8xf32>
    %5 = tpu.concatenate %3, %4 in 0 : vector<16x8xf32>, vector<16x8xf32> -> vector<32x8xf32>
    %6 = arith.truncf %5 : vector<32x8xf32> to vector<32x8xbf16>
    %c0_4 = arith.constant 0 : index
    %c0_5 = arith.constant 0 : index
    %c0_6 = arith.constant 0 : index
    %7 = vector.load %arg2[%c0_4, %c0_5, %c0_6] : memref<1x16x32xbf16, #tpu.memory_space<vmem>>, vector<1x16x32xbf16>
    %8 = vector.shape_cast %7 : vector<1x16x32xbf16> to vector<16x32xbf16>
    %cst = arith.constant dense<0.000000e+00> : vector<16x8xf32>
    %9 = tpu.matmul %8, %6, %cst {dimension_numbers = #tpu.dot_dimension_numbers<[1], [0], [0], [1], [0, 0, 1, 1], [], []>} : vector<16x32xbf16>, vector<32x8xbf16>, vector<16x8xf32> -> vector<16x8xf32>
    %10 = vector.broadcast %2 : vector<16x1xf32> to vector<16x8xf32>
    %11 = arith.addf %9, %10 : vector<16x8xf32>
    %cst_7 = arith.constant dense<0.000000e+00> : vector<16xf32>
    %12 = vector.multi_reduction <add>, %11, %cst_7 [1] : vector<16x8xf32> to vector<16xf32>
    %13 = vector.shape_cast %12 : vector<16xf32> to vector<16x1xf32>
    %14 = arith.mulf %11, %11 : vector<16x8xf32>
    %cst_8 = arith.constant dense<0.000000e+00> : vector<16xf32>
    %15 = vector.multi_reduction <add>, %14, %cst_8 [1] : vector<16x8xf32> to vector<16xf32>
    %16 = vector.shape_cast %15 : vector<16xf32> to vector<16x1xf32>
    %cst_9 = arith.constant 1.250000e-01 : f32
    %17 = vector.broadcast %cst_9 : f32 to vector<16x1xf32>
    %18 = arith.mulf %13, %17 : vector<16x1xf32>
    %cst_10 = arith.constant 1.250000e-01 : f32
    %19 = vector.broadcast %cst_10 : f32 to vector<16x1xf32>
    %20 = arith.mulf %16, %19 : vector<16x1xf32>
    %21 = arith.mulf %18, %18 : vector<16x1xf32>
    %22 = arith.subf %20, %21 : vector<16x1xf32>
    %cst_11 = arith.constant 0.000000e+00 : f32
    %23 = vector.broadcast %cst_11 : f32 to vector<16x1xf32>
    %24 = arith.maximumf %22, %23 : vector<16x1xf32>
    %cst_12 = arith.constant 9.99999974E-6 : f32
    %25 = vector.broadcast %cst_12 : f32 to vector<16x1xf32>
    %26 = arith.addf %24, %25 : vector<16x1xf32>
    %27 = math.rsqrt %26 : vector<16x1xf32>
    %28 = vector.broadcast %18 : vector<16x1xf32> to vector<16x8xf32>
    %29 = arith.subf %11, %28 : vector<16x8xf32>
    %30 = vector.broadcast %27 : vector<16x1xf32> to vector<16x8xf32>
    %31 = arith.mulf %29, %30 : vector<16x8xf32>
    %cst_13 = arith.constant 0.000000e+00 : f32
    %32 = vector.broadcast %cst_13 : f32 to vector<16x8xf32>
    %33 = arith.maximumf %31, %32 : vector<16x8xf32>
    %c0_14 = arith.constant 0 : index
    %c0_15 = arith.constant 0 : index
    %c0_16 = arith.constant 0 : index
    %c0_17 = arith.constant 0 : index
    %34 = vector.load %arg4[%c0_14, %c0_15, %c0_16, %c0_17] : memref<1x1x16x8xf32, #tpu.memory_space<vmem>>, vector<1x1x16x8xf32>
    %35 = vector.shape_cast %34 : vector<1x1x16x8xf32> to vector<16x8xf32>
    %36 = vector.shape_cast %33 : vector<16x8xf32> to vector<1x1x16x8xf32>
    tpu.vector_store %arg4[%c0_14, %c0_15, %c0_16, %c0_17], %36 {strides = array<i32>} : memref<1x1x16x8xf32, #tpu.memory_space<vmem>>, vector<1x1x16x8xf32>,
    return
  }
  func.func @transform_0(%arg0: i32) -> (i32, i32, i32) {
    %c0_i32 = arith.constant 0 : i32
    %c0_i32_0 = arith.constant 0 : i32
    %c0_i32_1 = arith.constant 0 : i32
    return %arg0, %c0_i32, %c0_i32_0 : i32, i32, i32
  }
  func.func @transform_1(%arg0: i32) -> (i32, i32, i32) {
    %c0_i32 = arith.constant 0 : i32
    %c0_i32_0 = arith.constant 0 : i32
    %c0_i32_1 = arith.constant 0 : i32
    %c0_i32_2 = arith.constant 0 : i32
    return %c0_i32, %c0_i32_0, %c0_i32_1 : i32, i32, i32
  }
  func.func @transform_2(%arg0: i32) -> (i32, i32) {
    %c0_i32 = arith.constant 0 : i32
    %c0_i32_0 = arith.constant 0 : i32
    %c0_i32_1 = arith.constant 0 : i32
    return %c0_i32, %c0_i32_0 : i32, i32
  }
  func.func @transform_3(%arg0: i32) -> (i32, i32, i32, i32) {
    %c0_i32 = arith.constant 0 : i32
    %c0_i32_0 = arith.constant 0 : i32
    %c0_i32_1 = arith.constant 0 : i32
    %c0_i32_2 = arith.constant 0 : i32
    return %arg0, %c0_i32, %c0_i32_0, %c0_i32_1 : i32, i32, i32, i32
  }
}

module attributes {stable_mosaic.version = 11 : i64} {
  func.func @kernel(%arg0: i32, %arg1: memref<1x32x5xf32, #tpu.memory_space<vmem>>, %arg2: memref<1x32x64xbf16, #tpu.memory_space<vmem>>, %arg3: memref<32x1xf32, #tpu.memory_space<vmem>>, %arg4: memref<1x1x32x4xf32, #tpu.memory_space<vmem>>) attributes {dimension_semantics = [#tpu.dimension_semantics<parallel>], iteration_bounds = array<i64: 2>, scalar_prefetch = 0 : i64, scratch_operands = 0 : i64, tpu.core_type = #tpu.core_type<tc>, window_params = [{transform_indices = @transform_0, window_bounds = array<i64: 1, 32, 5>}, {pipeline_mode = #tpu.pipeline_mode<synchronous>, transform_indices = @transform_1, window_bounds = array<i64: 1, 32, 64>}, {pipeline_mode = #tpu.pipeline_mode<synchronous>, transform_indices = @transform_2, window_bounds = array<i64: 32, 1>}, {transform_indices = @transform_3, window_bounds = array<i64: 1, 1, 32, 4>}]} {
    %c0 = arith.constant 0 : index
    %c0_0 = arith.constant 0 : index
    %c0_1 = arith.constant 0 : index
    %0 = vector.load %arg1[%c0, %c0_0, %c0_1] : memref<1x32x5xf32, #tpu.memory_space<vmem>>, vector<1x32x5xf32>
    %1 = vector.shape_cast %0 : vector<1x32x5xf32> to vector<32x5xf32>
    %c0_2 = arith.constant 0 : index
    %c0_3 = arith.constant 0 : index
    %2 = vector.load %arg3[%c0_2, %c0_3] : memref<32x1xf32, #tpu.memory_space<vmem>>, vector<32x1xf32>
    %3 = vector.extract_strided_slice %1 {offsets = [0, 0], sizes = [32, 4], strides = [1, 1]} : vector<32x5xf32> to vector<32x4xf32>
    %4 = vector.extract_strided_slice %1 {offsets = [0, 1], sizes = [32, 4], strides = [1, 1]} : vector<32x5xf32> to vector<32x4xf32>
    %5 = tpu.concatenate %3, %4 in 0 : vector<32x4xf32>, vector<32x4xf32> -> vector<64x4xf32>
    %6 = arith.truncf %5 : vector<64x4xf32> to vector<64x4xbf16>
    %c0_4 = arith.constant 0 : index
    %c0_5 = arith.constant 0 : index
    %c0_6 = arith.constant 0 : index
    %7 = vector.load %arg2[%c0_4, %c0_5, %c0_6] : memref<1x32x64xbf16, #tpu.memory_space<vmem>>, vector<1x32x64xbf16>
    %8 = vector.shape_cast %7 : vector<1x32x64xbf16> to vector<32x64xbf16>
    %cst = arith.constant dense<0.000000e+00> : vector<32x4xf32>
    %9 = tpu.matmul %8, %6, %cst {dimension_numbers = #tpu.dot_dimension_numbers<[1], [0], [0], [1], [0, 0, 1, 1], [], []>} : vector<32x64xbf16>, vector<64x4xbf16>, vector<32x4xf32> -> vector<32x4xf32>
    %10 = vector.broadcast %2 : vector<32x1xf32> to vector<32x4xf32>
    %11 = arith.addf %9, %10 : vector<32x4xf32>
    %cst_7 = arith.constant dense<0.000000e+00> : vector<32xf32>
    %12 = vector.multi_reduction <add>, %11, %cst_7 [1] : vector<32x4xf32> to vector<32xf32>
    %13 = vector.shape_cast %12 : vector<32xf32> to vector<32x1xf32>
    %14 = arith.mulf %11, %11 : vector<32x4xf32>
    %cst_8 = arith.constant dense<0.000000e+00> : vector<32xf32>
    %15 = vector.multi_reduction <add>, %14, %cst_8 [1] : vector<32x4xf32> to vector<32xf32>
    %16 = vector.shape_cast %15 : vector<32xf32> to vector<32x1xf32>
    %cst_9 = arith.constant 2.500000e-01 : f32
    %17 = vector.broadcast %cst_9 : f32 to vector<32x1xf32>
    %18 = arith.mulf %13, %17 : vector<32x1xf32>
    %cst_10 = arith.constant 2.500000e-01 : f32
    %19 = vector.broadcast %cst_10 : f32 to vector<32x1xf32>
    %20 = arith.mulf %16, %19 : vector<32x1xf32>
    %21 = arith.mulf %18, %18 : vector<32x1xf32>
    %22 = arith.subf %20, %21 : vector<32x1xf32>
    %cst_11 = arith.constant 0.000000e+00 : f32
    %23 = vector.broadcast %cst_11 : f32 to vector<32x1xf32>
    %24 = arith.maximumf %22, %23 : vector<32x1xf32>
    %cst_12 = arith.constant 9.99999974E-6 : f32
    %25 = vector.broadcast %cst_12 : f32 to vector<32x1xf32>
    %26 = arith.addf %24, %25 : vector<32x1xf32>
    %27 = math.rsqrt %26 : vector<32x1xf32>
    %28 = vector.broadcast %18 : vector<32x1xf32> to vector<32x4xf32>
    %29 = arith.subf %11, %28 : vector<32x4xf32>
    %30 = vector.broadcast %27 : vector<32x1xf32> to vector<32x4xf32>
    %31 = arith.mulf %29, %30 : vector<32x4xf32>
    %cst_13 = arith.constant 0.000000e+00 : f32
    %32 = vector.broadcast %cst_13 : f32 to vector<32x4xf32>
    %33 = arith.maximumf %31, %32 : vector<32x4xf32>
    %c0_14 = arith.constant 0 : index
    %c0_15 = arith.constant 0 : index
    %c0_16 = arith.constant 0 : index
    %c0_17 = arith.constant 0 : index
    %34 = vector.load %arg4[%c0_14, %c0_15, %c0_16, %c0_17] : memref<1x1x32x4xf32, #tpu.memory_space<vmem>>, vector<1x1x32x4xf32>
    %35 = vector.shape_cast %34 : vector<1x1x32x4xf32> to vector<32x4xf32>
    %36 = vector.shape_cast %33 : vector<32x4xf32> to vector<1x1x32x4xf32>
    tpu.vector_store %arg4[%c0_14, %c0_15, %c0_16, %c0_17], %36 {strides = array<i32>} : memref<1x1x32x4xf32, #tpu.memory_space<vmem>>, vector<1x1x32x4xf32>,
    return
  }
  func.func @transform_0(%arg0: i32) -> (i32, i32, i32) {
    %c0_i32 = arith.constant 0 : i32
    %c0_i32_0 = arith.constant 0 : i32
    %c0_i32_1 = arith.constant 0 : i32
    return %arg0, %c0_i32, %c0_i32_0 : i32, i32, i32
  }
  func.func @transform_1(%arg0: i32) -> (i32, i32, i32) {
    %c0_i32 = arith.constant 0 : i32
    %c0_i32_0 = arith.constant 0 : i32
    %c0_i32_1 = arith.constant 0 : i32
    %c0_i32_2 = arith.constant 0 : i32
    return %c0_i32, %c0_i32_0, %c0_i32_1 : i32, i32, i32
  }
  func.func @transform_2(%arg0: i32) -> (i32, i32) {
    %c0_i32 = arith.constant 0 : i32
    %c0_i32_0 = arith.constant 0 : i32
    %c0_i32_1 = arith.constant 0 : i32
    return %c0_i32, %c0_i32_0 : i32, i32
  }
  func.func @transform_3(%arg0: i32) -> (i32, i32, i32, i32) {
    %c0_i32 = arith.constant 0 : i32
    %c0_i32_0 = arith.constant 0 : i32
    %c0_i32_1 = arith.constant 0 : i32
    %c0_i32_2 = arith.constant 0 : i32
    return %arg0, %c0_i32, %c0_i32_0, %c0_i32_1 : i32, i32, i32, i32
  }
}

module attributes {stable_mosaic.version = 11 : i64} {
  func.func @kernel(%arg0: i32, %arg1: memref<1x32x6xf32, #tpu.memory_space<vmem>>, %arg2: memref<1x32x96xbf16, #tpu.memory_space<vmem>>, %arg3: memref<32x1xf32, #tpu.memory_space<vmem>>, %arg4: memref<1x1x32x4xf32, #tpu.memory_space<vmem>>) attributes {dimension_semantics = [#tpu.dimension_semantics<parallel>], iteration_bounds = array<i64: 2>, scalar_prefetch = 0 : i64, scratch_operands = 0 : i64, tpu.core_type = #tpu.core_type<tc>, window_params = [{transform_indices = @transform_0, window_bounds = array<i64: 1, 32, 6>}, {pipeline_mode = #tpu.pipeline_mode<synchronous>, transform_indices = @transform_1, window_bounds = array<i64: 1, 32, 96>}, {pipeline_mode = #tpu.pipeline_mode<synchronous>, transform_indices = @transform_2, window_bounds = array<i64: 32, 1>}, {transform_indices = @transform_3, window_bounds = array<i64: 1, 1, 32, 4>}]} {
    %c0 = arith.constant 0 : index
    %c0_0 = arith.constant 0 : index
    %c0_1 = arith.constant 0 : index
    %0 = vector.load %arg1[%c0, %c0_0, %c0_1] : memref<1x32x6xf32, #tpu.memory_space<vmem>>, vector<1x32x6xf32>
    %1 = vector.shape_cast %0 : vector<1x32x6xf32> to vector<32x6xf32>
    %c0_2 = arith.constant 0 : index
    %c0_3 = arith.constant 0 : index
    %2 = vector.load %arg3[%c0_2, %c0_3] : memref<32x1xf32, #tpu.memory_space<vmem>>, vector<32x1xf32>
    %3 = vector.extract_strided_slice %1 {offsets = [0, 0], sizes = [32, 4], strides = [1, 1]} : vector<32x6xf32> to vector<32x4xf32>
    %4 = vector.extract_strided_slice %1 {offsets = [0, 1], sizes = [32, 4], strides = [1, 1]} : vector<32x6xf32> to vector<32x4xf32>
    %5 = vector.extract_strided_slice %1 {offsets = [0, 2], sizes = [32, 4], strides = [1, 1]} : vector<32x6xf32> to vector<32x4xf32>
    %6 = tpu.concatenate %3, %4, %5 in 0 : vector<32x4xf32>, vector<32x4xf32>, vector<32x4xf32> -> vector<96x4xf32>
    %7 = arith.truncf %6 : vector<96x4xf32> to vector<96x4xbf16>
    %c0_4 = arith.constant 0 : index
    %c0_5 = arith.constant 0 : index
    %c0_6 = arith.constant 0 : index
    %8 = vector.load %arg2[%c0_4, %c0_5, %c0_6] : memref<1x32x96xbf16, #tpu.memory_space<vmem>>, vector<1x32x96xbf16>
    %9 = vector.shape_cast %8 : vector<1x32x96xbf16> to vector<32x96xbf16>
    %cst = arith.constant dense<0.000000e+00> : vector<32x4xf32>
    %10 = tpu.matmul %9, %7, %cst {dimension_numbers = #tpu.dot_dimension_numbers<[1], [0], [0], [1], [0, 0, 1, 1], [], []>} : vector<32x96xbf16>, vector<96x4xbf16>, vector<32x4xf32> -> vector<32x4xf32>
    %11 = vector.broadcast %2 : vector<32x1xf32> to vector<32x4xf32>
    %12 = arith.addf %10, %11 : vector<32x4xf32>
    %cst_7 = arith.constant dense<0.000000e+00> : vector<32xf32>
    %13 = vector.multi_reduction <add>, %12, %cst_7 [1] : vector<32x4xf32> to vector<32xf32>
    %14 = vector.shape_cast %13 : vector<32xf32> to vector<32x1xf32>
    %15 = arith.mulf %12, %12 : vector<32x4xf32>
    %cst_8 = arith.constant dense<0.000000e+00> : vector<32xf32>
    %16 = vector.multi_reduction <add>, %15, %cst_8 [1] : vector<32x4xf32> to vector<32xf32>
    %17 = vector.shape_cast %16 : vector<32xf32> to vector<32x1xf32>
    %cst_9 = arith.constant 2.500000e-01 : f32
    %18 = vector.broadcast %cst_9 : f32 to vector<32x1xf32>
    %19 = arith.mulf %14, %18 : vector<32x1xf32>
    %cst_10 = arith.constant 2.500000e-01 : f32
    %20 = vector.broadcast %cst_10 : f32 to vector<32x1xf32>
    %21 = arith.mulf %17, %20 : vector<32x1xf32>
    %22 = arith.mulf %19, %19 : vector<32x1xf32>
    %23 = arith.subf %21, %22 : vector<32x1xf32>
    %cst_11 = arith.constant 0.000000e+00 : f32
    %24 = vector.broadcast %cst_11 : f32 to vector<32x1xf32>
    %25 = arith.maximumf %23, %24 : vector<32x1xf32>
    %cst_12 = arith.constant 9.99999974E-6 : f32
    %26 = vector.broadcast %cst_12 : f32 to vector<32x1xf32>
    %27 = arith.addf %25, %26 : vector<32x1xf32>
    %28 = math.rsqrt %27 : vector<32x1xf32>
    %29 = vector.broadcast %19 : vector<32x1xf32> to vector<32x4xf32>
    %30 = arith.subf %12, %29 : vector<32x4xf32>
    %31 = vector.broadcast %28 : vector<32x1xf32> to vector<32x4xf32>
    %32 = arith.mulf %30, %31 : vector<32x4xf32>
    %cst_13 = arith.constant 0.000000e+00 : f32
    %33 = vector.broadcast %cst_13 : f32 to vector<32x4xf32>
    %34 = arith.maximumf %32, %33 : vector<32x4xf32>
    %c0_14 = arith.constant 0 : index
    %c0_15 = arith.constant 0 : index
    %c0_16 = arith.constant 0 : index
    %c0_17 = arith.constant 0 : index
    %35 = vector.load %arg4[%c0_14, %c0_15, %c0_16, %c0_17] : memref<1x1x32x4xf32, #tpu.memory_space<vmem>>, vector<1x1x32x4xf32>
    %36 = vector.shape_cast %35 : vector<1x1x32x4xf32> to vector<32x4xf32>
    %37 = vector.shape_cast %34 : vector<32x4xf32> to vector<1x1x32x4xf32>
    tpu.vector_store %arg4[%c0_14, %c0_15, %c0_16, %c0_17], %37 {strides = array<i32>} : memref<1x1x32x4xf32, #tpu.memory_space<vmem>>, vector<1x1x32x4xf32>,
    return
  }
  func.func @transform_0(%arg0: i32) -> (i32, i32, i32) {
    %c0_i32 = arith.constant 0 : i32
    %c0_i32_0 = arith.constant 0 : i32
    %c0_i32_1 = arith.constant 0 : i32
    return %arg0, %c0_i32, %c0_i32_0 : i32, i32, i32
  }
  func.func @transform_1(%arg0: i32) -> (i32, i32, i32) {
    %c0_i32 = arith.constant 0 : i32
    %c0_i32_0 = arith.constant 0 : i32
    %c0_i32_1 = arith.constant 0 : i32
    %c0_i32_2 = arith.constant 0 : i32
    return %c0_i32, %c0_i32_0, %c0_i32_1 : i32, i32, i32
  }
  func.func @transform_2(%arg0: i32) -> (i32, i32) {
    %c0_i32 = arith.constant 0 : i32
    %c0_i32_0 = arith.constant 0 : i32
    %c0_i32_1 = arith.constant 0 : i32
    return %c0_i32, %c0_i32_0 : i32, i32
  }
  func.func @transform_3(%arg0: i32) -> (i32, i32, i32, i32) {
    %c0_i32 = arith.constant 0 : i32
    %c0_i32_0 = arith.constant 0 : i32
    %c0_i32_1 = arith.constant 0 : i32
    %c0_i32_2 = arith.constant 0 : i32
    return %arg0, %c0_i32, %c0_i32_0, %c0_i32_1 : i32, i32, i32, i32
  }
}

module attributes {stable_mosaic.version = 11 : i64} {
  func.func @kernel(%arg0: i32, %arg1: memref<1x32x6xf32, #tpu.memory_space<vmem>>, %arg2: memref<2x16x64xbf16, #tpu.memory_space<vmem>>, %arg3: memref<16x1xf32, #tpu.memory_space<vmem>>, %arg4: memref<1x2x16x4xf32, #tpu.memory_space<vmem>>) attributes {dimension_semantics = [#tpu.dimension_semantics<parallel>], iteration_bounds = array<i64: 2>, scalar_prefetch = 0 : i64, scratch_operands = 0 : i64, tpu.core_type = #tpu.core_type<tc>, window_params = [{transform_indices = @transform_0, window_bounds = array<i64: 1, 32, 6>}, {pipeline_mode = #tpu.pipeline_mode<synchronous>, transform_indices = @transform_1, window_bounds = array<i64: 2, 16, 64>}, {pipeline_mode = #tpu.pipeline_mode<synchronous>, transform_indices = @transform_2, window_bounds = array<i64: 16, 1>}, {transform_indices = @transform_3, window_bounds = array<i64: 1, 2, 16, 4>}]} {
    %c0 = arith.constant 0 : index
    %c0_0 = arith.constant 0 : index
    %c0_1 = arith.constant 0 : index
    %0 = vector.load %arg1[%c0, %c0_0, %c0_1] : memref<1x32x6xf32, #tpu.memory_space<vmem>>, vector<1x32x6xf32>
    %1 = vector.shape_cast %0 : vector<1x32x6xf32> to vector<32x6xf32>
    %c0_2 = arith.constant 0 : index
    %c0_3 = arith.constant 0 : index
    %2 = vector.load %arg3[%c0_2, %c0_3] : memref<16x1xf32, #tpu.memory_space<vmem>>, vector<16x1xf32>
    %3 = vector.extract_strided_slice %1 {offsets = [0, 0], sizes = [32, 4], strides = [1, 1]} : vector<32x6xf32> to vector<32x4xf32>
    %4 = vector.extract_strided_slice %1 {offsets = [0, 1], sizes = [32, 4], strides = [1, 1]} : vector<32x6xf32> to vector<32x4xf32>
    %5 = tpu.concatenate %3, %4 in 0 : vector<32x4xf32>, vector<32x4xf32> -> vector<64x4xf32>
    %6 = arith.truncf %5 : vector<64x4xf32> to vector<64x4xbf16>
    %c0_4 = arith.constant 0 : index
    %c0_5 = arith.constant 0 : index
    %c0_6 = arith.constant 0 : index
    %7 = vector.load %arg2[%c0_4, %c0_5, %c0_6] : memref<2x16x64xbf16, #tpu.memory_space<vmem>>, vector<1x16x64xbf16>
    %8 = vector.shape_cast %7 : vector<1x16x64xbf16> to vector<16x64xbf16>
    %cst = arith.constant dense<0.000000e+00> : vector<16x4xf32>
    %9 = tpu.matmul %8, %6, %cst {dimension_numbers = #tpu.dot_dimension_numbers<[1], [0], [0], [1], [0, 0, 1, 1], [], []>} : vector<16x64xbf16>, vector<64x4xbf16>, vector<16x4xf32> -> vector<16x4xf32>
    %10 = vector.broadcast %2 : vector<16x1xf32> to vector<16x4xf32>
    %11 = arith.addf %9, %10 : vector<16x4xf32>
    %12 = vector.extract_strided_slice %1 {offsets = [0, 1], sizes = [32, 4], strides = [1, 1]} : vector<32x6xf32> to vector<32x4xf32>
    %13 = vector.extract_strided_slice %1 {offsets = [0, 2], sizes = [32, 4], strides = [1, 1]} : vector<32x6xf32> to vector<32x4xf32>
    %14 = tpu.concatenate %12, %13 in 0 : vector<32x4xf32>, vector<32x4xf32> -> vector<64x4xf32>
    %15 = arith.truncf %14 : vector<64x4xf32> to vector<64x4xbf16>
    %c1 = arith.constant 1 : index
    %c0_7 = arith.constant 0 : index
    %c0_8 = arith.constant 0 : index
    %16 = vector.load %arg2[%c1, %c0_7, %c0_8] : memref<2x16x64xbf16, #tpu.memory_space<vmem>>, vector<1x16x64xbf16>
    %17 = vector.shape_cast %16 : vector<1x16x64xbf16> to vector<16x64xbf16>
    %cst_9 = arith.constant dense<0.000000e+00> : vector<16x4xf32>
    %18 = tpu.matmul %17, %15, %cst_9 {dimension_numbers = #tpu.dot_dimension_numbers<[1], [0], [0], [1], [0, 0, 1, 1], [], []>} : vector<16x64xbf16>, vector<64x4xbf16>, vector<16x4xf32> -> vector<16x4xf32>
    %19 = vector.broadcast %2 : vector<16x1xf32> to vector<16x4xf32>
    %20 = arith.addf %18, %19 : vector<16x4xf32>
    %cst_10 = arith.constant dense<0.000000e+00> : vector<16xf32>
    %21 = vector.multi_reduction <add>, %11, %cst_10 [1] : vector<16x4xf32> to vector<16xf32>
    %22 = vector.shape_cast %21 : vector<16xf32> to vector<16x1xf32>
    %23 = arith.mulf %11, %11 : vector<16x4xf32>
    %cst_11 = arith.constant dense<0.000000e+00> : vector<16xf32>
    %24 = vector.multi_reduction <add>, %23, %cst_11 [1] : vector<16x4xf32> to vector<16xf32>
    %25 = vector.shape_cast %24 : vector<16xf32> to vector<16x1xf32>
    %cst_12 = arith.constant dense<0.000000e+00> : vector<16xf32>
    %26 = vector.multi_reduction <add>, %20, %cst_12 [1] : vector<16x4xf32> to vector<16xf32>
    %27 = vector.shape_cast %26 : vector<16xf32> to vector<16x1xf32>
    %28 = arith.addf %22, %27 : vector<16x1xf32>
    %29 = arith.mulf %20, %20 : vector<16x4xf32>
    %cst_13 = arith.constant dense<0.000000e+00> : vector<16xf32>
    %30 = vector.multi_reduction <add>, %29, %cst_13 [1] : vector<16x4xf32> to vector<16xf32>
    %31 = vector.shape_cast %30 : vector<16xf32> to vector<16x1xf32>
    %32 = arith.addf %25, %31 : vector<16x1xf32>
    %cst_14 = arith.constant 1.250000e-01 : f32
    %33 = vector.broadcast %cst_14 : f32 to vector<16x1xf32>
    %34 = arith.mulf %28, %33 : vector<16x1xf32>
    %cst_15 = arith.constant 1.250000e-01 : f32
    %35 = vector.broadcast %cst_15 : f32 to vector<16x1xf32>
    %36 = arith.mulf %32, %35 : vector<16x1xf32>
    %37 = arith.mulf %34, %34 : vector<16x1xf32>
    %38 = arith.subf %36, %37 : vector<16x1xf32>
    %cst_16 = arith.constant 0.000000e+00 : f32
    %39 = vector.broadcast %cst_16 : f32 to vector<16x1xf32>
    %40 = arith.maximumf %38, %39 : vector<16x1xf32>
    %cst_17 = arith.constant 9.99999974E-6 : f32
    %41 = vector.broadcast %cst_17 : f32 to vector<16x1xf32>
    %42 = arith.addf %40, %41 : vector<16x1xf32>
    %43 = math.rsqrt %42 : vector<16x1xf32>
    %44 = vector.broadcast %34 : vector<16x1xf32> to vector<16x4xf32>
    %45 = arith.subf %11, %44 : vector<16x4xf32>
    %46 = vector.broadcast %43 : vector<16x1xf32> to vector<16x4xf32>
    %47 = arith.mulf %45, %46 : vector<16x4xf32>
    %cst_18 = arith.constant 0.000000e+00 : f32
    %48 = vector.broadcast %cst_18 : f32 to vector<16x4xf32>
    %49 = arith.maximumf %47, %48 : vector<16x4xf32>
    %c0_19 = arith.constant 0 : index
    %c0_20 = arith.constant 0 : index
    %c0_21 = arith.constant 0 : index
    %c0_22 = arith.constant 0 : index
    %50 = vector.load %arg4[%c0_19, %c0_20, %c0_21, %c0_22] : memref<1x2x16x4xf32, #tpu.memory_space<vmem>>, vector<1x1x16x4xf32>
    %51 = vector.shape_cast %50 : vector<1x1x16x4xf32> to vector<16x4xf32>
    %52 = vector.shape_cast %49 : vector<16x4xf32> to vector<1x1x16x4xf32>
    tpu.vector_store %arg4[%c0_19, %c0_20, %c0_21, %c0_22], %52 {strides = array<i32>} : memref<1x2x16x4xf32, #tpu.memory_space<vmem>>, vector<1x1x16x4xf32>,
    %53 = vector.broadcast %34 : vector<16x1xf32> to vector<16x4xf32>
    %54 = arith.subf %20, %53 : vector<16x4xf32>
    %55 = vector.broadcast %43 : vector<16x1xf32> to vector<16x4xf32>
    %56 = arith.mulf %54, %55 : vector<16x4xf32>
    %cst_23 = arith.constant 0.000000e+00 : f32
    %57 = vector.broadcast %cst_23 : f32 to vector<16x4xf32>
    %58 = arith.maximumf %56, %57 : vector<16x4xf32>
    %c0_24 = arith.constant 0 : index
    %c1_25 = arith.constant 1 : index
    %c0_26 = arith.constant 0 : index
    %c0_27 = arith.constant 0 : index
    %59 = vector.load %arg4[%c0_24, %c1_25, %c0_26, %c0_27] : memref<1x2x16x4xf32, #tpu.memory_space<vmem>>, vector<1x1x16x4xf32>
    %60 = vector.shape_cast %59 : vector<1x1x16x4xf32> to vector<16x4xf32>
    %61 = vector.shape_cast %58 : vector<16x4xf32> to vector<1x1x16x4xf32>
    tpu.vector_store %arg4[%c0_24, %c1_25, %c0_26, %c0_27], %61 {strides = array<i32>} : memref<1x2x16x4xf32, #tpu.memory_space<vmem>>, vector<1x1x16x4xf32>,
    return
  }
  func.func @transform_0(%arg0: i32) -> (i32, i32, i32) {
    %c0_i32 = arith.constant 0 : i32
    %c0_i32_0 = arith.constant 0 : i32
    %c0_i32_1 = arith.constant 0 : i32
    return %arg0, %c0_i32, %c0_i32_0 : i32, i32, i32
  }
  func.func @transform_1(%arg0: i32) -> (i32, i32, i32) {
    %c0_i32 = arith.constant 0 : i32
    %c0_i32_0 = arith.constant 0 : i32
    %c0_i32_1 = arith.constant 0 : i32
    %c0_i32_2 = arith.constant 0 : i32
    return %c0_i32, %c0_i32_0, %c0_i32_1 : i32, i32, i32
  }
  func.func @transform_2(%arg0: i32) -> (i32, i32) {
    %c0_i32 = arith.constant 0 : i32
    %c0_i32_0 = arith.constant 0 : i32
    %c0_i32_1 = arith.constant 0 : i32
    return %c0_i32, %c0_i32_0 : i32, i32
  }
  func.func @transform_3(%arg0: i32) -> (i32, i32, i32, i32) {
    %c0_i32 = arith.constant 0 : i32
    %c0_i32_0 = arith.constant 0 : i32
    %c0_i32_1 = arith.constant 0 : i32
    %c0_i32_2 = arith.constant 0 : i32
    return %arg0, %c0_i32, %c0_i32_0, %c0_i32_1 : i32, i32, i32, i32
  }
}

module attributes {stable_mosaic.version = 11 : i64} {
  func.func @kernel(%arg0: i32, %arg1: memref<1x16x10xf32, #tpu.memory_space<vmem>>, %arg2: memref<2x8x32xbf16, #tpu.memory_space<vmem>>, %arg3: memref<8x1xf32, #tpu.memory_space<vmem>>, %arg4: memref<1x2x8x8xf32, #tpu.memory_space<vmem>>) attributes {dimension_semantics = [#tpu.dimension_semantics<parallel>], iteration_bounds = array<i64: 2>, scalar_prefetch = 0 : i64, scratch_operands = 0 : i64, tpu.core_type = #tpu.core_type<tc>, window_params = [{transform_indices = @transform_0, window_bounds = array<i64: 1, 16, 10>}, {pipeline_mode = #tpu.pipeline_mode<synchronous>, transform_indices = @transform_1, window_bounds = array<i64: 2, 8, 32>}, {pipeline_mode = #tpu.pipeline_mode<synchronous>, transform_indices = @transform_2, window_bounds = array<i64: 8, 1>}, {transform_indices = @transform_3, window_bounds = array<i64: 1, 2, 8, 8>}]} {
    %c0 = arith.constant 0 : index
    %c0_0 = arith.constant 0 : index
    %c0_1 = arith.constant 0 : index
    %0 = vector.load %arg1[%c0, %c0_0, %c0_1] : memref<1x16x10xf32, #tpu.memory_space<vmem>>, vector<1x16x10xf32>
    %1 = vector.shape_cast %0 : vector<1x16x10xf32> to vector<16x10xf32>
    %c0_2 = arith.constant 0 : index
    %c0_3 = arith.constant 0 : index
    %2 = vector.load %arg3[%c0_2, %c0_3] : memref<8x1xf32, #tpu.memory_space<vmem>>, vector<8x1xf32>
    %3 = vector.extract_strided_slice %1 {offsets = [0, 0], sizes = [16, 8], strides = [1, 1]} : vector<16x10xf32> to vector<16x8xf32>
    %4 = vector.extract_strided_slice %1 {offsets = [0, 1], sizes = [16, 8], strides = [1, 1]} : vector<16x10xf32> to vector<16x8xf32>
    %5 = tpu.concatenate %3, %4 in 0 : vector<16x8xf32>, vector<16x8xf32> -> vector<32x8xf32>
    %6 = arith.truncf %5 : vector<32x8xf32> to vector<32x8xbf16>
    %c0_4 = arith.constant 0 : index
    %c0_5 = arith.constant 0 : index
    %c0_6 = arith.constant 0 : index
    %7 = vector.load %arg2[%c0_4, %c0_5, %c0_6] : memref<2x8x32xbf16, #tpu.memory_space<vmem>>, vector<1x8x32xbf16>
    %8 = vector.shape_cast %7 : vector<1x8x32xbf16> to vector<8x32xbf16>
    %cst = arith.constant dense<0.000000e+00> : vector<8x8xf32>
    %9 = tpu.matmul %8, %6, %cst {dimension_numbers = #tpu.dot_dimension_numbers<[1], [0], [0], [1], [0, 0, 1, 1], [], []>} : vector<8x32xbf16>, vector<32x8xbf16>, vector<8x8xf32> -> vector<8x8xf32>
    %10 = vector.broadcast %2 : vector<8x1xf32> to vector<8x8xf32>
    %11 = arith.addf %9, %10 : vector<8x8xf32>
    %12 = vector.extract_strided_slice %1 {offsets = [0, 1], sizes = [16, 8], strides = [1, 1]} : vector<16x10xf32> to vector<16x8xf32>
    %13 = vector.extract_strided_slice %1 {offsets = [0, 2], sizes = [16, 8], strides = [1, 1]} : vector<16x10xf32> to vector<16x8xf32>
    %14 = tpu.concatenate %12, %13 in 0 : vector<16x8xf32>, vector<16x8xf32> -> vector<32x8xf32>
    %15 = arith.truncf %14 : vector<32x8xf32> to vector<32x8xbf16>
    %c1 = arith.constant 1 : index
    %c0_7 = arith.constant 0 : index
    %c0_8 = arith.constant 0 : index
    %16 = vector.load %arg2[%c1, %c0_7, %c0_8] : memref<2x8x32xbf16, #tpu.memory_space<vmem>>, vector<1x8x32xbf16>
    %17 = vector.shape_cast %16 : vector<1x8x32xbf16> to vector<8x32xbf16>
    %cst_9 = arith.constant dense<0.000000e+00> : vector<8x8xf32>
    %18 = tpu.matmul %17, %15, %cst_9 {dimension_numbers = #tpu.dot_dimension_numbers<[1], [0], [0], [1], [0, 0, 1, 1], [], []>} : vector<8x32xbf16>, vector<32x8xbf16>, vector<8x8xf32> -> vector<8x8xf32>
    %19 = vector.broadcast %2 : vector<8x1xf32> to vector<8x8xf32>
    %20 = arith.addf %18, %19 : vector<8x8xf32>
    %cst_10 = arith.constant dense<0.000000e+00> : vector<8xf32>
    %21 = vector.multi_reduction <add>, %11, %cst_10 [1] : vector<8x8xf32> to vector<8xf32>
    %22 = vector.shape_cast %21 : vector<8xf32> to vector<8x1xf32>
    %23 = arith.mulf %11, %11 : vector<8x8xf32>
    %cst_11 = arith.constant dense<0.000000e+00> : vector<8xf32>
    %24 = vector.multi_reduction <add>, %23, %cst_11 [1] : vector<8x8xf32> to vector<8xf32>
    %25 = vector.shape_cast %24 : vector<8xf32> to vector<8x1xf32>
    %cst_12 = arith.constant dense<0.000000e+00> : vector<8xf32>
    %26 = vector.multi_reduction <add>, %20, %cst_12 [1] : vector<8x8xf32> to vector<8xf32>
    %27 = vector.shape_cast %26 : vector<8xf32> to vector<8x1xf32>
    %28 = arith.addf %22, %27 : vector<8x1xf32>
    %29 = arith.mulf %20, %20 : vector<8x8xf32>
    %cst_13 = arith.constant dense<0.000000e+00> : vector<8xf32>
    %30 = vector.multi_reduction <add>, %29, %cst_13 [1] : vector<8x8xf32> to vector<8xf32>
    %31 = vector.shape_cast %30 : vector<8xf32> to vector<8x1xf32>
    %32 = arith.addf %25, %31 : vector<8x1xf32>
    %cst_14 = arith.constant 6.250000e-02 : f32
    %33 = vector.broadcast %cst_14 : f32 to vector<8x1xf32>
    %34 = arith.mulf %28, %33 : vector<8x1xf32>
    %cst_15 = arith.constant 6.250000e-02 : f32
    %35 = vector.broadcast %cst_15 : f32 to vector<8x1xf32>
    %36 = arith.mulf %32, %35 : vector<8x1xf32>
    %37 = arith.mulf %34, %34 : vector<8x1xf32>
    %38 = arith.subf %36, %37 : vector<8x1xf32>
    %cst_16 = arith.constant 0.000000e+00 : f32
    %39 = vector.broadcast %cst_16 : f32 to vector<8x1xf32>
    %40 = arith.maximumf %38, %39 : vector<8x1xf32>
    %cst_17 = arith.constant 9.99999974E-6 : f32
    %41 = vector.broadcast %cst_17 : f32 to vector<8x1xf32>
    %42 = arith.addf %40, %41 : vector<8x1xf32>
    %43 = math.rsqrt %42 : vector<8x1xf32>
    %44 = vector.broadcast %34 : vector<8x1xf32> to vector<8x8xf32>
    %45 = arith.subf %11, %44 : vector<8x8xf32>
    %46 = vector.broadcast %43 : vector<8x1xf32> to vector<8x8xf32>
    %47 = arith.mulf %45, %46 : vector<8x8xf32>
    %cst_18 = arith.constant 0.000000e+00 : f32
    %48 = vector.broadcast %cst_18 : f32 to vector<8x8xf32>
    %49 = arith.maximumf %47, %48 : vector<8x8xf32>
    %c0_19 = arith.constant 0 : index
    %c0_20 = arith.constant 0 : index
    %c0_21 = arith.constant 0 : index
    %c0_22 = arith.constant 0 : index
    %50 = vector.load %arg4[%c0_19, %c0_20, %c0_21, %c0_22] : memref<1x2x8x8xf32, #tpu.memory_space<vmem>>, vector<1x1x8x8xf32>
    %51 = vector.shape_cast %50 : vector<1x1x8x8xf32> to vector<8x8xf32>
    %52 = vector.shape_cast %49 : vector<8x8xf32> to vector<1x1x8x8xf32>
    tpu.vector_store %arg4[%c0_19, %c0_20, %c0_21, %c0_22], %52 {strides = array<i32>} : memref<1x2x8x8xf32, #tpu.memory_space<vmem>>, vector<1x1x8x8xf32>,
    %53 = vector.broadcast %34 : vector<8x1xf32> to vector<8x8xf32>
    %54 = arith.subf %20, %53 : vector<8x8xf32>
    %55 = vector.broadcast %43 : vector<8x1xf32> to vector<8x8xf32>
    %56 = arith.mulf %54, %55 : vector<8x8xf32>
    %cst_23 = arith.constant 0.000000e+00 : f32
    %57 = vector.broadcast %cst_23 : f32 to vector<8x8xf32>
    %58 = arith.maximumf %56, %57 : vector<8x8xf32>
    %c0_24 = arith.constant 0 : index
    %c1_25 = arith.constant 1 : index
    %c0_26 = arith.constant 0 : index
    %c0_27 = arith.constant 0 : index
    %59 = vector.load %arg4[%c0_24, %c1_25, %c0_26, %c0_27] : memref<1x2x8x8xf32, #tpu.memory_space<vmem>>, vector<1x1x8x8xf32>
    %60 = vector.shape_cast %59 : vector<1x1x8x8xf32> to vector<8x8xf32>
    %61 = vector.shape_cast %58 : vector<8x8xf32> to vector<1x1x8x8xf32>
    tpu.vector_store %arg4[%c0_24, %c1_25, %c0_26, %c0_27], %61 {strides = array<i32>} : memref<1x2x8x8xf32, #tpu.memory_space<vmem>>, vector<1x1x8x8xf32>,
    return
  }
  func.func @transform_0(%arg0: i32) -> (i32, i32, i32) {
    %c0_i32 = arith.constant 0 : i32
    %c0_i32_0 = arith.constant 0 : i32
    %c0_i32_1 = arith.constant 0 : i32
    return %arg0, %c0_i32, %c0_i32_0 : i32, i32, i32
  }
  func.func @transform_1(%arg0: i32) -> (i32, i32, i32) {
    %c0_i32 = arith.constant 0 : i32
    %c0_i32_0 = arith.constant 0 : i32
    %c0_i32_1 = arith.constant 0 : i32
    %c0_i32_2 = arith.constant 0 : i32
    return %c0_i32, %c0_i32_0, %c0_i32_1 : i32, i32, i32
  }
  func.func @transform_2(%arg0: i32) -> (i32, i32) {
    %c0_i32 = arith.constant 0 : i32
    %c0_i32_0 = arith.constant 0 : i32
    %c0_i32_1 = arith.constant 0 : i32
    return %c0_i32, %c0_i32_0 : i32, i32
  }
  func.func @transform_3(%arg0: i32) -> (i32, i32, i32, i32) {
    %c0_i32 = arith.constant 0 : i32
    %c0_i32_0 = arith.constant 0 : i32
    %c0_i32_1 = arith.constant 0 : i32
    %c0_i32_2 = arith.constant 0 : i32
    return %arg0, %c0_i32, %c0_i32_0, %c0_i32_1 : i32, i32, i32, i32
  }
}

module attributes {stable_mosaic.version = 11 : i64} {
  func.func @kernel(%arg0: i32, %arg1: memref<1x8x22xf32, #tpu.memory_space<vmem>>, %arg2: memref<1x8x56xbf16, #tpu.memory_space<vmem>>, %arg3: memref<8x1xf32, #tpu.memory_space<vmem>>, %arg4: memref<1x1x8x16xf32, #tpu.memory_space<vmem>>) attributes {dimension_semantics = [#tpu.dimension_semantics<parallel>], iteration_bounds = array<i64: 2>, scalar_prefetch = 0 : i64, scratch_operands = 0 : i64, tpu.core_type = #tpu.core_type<tc>, window_params = [{transform_indices = @transform_0, window_bounds = array<i64: 1, 8, 22>}, {pipeline_mode = #tpu.pipeline_mode<synchronous>, transform_indices = @transform_1, window_bounds = array<i64: 1, 8, 56>}, {pipeline_mode = #tpu.pipeline_mode<synchronous>, transform_indices = @transform_2, window_bounds = array<i64: 8, 1>}, {transform_indices = @transform_3, window_bounds = array<i64: 1, 1, 8, 16>}]} {
    %c0 = arith.constant 0 : index
    %c0_0 = arith.constant 0 : index
    %c0_1 = arith.constant 0 : index
    %0 = vector.load %arg1[%c0, %c0_0, %c0_1] : memref<1x8x22xf32, #tpu.memory_space<vmem>>, vector<1x8x22xf32>
    %1 = vector.shape_cast %0 : vector<1x8x22xf32> to vector<8x22xf32>
    %c0_2 = arith.constant 0 : index
    %c0_3 = arith.constant 0 : index
    %2 = vector.load %arg3[%c0_2, %c0_3] : memref<8x1xf32, #tpu.memory_space<vmem>>, vector<8x1xf32>
    %3 = vector.extract_strided_slice %1 {offsets = [0, 0], sizes = [8, 16], strides = [1, 1]} : vector<8x22xf32> to vector<8x16xf32>
    %4 = vector.extract_strided_slice %1 {offsets = [0, 1], sizes = [8, 16], strides = [1, 1]} : vector<8x22xf32> to vector<8x16xf32>
    %5 = vector.extract_strided_slice %1 {offsets = [0, 2], sizes = [8, 16], strides = [1, 1]} : vector<8x22xf32> to vector<8x16xf32>
    %6 = vector.extract_strided_slice %1 {offsets = [0, 3], sizes = [8, 16], strides = [1, 1]} : vector<8x22xf32> to vector<8x16xf32>
    %7 = vector.extract_strided_slice %1 {offsets = [0, 4], sizes = [8, 16], strides = [1, 1]} : vector<8x22xf32> to vector<8x16xf32>
    %8 = vector.extract_strided_slice %1 {offsets = [0, 5], sizes = [8, 16], strides = [1, 1]} : vector<8x22xf32> to vector<8x16xf32>
    %9 = vector.extract_strided_slice %1 {offsets = [0, 6], sizes = [8, 16], strides = [1, 1]} : vector<8x22xf32> to vector<8x16xf32>
    %10 = tpu.concatenate %3, %4, %5, %6, %7, %8, %9 in 0 : vector<8x16xf32>, vector<8x16xf32>, vector<8x16xf32>, vector<8x16xf32>, vector<8x16xf32>, vector<8x16xf32>, vector<8x16xf32> -> vector<56x16xf32>
    %11 = arith.truncf %10 : vector<56x16xf32> to vector<56x16xbf16>
    %c0_4 = arith.constant 0 : index
    %c0_5 = arith.constant 0 : index
    %c0_6 = arith.constant 0 : index
    %12 = vector.load %arg2[%c0_4, %c0_5, %c0_6] : memref<1x8x56xbf16, #tpu.memory_space<vmem>>, vector<1x8x56xbf16>
    %13 = vector.shape_cast %12 : vector<1x8x56xbf16> to vector<8x56xbf16>
    %cst = arith.constant dense<0.000000e+00> : vector<8x16xf32>
    %14 = tpu.matmul %13, %11, %cst {dimension_numbers = #tpu.dot_dimension_numbers<[1], [0], [0], [1], [0, 0, 1, 1], [], []>} : vector<8x56xbf16>, vector<56x16xbf16>, vector<8x16xf32> -> vector<8x16xf32>
    %15 = vector.broadcast %2 : vector<8x1xf32> to vector<8x16xf32>
    %16 = arith.addf %14, %15 : vector<8x16xf32>
    %cst_7 = arith.constant 5.000000e-01 : f32
    %17 = vector.broadcast %cst_7 : f32 to vector<8x16xf32>
    %18 = arith.mulf %17, %16 : vector<8x16xf32>
    %19 = math.tanh %18 : vector<8x16xf32>
    %cst_8 = arith.constant 1.000000e+00 : f32
    %20 = vector.broadcast %cst_8 : f32 to vector<8x16xf32>
    %21 = arith.addf %19, %20 : vector<8x16xf32>
    %cst_9 = arith.constant 5.000000e-01 : f32
    %22 = vector.broadcast %cst_9 : f32 to vector<8x16xf32>
    %23 = arith.mulf %22, %21 : vector<8x16xf32>
    %c0_10 = arith.constant 0 : index
    %c0_11 = arith.constant 0 : index
    %c0_12 = arith.constant 0 : index
    %c0_13 = arith.constant 0 : index
    %24 = vector.load %arg4[%c0_10, %c0_11, %c0_12, %c0_13] : memref<1x1x8x16xf32, #tpu.memory_space<vmem>>, vector<1x1x8x16xf32>
    %25 = vector.shape_cast %24 : vector<1x1x8x16xf32> to vector<8x16xf32>
    %26 = vector.shape_cast %23 : vector<8x16xf32> to vector<1x1x8x16xf32>
    tpu.vector_store %arg4[%c0_10, %c0_11, %c0_12, %c0_13], %26 {strides = array<i32>} : memref<1x1x8x16xf32, #tpu.memory_space<vmem>>, vector<1x1x8x16xf32>,
    return
  }
  func.func @transform_0(%arg0: i32) -> (i32, i32, i32) {
    %c0_i32 = arith.constant 0 : i32
    %c0_i32_0 = arith.constant 0 : i32
    %c0_i32_1 = arith.constant 0 : i32
    return %arg0, %c0_i32, %c0_i32_0 : i32, i32, i32
  }
  func.func @transform_1(%arg0: i32) -> (i32, i32, i32) {
    %c0_i32 = arith.constant 0 : i32
    %c0_i32_0 = arith.constant 0 : i32
    %c0_i32_1 = arith.constant 0 : i32
    %c0_i32_2 = arith.constant 0 : i32
    return %c0_i32, %c0_i32_0, %c0_i32_1 : i32, i32, i32
  }
  func.func @transform_2(%arg0: i32) -> (i32, i32) {
    %c0_i32 = arith.constant 0 : i32
    %c0_i32_0 = arith.constant 0 : i32
    %c0_i32_1 = arith.constant 0 : i32
    return %c0_i32, %c0_i32_0 : i32, i32
  }
  func.func @transform_3(%arg0: i32) -> (i32, i32, i32, i32) {
    %c0_i32 = arith.constant 0 : i32
    %c0_i32_0 = arith.constant 0 : i32
    %c0_i32_1 = arith.constant 0 : i32
    %c0_i32_2 = arith.constant 0 : i32
    return %arg0, %c0_i32, %c0_i32_0, %c0_i32_1 : i32, i32, i32, i32
  }
}

</mosaic_0001>

<llo_original>
// kernel: a_call__.9
$region0: #{a_call__.9}
  #allocation0 [shape = 'u32[]', space=smem, size = 0x4, offset = 0x4, fixed_abs, tag = 'smem constant byte address 0x4 - core index']
  #allocation1 [shape = 'u32[144,128]{1,0:T(1,128)}', space=vmem, size = 0x12000, scoped, tag = 'internal scratch']
  %s0 = inlined_call_operand.vmem [shape: f32[2,16,9], index: 0, kind: input, shape index: {}]
  %s1 = inlined_call_operand.vmem [shape: bf16[1,16,32], index: 1, kind: input, shape index: {}]
  %s2 = inlined_call_operand.vmem [shape: f32[16,1], index: 2, kind: input, shape index: {}]
  %s3 = inlined_call_operand.vmem [shape: f32[2,1,16,8], index: 3, kind: output, shape index: {}]
  %s4 = sld [smem:[#allocation0]]
  $region45: #{a_call__.9} parent=0
    _
  %s6 = ssub.s32 1, %s4
  %s7 = scalar_select 0, %s6, %s4
  loop: start=0, step=1, limit=4
  $region2: #{a_call__.9} parent=0 // loop_pre_header
    _
  $region3: #{a_call__.9} parent=0 // loop_header
    %s9 = sphi 0, %s13
    %p10 = scmp.ge.s32.totalorder %s9, 4
    %s19 = sphi 0, %s21
    %s22 = sphi 0, %s19
    %s23 = sphi 0, %s22
    %s39 = sphi 0, %s23
    %s43 = sphi 0, %s43
    %s45 = sphi 0, %s43
    %s46 = sphi 0, %s45
    %s60 = sphi 0, %s46
    %s64 = sphi 0, %s64
    %s66 = sphi 0, %s64
    %s67 = sphi 0, %s66
    %s81 = sphi 0, %s67
    %s87 = sphi 0, %s89
    %s90 = sphi 0, %s87
    %s91 = sphi 0, %s90
    %s107 = sphi 0, %s91
  $region4: #{a_call__.9} parent=0 // loop_header_branch
    %12 = sbr.rel (%p10) target = $region8
  $region5: #{a_call__.9} parent=0 // loop_body
    %s14 = ssub.s32 %s9, 1
    %s15 = ssub.s32 %s9, 2
    %s16 = sadd.s32 %s9, 1
    %s17 = ssub.s32 %s9, %s16
    %p18 = scmp.eq.s32.totalorder %s17, 0
    %s20 = sadd.s32 %s19, 1
    %s21 = scalar_select %p18, %s19, %s20
    %p24 = pneg %p18
    %p25 = scmp.eq.s32.totalorder %s9, 1
    %p26 = por %p24, %p25
    %p27 = scmp.ne.s32.totalorder %s19, %s22
    %p28 = scmp.eq.s32.totalorder %s9, 0
    %p29 = por %p27, %p28
    %p30 = scmp.ne.s32.totalorder %s19, %s22
    %p31 = scmp.eq.s32.totalorder %s14, 1
    %p32 = por %p30, %p31
    %p33 = scmp.ne.s32.totalorder %s22, %s23
    %p34 = scmp.eq.s32.totalorder %s14, 0
    %p35 = por %p33, %p34
    %p36 = scmp.ne.s32.totalorder %s22, %s23
    %p37 = scmp.eq.s32.totalorder %s15, 1
    %p38 = por %p36, %p37
    %p40 = scmp.ne.s32.totalorder %s23, %s39
    %p41 = scmp.eq.s32.totalorder %s15, 0
    %p42 = por %p40, %p41
    %s44 = sadd.s32 %s43, 1
    %p47 = scmp.eq.s32.totalorder %s9, 1
    %p48 = scmp.ne.s32.totalorder %s43, %s45
    %p49 = scmp.eq.s32.totalorder %s9, 0
    %p50 = por %p48, %p49
    %p51 = scmp.ne.s32.totalorder %s43, %s45
    %p52 = scmp.eq.s32.totalorder %s14, 1
    %p53 = por %p51, %p52
    %p54 = scmp.ne.s32.totalorder %s45, %s46
    %p55 = scmp.eq.s32.totalorder %s14, 0
    %p56 = por %p54, %p55
    %p57 = scmp.ne.s32.totalorder %s45, %s46
    %p58 = scmp.eq.s32.totalorder %s15, 1
    %p59 = por %p57, %p58
    %p61 = scmp.ne.s32.totalorder %s46, %s60
    %p62 = scmp.eq.s32.totalorder %s15, 0
    %p63 = por %p61, %p62
    %s65 = sadd.s32 %s64, 1
    %p68 = scmp.eq.s32.totalorder %s9, 1
    %p69 = scmp.ne.s32.totalorder %s64, %s66
    %p70 = scmp.eq.s32.totalorder %s9, 0
    %p71 = por %p69, %p70
    %p72 = scmp.ne.s32.totalorder %s64, %s66
    %p73 = scmp.eq.s32.totalorder %s14, 1
    %p74 = por %p72, %p73
    %p75 = scmp.ne.s32.totalorder %s66, %s67
    %p76 = scmp.eq.s32.totalorder %s14, 0
    %p77 = por %p75, %p76
    %p78 = scmp.ne.s32.totalorder %s66, %s67
    %p79 = scmp.eq.s32.totalorder %s15, 1
    %p80 = por %p78, %p79
    %p82 = scmp.ne.s32.totalorder %s67, %s81
    %p83 = scmp.eq.s32.totalorder %s15, 0
    %p84 = por %p82, %p83
    %s85 = ssub.s32 %s9, %s16
    %p86 = scmp.eq.s32.totalorder %s85, 0
    %s88 = sadd.s32 %s87, 1
    %s89 = scalar_select %p86, %s87, %s88
    %p92 = pneg %p86
    %p93 = scmp.eq.s32.totalorder %s9, 1
    %p94 = por %p92, %p93
    %p95 = scmp.ne.s32.totalorder %s87, %s90
    %p96 = scmp.eq.s32.totalorder %s9, 0
    %p97 = por %p95, %p96
    %p98 = scmp.ne.s32.totalorder %s87, %s90
    %p99 = scmp.eq.s32.totalorder %s14, 1
    %p100 = por %p98, %p99
    %p101 = scmp.ne.s32.totalorder %s90, %s91
    %p102 = scmp.eq.s32.totalorder %s14, 0
    %p103 = por %p101, %p102
    %p104 = scmp.ne.s32.totalorder %s90, %s91
    %p105 = scmp.eq.s32.totalorder %s15, 1
    %p106 = por %p104, %p105
    %p108 = scmp.ne.s32.totalorder %s91, %s107
    %p109 = scmp.eq.s32.totalorder %s15, 0
    %p110 = por %p108, %p109
    %p111 = scmp.le.s32.totalorder 1, %s9
    %p112 = scmp.lt.s32.totalorder %s9, 3
    %p113 = pnand %p111, %p112
    %p114 = pneg %p113
    // Predicated region
    $region9: #{a_call__.9} parent=5 // pred_check
      _
    $region10: #{a_call__.9} parent=5 // pred_check_branch
      %116 = sbr.rel (%p113) target = $region12
    $region11: #{a_call__.9} parent=5 // pred_region
      %s117 = ssub.s32 %s9, 1
      // Predicated region
      $region13: #{a_call__.9} parent=11 // pred_check
        %p118 = pneg %p56
      $region14: #{a_call__.9} parent=11 // pred_check_branch
        %120 = sbr.rel (%p118) target = $region16
      $region15: #{a_call__.9} parent=11 // pred_region
        _
      $region16: #{a_call__.9} parent=11 // pred_fallthru
        _
      // Predicated region
      $region17: #{a_call__.9} parent=11 // pred_check
        %p121 = pneg %p77
      $region18: #{a_call__.9} parent=11 // pred_check_branch
        %123 = sbr.rel (%p121) target = $region20
      $region19: #{a_call__.9} parent=11 // pred_region
        _
      $region20: #{a_call__.9} parent=11 // pred_fallthru
        _
    $region12: #{a_call__.9} parent=5 // pred_fallthru
      _
    %p124 = scmp.lt.s32.totalorder %s9, 2
    // Predicated region
    $region21: #{a_call__.9} parent=5 // pred_check
      %p125 = pneg %p124
    $region22: #{a_call__.9} parent=5 // pred_check_branch
      %127 = sbr.rel (%p125) target = $region24
    $region23: #{a_call__.9} parent=5 // pred_region
      // Predicated region
      $region25: #{a_call__.9} parent=23 // pred_check
        %p128 = pneg %p29
      $region26: #{a_call__.9} parent=23 // pred_check_branch
        %130 = sbr.rel (%p128) target = $region28
      $region27: #{a_call__.9} parent=23 // pred_region
        %p131 = scmp.lt.s32.totalorder %s9, 1
        %s132 = scalar_select %p131, %s9, 1
        %s133 = smul.addr %s132, 2
        %s134 = smul.addr %s133, 8
        %s135 = scalar_lea.vmem %s0, %s134
      $region28: #{a_call__.9} parent=23 // pred_fallthru
        _
    $region24: #{a_call__.9} parent=5 // pred_fallthru
      _
    %p136 = scmp.le.s32.totalorder 1, %s9
    %p137 = scmp.lt.s32.totalorder %s9, 3
    %p138 = pnand %p136, %p137
    %p139 = pneg %p138
    // Predicated region
    $region29: #{a_call__.9} parent=5 // pred_check
      _
    $region30: #{a_call__.9} parent=5 // pred_check_branch
      %141 = sbr.rel (%p138) target = $region32
    $region31: #{a_call__.9} parent=5 // pred_region
      %s142 = ssub.s32 %s9, 1
      %p143 = scmp.lt.s32.totalorder %s14, 1
      %s144 = scalar_select %p143, %s14, 1
      %s145 = smul.addr %s144, 2
      %s146 = smul.addr %s145, 8
      %s147 = scalar_lea.vmem %s0, %s146
      %p148 = pneg %p35
      %p149 = pneg %p32
      %p150 = pneg %p56
      %p151 = pneg %p53
      %p152 = pneg %p77
      %p153 = pneg %p74
      %p154 = pneg %p103
      %p155 = pneg %p100
      %p156 = scmp.lt.s32.totalorder %s14, 1
      %s157 = scalar_select %p156, %s14, 1
      %s158 = smul.addr %s157, 2
      %s159 = smul.addr %s158, 8
      %s160 = scalar_lea.vmem %s3, %s159
      %p161 = scmp.lt.s32.totalorder %s14, 1
      %s162 = scalar_select %p161, %s14, 1
      %s163 = smul.addr %s162, 2
      %s164 = smul.addr %s163, 8
      %s165 = scalar_lea.vmem %s0, %s164
      %p166 = scmp.lt.s32.totalorder %s14, 1
      %s167 = scalar_select %p166, %s14, 1
      %s168 = smul.addr %s167, 2
      %s169 = smul.addr %s168, 8
      %s170 = scalar_lea.vmem %s3, %s169
      %v172 = vld [vmem:[%s165] sm:$0xff]
      %v173 = vld [vmem:[%s165 + $0x8] sm:$0xff]
      %v174 = vld [vmem:[%s2] sm:$0xff]
      %v175 = vld [vmem:[%s2 + $0x8] sm:$0xff]
      %178 = vrot.lane.b32.xlu0 %v172, 127
      %v179 = vpop.permute.xlu0 %178
      %180 = vrot.lane.b32.xlu0 %v173, 127
      %v181 = vpop.permute.xlu0 %180
      %v184 = vpack.c.bf16 %v173, %v172
      %v185 = vpack.c.bf16 %v181, %v179
      %v186 = vld [vmem:[%s1] sm:$0xf]
      %v187 = vld [vmem:[%s1 + $0x4] sm:$0xf]
      %189 = vset.pattern.permute.xlu0 0
      %190 = vperm.xlu0 %189, %v174
      %v191 = vpop.permute.xlu0 %190
      %194 = vset.pattern.permute.xlu0 0
      %195 = vperm.xlu0 %194, %v175
      %v196 = vpop.permute.xlu0 %195
      %v200 = vunpack.c.l.b16 %v186
      %v201 = vunpack.c.l.b16 %v187
      %v202 = vpack.c.b16 %v201, %v200
      %vm203 = vcmask 261120
      %v205 = vsel %vm203, %v202, 0
      %207 = vmatprep.subr.bf16.mxu0 0
      %208 = vmatpush1.bf16.msra.mxu0 0
      %209 = vmatprep.subr.bf16.mxu0 0
      %210 = vmatpush1.bf16.msra.mxu0 0
      %211 = vmatprep.subr.bf16.mxu0 0
      %212 = vmatpush1.bf16.msra.mxu0 0
      %213 = vmatprep.subr.bf16.mxu0 0
      %214 = vmatpush1.bf16.msra.mxu0 0
      %215 = vmatprep.subr.bf16.mxu0 0
      %216 = vmatpush1.bf16.msra.mxu0 0
      %217 = vmatprep.subr.bf16.mxu0 0
      %218 = vmatpush1.bf16.msra.mxu0 0
      %219 = vmatprep.subr.bf16.mxu0 0
      %220 = vmatpush1.bf16.msra.mxu0 %v185
      %221 = vmatprep.subr.bf16.mxu0 0
      %222 = vmatpush1.bf16.msra.mxu0 %v184
      %223 = vmatprep.subr.bf16.mxu0 0
      %224 = vmatpush2.bf16.msra.mxu0 0
      %225 = vmatprep.subr.bf16.mxu0 0
      %226 = vmatpush2.bf16.msra.mxu0 0
      %227 = vmatprep.subr.bf16.mxu0 0
      %228 = vmatpush2.bf16.msra.mxu0 0
      %229 = vmatprep.subr.bf16.mxu0 0
      %230 = vmatpush2.bf16.msra.mxu0 0
      %231 = vmatprep.subr.bf16.mxu0 0
      %232 = vmatpush2.bf16.msra.mxu0 0
      %233 = vmatprep.subr.bf16.mxu0 0
      %234 = vmatpush2.bf16.msra.mxu0 0
      %235 = vmatprep.subr.bf16.mxu0 0
      %236 = vmatpush2.bf16.msra.mxu0 0
      %237 = vmatprep.subr.bf16.mxu0 0
      %238 = vmatpush2.bf16.msra.mxu0 0
      %239 = vmatprep.mubr.bf16.mxu0 0
      %240 = vmatmul.mubr.bf16.gmra.mxu0 %v205
      %v241 = vpop.f32.mrf.mxu0
      %v242 = vadd.f32 %v191, %v241
      %v243 = vpop.f32.mrf.mxu0
      %v244 = vpop.f32.mrf.mxu0
      %v245 = vadd.f32 %v196, %v244
      %v246 = vpop.f32.mrf.mxu0
      %247 = vdwg.mxu0
      %vm248 = vcmask 64512
      %v249 = vsel %vm248, %v242, 0.0
      %250 = vadd.xlane.f32.xlu0 %v249
      %v251 = vpop.xlane.xlu0 %250
      %v252 = vsel %vm248, %v245, 0.0
      %253 = vadd.xlane.f32.xlu0 %v252
      %v254 = vpop.xlane.xlu0 %253
      %v255 = vmul.f32 %v242, %v242
      %v256 = vmul.f32 %v245, %v245
      %v257 = vsel %vm248, %v255, 0.0
      %258 = vadd.xlane.f32.xlu0 %v257
      %v259 = vpop.xlane.xlu0 %258
      %v260 = vsel %vm248, %v256, 0.0
      %261 = vadd.xlane.f32.xlu0 %v260
      %v262 = vpop.xlane.xlu0 %261
      %v263 = vmul.f32 %v251, 0.125
      %v264 = vmul.f32 %v254, 0.125
      %v265 = vmul.f32 %v259, 0.125
      %v266 = vmul.f32 %v262, 0.125
      %v267 = vmul.f32 %v263, %v263
      %v268 = vmul.f32 %v264, %v264
      %v269 = vsub.f32 %v265, %v267
      %v270 = vsub.f32 %v266, %v268
      %v271 = vmax.f32 %v269, 0.0
      %v272 = vmax.f32 %v270, 0.0
      %v273 = vadd.f32 %v271, 1e-05
      %v274 = vadd.f32 %v272, 1e-05
      %v275 = vrsqrt.pop %v273
      %v276 = vrsqrt.pop %v274
      %v277 = vsub.f32 %v242, %v263
      %v278 = vsub.f32 %v245, %v264
      %v279 = vmul.f32 %v277, %v275
      %v280 = vmul.f32 %v278, %v276
      %v281 = vmax.f32 %v279, 0.0
      %v282 = vmax.f32 %v280, 0.0
      %283 = vst.msk [vmem:[%s170] sm:$0xff] %vm248, %v281
      %284 = vst.msk [vmem:[%s170 + $0x8] sm:$0xff] %vm248, %v282
      %p285 = scmp.lt.s32.totalorder %s14, 1
      %s286 = scalar_select %p285, %s14, 1
      %s287 = smul.addr %s286, 2
      %s288 = smul.addr %s287, 8
      %s289 = scalar_lea.vmem %s3, %s288
      // Predicated region
      $region33: #{a_call__.9} parent=31 // pred_check
        %p290 = pneg %p100
      $region34: #{a_call__.9} parent=31 // pred_check_branch
        %292 = sbr.rel (%p290) target = $region36
      $region35: #{a_call__.9} parent=31 // pred_region
        _
      $region36: #{a_call__.9} parent=31 // pred_fallthru
        _
    $region32: #{a_call__.9} parent=5 // pred_fallthru
      _
    %p293 = scmp.le.s32.totalorder 2, %s9
    // Predicated region
    $region37: #{a_call__.9} parent=5 // pred_check
      %p294 = pneg %p293
    $region38: #{a_call__.9} parent=5 // pred_check_branch
      %296 = sbr.rel (%p294) target = $region40
    $region39: #{a_call__.9} parent=5 // pred_region
      %s297 = ssub.s32 %s9, 2
      // Predicated region
      $region41: #{a_call__.9} parent=39 // pred_check
        %p298 = pneg %p106
      $region42: #{a_call__.9} parent=39 // pred_check_branch
        %300 = sbr.rel (%p298) target = $region44
      $region43: #{a_call__.9} parent=39 // pred_region
        %p301 = scmp.lt.s32.totalorder %s15, 1
        %s302 = scalar_select %p301, %s15, 1
        %s303 = smul.addr %s302, 2
        %s304 = smul.addr %s303, 8
        %s305 = scalar_lea.vmem %s3, %s304
      $region44: #{a_call__.9} parent=39 // pred_fallthru
        _
    $region40: #{a_call__.9} parent=5 // pred_fallthru
      _
  $region6: #{a_call__.9} parent=0 // loop_footer
    %s13 = sadd.s32 1, %s9
  $region7: #{a_call__.9} parent=0 // loop_footer_branch
    %8 = sbr.rel target = $region3
  $region8: #{a_call__.9} parent=0 // loop_exit
    _

// kernel: a_call__.8
$region0: #{a_call__.8}
  #allocation0 [shape = 'u32[]', space=smem, size = 0x4, offset = 0x4, fixed_abs, tag = 'smem constant byte address 0x4 - core index']
  #allocation1 [shape = 'u32[144,128]{1,0:T(1,128)}', space=vmem, size = 0x12000, scoped, tag = 'internal scratch']
  %s0 = inlined_call_operand.vmem [shape: f32[2,8,22], index: 0, kind: input, shape index: {}]
  %s1 = inlined_call_operand.vmem [shape: bf16[1,8,56], index: 1, kind: input, shape index: {}]
  %s2 = inlined_call_operand.vmem [shape: f32[8,1], index: 2, kind: input, shape index: {}]
  %s3 = inlined_call_operand.vmem [shape: f32[2,1,8,16], index: 3, kind: output, shape index: {}]
  %s4 = sld [smem:[#allocation0]]
  $region45: #{a_call__.8} parent=0
    _
  %s6 = ssub.s32 1, %s4
  %s7 = scalar_select 0, %s6, %s4
  loop: start=0, step=1, limit=4
  $region2: #{a_call__.8} parent=0 // loop_pre_header
    _
  $region3: #{a_call__.8} parent=0 // loop_header
    %s9 = sphi 0, %s13
    %p10 = scmp.ge.s32.totalorder %s9, 4
    %s19 = sphi 0, %s21
    %s22 = sphi 0, %s19
    %s23 = sphi 0, %s22
    %s39 = sphi 0, %s23
    %s43 = sphi 0, %s43
    %s45 = sphi 0, %s43
    %s46 = sphi 0, %s45
    %s60 = sphi 0, %s46
    %s64 = sphi 0, %s64
    %s66 = sphi 0, %s64
    %s67 = sphi 0, %s66
    %s81 = sphi 0, %s67
    %s87 = sphi 0, %s89
    %s90 = sphi 0, %s87
    %s91 = sphi 0, %s90
    %s107 = sphi 0, %s91
  $region4: #{a_call__.8} parent=0 // loop_header_branch
    %12 = sbr.rel (%p10) target = $region8
  $region5: #{a_call__.8} parent=0 // loop_body
    %s14 = ssub.s32 %s9, 1
    %s15 = ssub.s32 %s9, 2
    %s16 = sadd.s32 %s9, 1
    %s17 = ssub.s32 %s9, %s16
    %p18 = scmp.eq.s32.totalorder %s17, 0
    %s20 = sadd.s32 %s19, 1
    %s21 = scalar_select %p18, %s19, %s20
    %p24 = pneg %p18
    %p25 = scmp.eq.s32.totalorder %s9, 1
    %p26 = por %p24, %p25
    %p27 = scmp.ne.s32.totalorder %s19, %s22
    %p28 = scmp.eq.s32.totalorder %s9, 0
    %p29 = por %p27, %p28
    %p30 = scmp.ne.s32.totalorder %s19, %s22
    %p31 = scmp.eq.s32.totalorder %s14, 1
    %p32 = por %p30, %p31
    %p33 = scmp.ne.s32.totalorder %s22, %s23
    %p34 = scmp.eq.s32.totalorder %s14, 0
    %p35 = por %p33, %p34
    %p36 = scmp.ne.s32.totalorder %s22, %s23
    %p37 = scmp.eq.s32.totalorder %s15, 1
    %p38 = por %p36, %p37
    %p40 = scmp.ne.s32.totalorder %s23, %s39
    %p41 = scmp.eq.s32.totalorder %s15, 0
    %p42 = por %p40, %p41
    %s44 = sadd.s32 %s43, 1
    %p47 = scmp.eq.s32.totalorder %s9, 1
    %p48 = scmp.ne.s32.totalorder %s43, %s45
    %p49 = scmp.eq.s32.totalorder %s9, 0
    %p50 = por %p48, %p49
    %p51 = scmp.ne.s32.totalorder %s43, %s45
    %p52 = scmp.eq.s32.totalorder %s14, 1
    %p53 = por %p51, %p52
    %p54 = scmp.ne.s32.totalorder %s45, %s46
    %p55 = scmp.eq.s32.totalorder %s14, 0
    %p56 = por %p54, %p55
    %p57 = scmp.ne.s32.totalorder %s45, %s46
    %p58 = scmp.eq.s32.totalorder %s15, 1
    %p59 = por %p57, %p58
    %p61 = scmp.ne.s32.totalorder %s46, %s60
    %p62 = scmp.eq.s32.totalorder %s15, 0
    %p63 = por %p61, %p62
    %s65 = sadd.s32 %s64, 1
    %p68 = scmp.eq.s32.totalorder %s9, 1
    %p69 = scmp.ne.s32.totalorder %s64, %s66
    %p70 = scmp.eq.s32.totalorder %s9, 0
    %p71 = por %p69, %p70
    %p72 = scmp.ne.s32.totalorder %s64, %s66
    %p73 = scmp.eq.s32.totalorder %s14, 1
    %p74 = por %p72, %p73
    %p75 = scmp.ne.s32.totalorder %s66, %s67
    %p76 = scmp.eq.s32.totalorder %s14, 0
    %p77 = por %p75, %p76
    %p78 = scmp.ne.s32.totalorder %s66, %s67
    %p79 = scmp.eq.s32.totalorder %s15, 1
    %p80 = por %p78, %p79
    %p82 = scmp.ne.s32.totalorder %s67, %s81
    %p83 = scmp.eq.s32.totalorder %s15, 0
    %p84 = por %p82, %p83
    %s85 = ssub.s32 %s9, %s16
    %p86 = scmp.eq.s32.totalorder %s85, 0
    %s88 = sadd.s32 %s87, 1
    %s89 = scalar_select %p86, %s87, %s88
    %p92 = pneg %p86
    %p93 = scmp.eq.s32.totalorder %s9, 1
    %p94 = por %p92, %p93
    %p95 = scmp.ne.s32.totalorder %s87, %s90
    %p96 = scmp.eq.s32.totalorder %s9, 0
    %p97 = por %p95, %p96
    %p98 = scmp.ne.s32.totalorder %s87, %s90
    %p99 = scmp.eq.s32.totalorder %s14, 1
    %p100 = por %p98, %p99
    %p101 = scmp.ne.s32.totalorder %s90, %s91
    %p102 = scmp.eq.s32.totalorder %s14, 0
    %p103 = por %p101, %p102
    %p104 = scmp.ne.s32.totalorder %s90, %s91
    %p105 = scmp.eq.s32.totalorder %s15, 1
    %p106 = por %p104, %p105
    %p108 = scmp.ne.s32.totalorder %s91, %s107
    %p109 = scmp.eq.s32.totalorder %s15, 0
    %p110 = por %p108, %p109
    %p111 = scmp.le.s32.totalorder 1, %s9
    %p112 = scmp.lt.s32.totalorder %s9, 3
    %p113 = pnand %p111, %p112
    %p114 = pneg %p113
    // Predicated region
    $region9: #{a_call__.8} parent=5 // pred_check
      _
    $region10: #{a_call__.8} parent=5 // pred_check_branch
      %116 = sbr.rel (%p113) target = $region12
    $region11: #{a_call__.8} parent=5 // pred_region
      %s117 = ssub.s32 %s9, 1
      // Predicated region
      $region13: #{a_call__.8} parent=11 // pred_check
        %p118 = pneg %p56
      $region14: #{a_call__.8} parent=11 // pred_check_branch
        %120 = sbr.rel (%p118) target = $region16
      $region15: #{a_call__.8} parent=11 // pred_region
        _
      $region16: #{a_call__.8} parent=11 // pred_fallthru
        _
      // Predicated region
      $region17: #{a_call__.8} parent=11 // pred_check
        %p121 = pneg %p77
      $region18: #{a_call__.8} parent=11 // pred_check_branch
        %123 = sbr.rel (%p121) target = $region20
      $region19: #{a_call__.8} parent=11 // pred_region
        _
      $region20: #{a_call__.8} parent=11 // pred_fallthru
        _
    $region12: #{a_call__.8} parent=5 // pred_fallthru
      _
    %p124 = scmp.lt.s32.totalorder %s9, 2
    // Predicated region
    $region21: #{a_call__.8} parent=5 // pred_check
      %p125 = pneg %p124
    $region22: #{a_call__.8} parent=5 // pred_check_branch
      %127 = sbr.rel (%p125) target = $region24
    $region23: #{a_call__.8} parent=5 // pred_region
      // Predicated region
      $region25: #{a_call__.8} parent=23 // pred_check
        %p128 = pneg %p29
      $region26: #{a_call__.8} parent=23 // pred_check_branch
        %130 = sbr.rel (%p128) target = $region28
      $region27: #{a_call__.8} parent=23 // pred_region
        %p131 = scmp.lt.s32.totalorder %s9, 1
        %s132 = scalar_select %p131, %s9, 1
        %s133 = smul.addr %s132, 8
        %s134 = scalar_lea.vmem %s0, %s133
      $region28: #{a_call__.8} parent=23 // pred_fallthru
        _
    $region24: #{a_call__.8} parent=5 // pred_fallthru
      _
    %p135 = scmp.le.s32.totalorder 1, %s9
    %p136 = scmp.lt.s32.totalorder %s9, 3
    %p137 = pnand %p135, %p136
    %p138 = pneg %p137
    // Predicated region
    $region29: #{a_call__.8} parent=5 // pred_check
      _
    $region30: #{a_call__.8} parent=5 // pred_check_branch
      %140 = sbr.rel (%p137) target = $region32
    $region31: #{a_call__.8} parent=5 // pred_region
      %s141 = ssub.s32 %s9, 1
      %p142 = scmp.lt.s32.totalorder %s14, 1
      %s143 = scalar_select %p142, %s14, 1
      %s144 = smul.addr %s143, 8
      %s145 = scalar_lea.vmem %s0, %s144
      %p146 = pneg %p35
      %p147 = pneg %p32
      %p148 = pneg %p56
      %p149 = pneg %p53
      %p150 = pneg %p77
      %p151 = pneg %p74
      %p152 = pneg %p103
      %p153 = pneg %p100
      %p154 = scmp.lt.s32.totalorder %s14, 1
      %s155 = scalar_select %p154, %s14, 1
      %s156 = smul.addr %s155, 8
      %s157 = scalar_lea.vmem %s3, %s156
      %p158 = scmp.lt.s32.totalorder %s14, 1
      %s159 = scalar_select %p158, %s14, 1
      %s160 = smul.addr %s159, 8
      %s161 = scalar_lea.vmem %s0, %s160
      %p162 = scmp.lt.s32.totalorder %s14, 1
      %s163 = scalar_select %p162, %s14, 1
      %s164 = smul.addr %s163, 8
      %s165 = scalar_lea.vmem %s3, %s164
      %v167 = vld [vmem:[%s161] sm:$0xff]
      %v168 = vld [vmem:[%s2] sm:$0xff]
      %170 = vrot.lane.b32.xlu0 %v167, 127
      %v171 = vpop.permute.xlu0 %170
      %173 = vrot.lane.b32.xlu0 %v167, 126
      %v174 = vpop.permute.xlu0 %173
      %176 = vrot.lane.b32.xlu0 %v167, 125
      %v177 = vpop.permute.xlu0 %176
      %179 = vrot.lane.b32.xlu0 %v167, 124
      %v180 = vpop.permute.xlu0 %179
      %182 = vrot.lane.b32.xlu0 %v167, 123
      %v183 = vpop.permute.xlu0 %182
      %185 = vrot.lane.b32.xlu0 %v167, 122
      %v186 = vpop.permute.xlu0 %185
      %v188 = vpack.c.bf16 %v171, %v167
      %v189 = vpack.c.bf16 %v177, %v174
      %v190 = vpack.c.bf16 %v183, %v180
      %v191 = vpack.c.bf16 %v186, %v186
      %v192 = vld [vmem:[%s1] sm:$0xf]
      %194 = vset.pattern.permute.xlu0 0
      %195 = vperm.xlu0 %194, %v168
      %v196 = vpop.permute.xlu0 %195
      %vm198 = vcmask 457728
      %v200 = vsel %vm198, %v192, 0
      %vm202 = vcmask 1043456
      %v204 = vsel %vm202, %v191, 0
      %206 = vmatprep.subr.bf16.mxu0 0
      %207 = vmatpush1.bf16.msra.mxu0 0
      %208 = vmatprep.subr.bf16.mxu0 0
      %209 = vmatpush1.bf16.msra.mxu0 0
      %210 = vmatprep.subr.bf16.mxu0 0
      %211 = vmatpush1.bf16.msra.mxu0 0
      %212 = vmatprep.subr.bf16.mxu0 0
      %213 = vmatpush1.bf16.msra.mxu0 0
      %214 = vmatprep.subr.bf16.mxu0 0
      %215 = vmatpush1.bf16.msra.mxu0 %v204
      %216 = vmatprep.subr.bf16.mxu0 0
      %217 = vmatpush1.bf16.msra.mxu0 %v190
      %218 = vmatprep.subr.bf16.mxu0 0
      %219 = vmatpush1.bf16.msra.mxu0 %v189
      %220 = vmatprep.subr.bf16.mxu0 0
      %221 = vmatpush1.bf16.msra.mxu0 %v188
      %222 = vmatprep.subr.bf16.mxu0 0
      %223 = vmatpush2.bf16.msra.mxu0 0
      %224 = vmatprep.subr.bf16.mxu0 0
      %225 = vmatpush2.bf16.msra.mxu0 0
      %226 = vmatprep.subr.bf16.mxu0 0
      %227 = vmatpush2.bf16.msra.mxu0 0
      %228 = vmatprep.subr.bf16.mxu0 0
      %229 = vmatpush2.bf16.msra.mxu0 0
      %230 = vmatprep.subr.bf16.mxu0 0
      %231 = vmatpush2.bf16.msra.mxu0 0
      %232 = vmatprep.subr.bf16.mxu0 0
      %233 = vmatpush2.bf16.msra.mxu0 0
      %234 = vmatprep.subr.bf16.mxu0 0
      %235 = vmatpush2.bf16.msra.mxu0 0
      %236 = vmatprep.subr.bf16.mxu0 0
      %237 = vmatpush2.bf16.msra.mxu0 0
      %238 = vmatprep.mubr.bf16.mxu0 0
      %239 = vmatmul.mubr.bf16.gmra.mxu0 %v200
      %v240 = vpop.f32.mrf.mxu0
      %v241 = vadd.f32 %v196, %v240
      %v242 = vpop.f32.mrf.mxu0
      %v243 = vpop.f32.mrf.mxu0
      %v244 = vpop.f32.mrf.mxu0
      %245 = vdwg.mxu0
      %vm246 = vcmask 130048
      %v247 = vsel %vm246, %v241, 0.0
      %248 = vadd.xlane.f32.xlu0 %v247
      %v249 = vpop.xlane.xlu0 %248
      %v250 = vmul.f32 %v241, %v241
      %v251 = vsel %vm246, %v250, 0.0
      %252 = vadd.xlane.f32.xlu0 %v251
      %v253 = vpop.xlane.xlu0 %252
      %v254 = vmul.f32 %v249, 0.0625
      %v255 = vmul.f32 %v253, 0.0625
      %v256 = vmul.f32 %v254, %v254
      %v257 = vsub.f32 %v255, %v256
      %v258 = vmax.f32 %v257, 0.0
      %v259 = vadd.f32 %v258, 1e-05
      %v260 = vrsqrt.pop %v259
      %v261 = vsub.f32 %v241, %v254
      %v262 = vmul.f32 %v261, %v260
      %v263 = vmax.f32 %v262, 0.0
      %264 = vst.msk [vmem:[%s165] sm:$0xff] %vm246, %v263
      %p265 = scmp.lt.s32.totalorder %s14, 1
      %s266 = scalar_select %p265, %s14, 1
      %s267 = smul.addr %s266, 8
      %s268 = scalar_lea.vmem %s3, %s267
      // Predicated region
      $region33: #{a_call__.8} parent=31 // pred_check
        %p269 = pneg %p100
      $region34: #{a_call__.8} parent=31 // pred_check_branch
        %271 = sbr.rel (%p269) target = $region36
      $region35: #{a_call__.8} parent=31 // pred_region
        _
      $region36: #{a_call__.8} parent=31 // pred_fallthru
        _
    $region32: #{a_call__.8} parent=5 // pred_fallthru
      _
    %p272 = scmp.le.s32.totalorder 2, %s9
    // Predicated region
    $region37: #{a_call__.8} parent=5 // pred_check
      %p273 = pneg %p272
    $region38: #{a_call__.8} parent=5 // pred_check_branch
      %275 = sbr.rel (%p273) target = $region40
    $region39: #{a_call__.8} parent=5 // pred_region
      %s276 = ssub.s32 %s9, 2
      // Predicated region
      $region41: #{a_call__.8} parent=39 // pred_check
        %p277 = pneg %p106
      $region42: #{a_call__.8} parent=39 // pred_check_branch
        %279 = sbr.rel (%p277) target = $region44
      $region43: #{a_call__.8} parent=39 // pred_region
        %p280 = scmp.lt.s32.totalorder %s15, 1
        %s281 = scalar_select %p280, %s15, 1
        %s282 = smul.addr %s281, 8
        %s283 = scalar_lea.vmem %s3, %s282
      $region44: #{a_call__.8} parent=39 // pred_fallthru
        _
    $region40: #{a_call__.8} parent=5 // pred_fallthru
      _
  $region6: #{a_call__.8} parent=0 // loop_footer
    %s13 = sadd.s32 1, %s9
  $region7: #{a_call__.8} parent=0 // loop_footer_branch
    %8 = sbr.rel target = $region3
  $region8: #{a_call__.8} parent=0 // loop_exit
    _

// kernel: a_call__.11
$region0: #{a_call__.11}
  #allocation0 [shape = 'u32[]', space=smem, size = 0x4, offset = 0x4, fixed_abs, tag = 'smem constant byte address 0x4 - core index']
  #allocation1 [shape = 'u32[144,128]{1,0:T(1,128)}', space=vmem, size = 0x12000, scoped, tag = 'internal scratch']
  %s0 = inlined_call_operand.vmem [shape: f32[2,32,6], index: 0, kind: input, shape index: {}]
  %s1 = inlined_call_operand.vmem [shape: bf16[1,32,96], index: 1, kind: input, shape index: {}]
  %s2 = inlined_call_operand.vmem [shape: f32[32,1], index: 2, kind: input, shape index: {}]
  %s3 = inlined_call_operand.vmem [shape: f32[2,1,32,4], index: 3, kind: output, shape index: {}]
  %s4 = sld [smem:[#allocation0]]
  $region45: #{a_call__.11} parent=0
    _
  %s6 = ssub.s32 1, %s4
  %s7 = scalar_select 0, %s6, %s4
  loop: start=0, step=1, limit=4
  $region2: #{a_call__.11} parent=0 // loop_pre_header
    _
  $region3: #{a_call__.11} parent=0 // loop_header
    %s9 = sphi 0, %s13
    %p10 = scmp.ge.s32.totalorder %s9, 4
    %s19 = sphi 0, %s21
    %s22 = sphi 0, %s19
    %s23 = sphi 0, %s22
    %s39 = sphi 0, %s23
    %s43 = sphi 0, %s43
    %s45 = sphi 0, %s43
    %s46 = sphi 0, %s45
    %s60 = sphi 0, %s46
    %s64 = sphi 0, %s64
    %s66 = sphi 0, %s64
    %s67 = sphi 0, %s66
    %s81 = sphi 0, %s67
    %s87 = sphi 0, %s89
    %s90 = sphi 0, %s87
    %s91 = sphi 0, %s90
    %s107 = sphi 0, %s91
  $region4: #{a_call__.11} parent=0 // loop_header_branch
    %12 = sbr.rel (%p10) target = $region8
  $region5: #{a_call__.11} parent=0 // loop_body
    %s14 = ssub.s32 %s9, 1
    %s15 = ssub.s32 %s9, 2
    %s16 = sadd.s32 %s9, 1
    %s17 = ssub.s32 %s9, %s16
    %p18 = scmp.eq.s32.totalorder %s17, 0
    %s20 = sadd.s32 %s19, 1
    %s21 = scalar_select %p18, %s19, %s20
    %p24 = pneg %p18
    %p25 = scmp.eq.s32.totalorder %s9, 1
    %p26 = por %p24, %p25
    %p27 = scmp.ne.s32.totalorder %s19, %s22
    %p28 = scmp.eq.s32.totalorder %s9, 0
    %p29 = por %p27, %p28
    %p30 = scmp.ne.s32.totalorder %s19, %s22
    %p31 = scmp.eq.s32.totalorder %s14, 1
    %p32 = por %p30, %p31
    %p33 = scmp.ne.s32.totalorder %s22, %s23
    %p34 = scmp.eq.s32.totalorder %s14, 0
    %p35 = por %p33, %p34
    %p36 = scmp.ne.s32.totalorder %s22, %s23
    %p37 = scmp.eq.s32.totalorder %s15, 1
    %p38 = por %p36, %p37
    %p40 = scmp.ne.s32.totalorder %s23, %s39
    %p41 = scmp.eq.s32.totalorder %s15, 0
    %p42 = por %p40, %p41
    %s44 = sadd.s32 %s43, 1
    %p47 = scmp.eq.s32.totalorder %s9, 1
    %p48 = scmp.ne.s32.totalorder %s43, %s45
    %p49 = scmp.eq.s32.totalorder %s9, 0
    %p50 = por %p48, %p49
    %p51 = scmp.ne.s32.totalorder %s43, %s45
    %p52 = scmp.eq.s32.totalorder %s14, 1
    %p53 = por %p51, %p52
    %p54 = scmp.ne.s32.totalorder %s45, %s46
    %p55 = scmp.eq.s32.totalorder %s14, 0
    %p56 = por %p54, %p55
    %p57 = scmp.ne.s32.totalorder %s45, %s46
    %p58 = scmp.eq.s32.totalorder %s15, 1
    %p59 = por %p57, %p58
    %p61 = scmp.ne.s32.totalorder %s46, %s60
    %p62 = scmp.eq.s32.totalorder %s15, 0
    %p63 = por %p61, %p62
    %s65 = sadd.s32 %s64, 1
    %p68 = scmp.eq.s32.totalorder %s9, 1
    %p69 = scmp.ne.s32.totalorder %s64, %s66
    %p70 = scmp.eq.s32.totalorder %s9, 0
    %p71 = por %p69, %p70
    %p72 = scmp.ne.s32.totalorder %s64, %s66
    %p73 = scmp.eq.s32.totalorder %s14, 1
    %p74 = por %p72, %p73
    %p75 = scmp.ne.s32.totalorder %s66, %s67
    %p76 = scmp.eq.s32.totalorder %s14, 0
    %p77 = por %p75, %p76
    %p78 = scmp.ne.s32.totalorder %s66, %s67
    %p79 = scmp.eq.s32.totalorder %s15, 1
    %p80 = por %p78, %p79
    %p82 = scmp.ne.s32.totalorder %s67, %s81
    %p83 = scmp.eq.s32.totalorder %s15, 0
    %p84 = por %p82, %p83
    %s85 = ssub.s32 %s9, %s16
    %p86 = scmp.eq.s32.totalorder %s85, 0
    %s88 = sadd.s32 %s87, 1
    %s89 = scalar_select %p86, %s87, %s88
    %p92 = pneg %p86
    %p93 = scmp.eq.s32.totalorder %s9, 1
    %p94 = por %p92, %p93
    %p95 = scmp.ne.s32.totalorder %s87, %s90
    %p96 = scmp.eq.s32.totalorder %s9, 0
    %p97 = por %p95, %p96
    %p98 = scmp.ne.s32.totalorder %s87, %s90
    %p99 = scmp.eq.s32.totalorder %s14, 1
    %p100 = por %p98, %p99
    %p101 = scmp.ne.s32.totalorder %s90, %s91
    %p102 = scmp.eq.s32.totalorder %s14, 0
    %p103 = por %p101, %p102
    %p104 = scmp.ne.s32.totalorder %s90, %s91
    %p105 = scmp.eq.s32.totalorder %s15, 1
    %p106 = por %p104, %p105
    %p108 = scmp.ne.s32.totalorder %s91, %s107
    %p109 = scmp.eq.s32.totalorder %s15, 0
    %p110 = por %p108, %p109
    %p111 = scmp.le.s32.totalorder 1, %s9
    %p112 = scmp.lt.s32.totalorder %s9, 3
    %p113 = pnand %p111, %p112
    %p114 = pneg %p113
    // Predicated region
    $region9: #{a_call__.11} parent=5 // pred_check
      _
    $region10: #{a_call__.11} parent=5 // pred_check_branch
      %116 = sbr.rel (%p113) target = $region12
    $region11: #{a_call__.11} parent=5 // pred_region
      %s117 = ssub.s32 %s9, 1
      // Predicated region
      $region13: #{a_call__.11} parent=11 // pred_check
        %p118 = pneg %p56
      $region14: #{a_call__.11} parent=11 // pred_check_branch
        %120 = sbr.rel (%p118) target = $region16
      $region15: #{a_call__.11} parent=11 // pred_region
        _
      $region16: #{a_call__.11} parent=11 // pred_fallthru
        _
      // Predicated region
      $region17: #{a_call__.11} parent=11 // pred_check
        %p121 = pneg %p77
      $region18: #{a_call__.11} parent=11 // pred_check_branch
        %123 = sbr.rel (%p121) target = $region20
      $region19: #{a_call__.11} parent=11 // pred_region
        _
      $region20: #{a_call__.11} parent=11 // pred_fallthru
        _
    $region12: #{a_call__.11} parent=5 // pred_fallthru
      _
    %p124 = scmp.lt.s32.totalorder %s9, 2
    // Predicated region
    $region21: #{a_call__.11} parent=5 // pred_check
      %p125 = pneg %p124
    $region22: #{a_call__.11} parent=5 // pred_check_branch
      %127 = sbr.rel (%p125) target = $region24
    $region23: #{a_call__.11} parent=5 // pred_region
      // Predicated region
      $region25: #{a_call__.11} parent=23 // pred_check
        %p128 = pneg %p29
      $region26: #{a_call__.11} parent=23 // pred_check_branch
        %130 = sbr.rel (%p128) target = $region28
      $region27: #{a_call__.11} parent=23 // pred_region
        %p131 = scmp.lt.s32.totalorder %s9, 1
        %s132 = scalar_select %p131, %s9, 1
        %s133 = smul.addr %s132, 4
        %s134 = smul.addr %s133, 8
        %s135 = scalar_lea.vmem %s0, %s134
      $region28: #{a_call__.11} parent=23 // pred_fallthru
        _
    $region24: #{a_call__.11} parent=5 // pred_fallthru
      _
    %p136 = scmp.le.s32.totalorder 1, %s9
    %p137 = scmp.lt.s32.totalorder %s9, 3
    %p138 = pnand %p136, %p137
    %p139 = pneg %p138
    // Predicated region
    $region29: #{a_call__.11} parent=5 // pred_check
      _
    $region30: #{a_call__.11} parent=5 // pred_check_branch
      %141 = sbr.rel (%p138) target = $region32
    $region31: #{a_call__.11} parent=5 // pred_region
      %s142 = ssub.s32 %s9, 1
      %p143 = scmp.lt.s32.totalorder %s14, 1
      %s144 = scalar_select %p143, %s14, 1
      %s145 = smul.addr %s144, 4
      %s146 = smul.addr %s145, 8
      %s147 = scalar_lea.vmem %s0, %s146
      %p148 = pneg %p35
      %p149 = pneg %p32
      %p150 = pneg %p56
      %p151 = pneg %p53
      %p152 = pneg %p77
      %p153 = pneg %p74
      %p154 = pneg %p103
      %p155 = pneg %p100
      %p156 = scmp.lt.s32.totalorder %s14, 1
      %s157 = scalar_select %p156, %s14, 1
      %s158 = smul.addr %s157, 4
      %s159 = smul.addr %s158, 8
      %s160 = scalar_lea.vmem %s3, %s159
      %p161 = scmp.lt.s32.totalorder %s14, 1
      %s162 = scalar_select %p161, %s14, 1
      %s163 = smul.addr %s162, 4
      %s164 = smul.addr %s163, 8
      %s165 = scalar_lea.vmem %s0, %s164
      %p166 = scmp.lt.s32.totalorder %s14, 1
      %s167 = scalar_select %p166, %s14, 1
      %s168 = smul.addr %s167, 4
      %s169 = smul.addr %s168, 8
      %s170 = scalar_lea.vmem %s3, %s169
      %v172 = vld [vmem:[%s165] sm:$0xff]
      %v173 = vld [vmem:[%s165 + $0x8] sm:$0xff]
      %v174 = vld [vmem:[%s165 + $0x10] sm:$0xff]
      %v175 = vld [vmem:[%s165 + $0x18] sm:$0xff]
      %v176 = vld [vmem:[%s2] sm:$0xff]
      %v177 = vld [vmem:[%s2 + $0x8] sm:$0xff]
      %v178 = vld [vmem:[%s2 + $0x10] sm:$0xff]
      %v179 = vld [vmem:[%s2 + $0x18] sm:$0xff]
      %184 = vrot.lane.b32.xlu0 %v172, 127
      %v185 = vpop.permute.xlu0 %184
      %186 = vrot.lane.b32.xlu0 %v173, 127
      %v187 = vpop.permute.xlu0 %186
      %188 = vrot.lane.b32.xlu0 %v174, 127
      %v189 = vpop.permute.xlu0 %188
      %190 = vrot.lane.b32.xlu0 %v175, 127
      %v191 = vpop.permute.xlu0 %190
      %196 = vrot.lane.b32.xlu0 %v172, 126
      %v197 = vpop.permute.xlu0 %196
      %198 = vrot.lane.b32.xlu0 %v173, 126
      %v199 = vpop.permute.xlu0 %198
      %200 = vrot.lane.b32.xlu0 %v174, 126
      %v201 = vpop.permute.xlu0 %200
      %202 = vrot.lane.b32.xlu0 %v175, 126
      %v203 = vpop.permute.xlu0 %202
      %v208 = vpack.c.bf16 %v173, %v172
      %v209 = vpack.c.bf16 %v175, %v174
      %v210 = vpack.c.bf16 %v187, %v185
      %v211 = vpack.c.bf16 %v191, %v189
      %v212 = vpack.c.bf16 %v199, %v197
      %v213 = vpack.c.bf16 %v203, %v201
      %v214 = vld [vmem:[%s1] sm:$0xf]
      %v215 = vld [vmem:[%s1 + $0x4] sm:$0xf]
      %v216 = vld [vmem:[%s1 + $0x8] sm:$0xf]
      %v217 = vld [vmem:[%s1 + $0xc] sm:$0xf]
      %219 = vset.pattern.permute.xlu0 0
      %220 = vperm.xlu0 %219, %v176
      %v221 = vpop.permute.xlu0 %220
      %224 = vset.pattern.permute.xlu0 0
      %225 = vperm.xlu0 %224, %v177
      %v226 = vpop.permute.xlu0 %225
      %229 = vset.pattern.permute.xlu0 0
      %230 = vperm.xlu0 %229, %v178
      %v231 = vpop.permute.xlu0 %230
      %234 = vset.pattern.permute.xlu0 0
      %235 = vperm.xlu0 %234, %v179
      %v236 = vpop.permute.xlu0 %235
      %v242 = vunpack.c.l.b16 %v214
      %v243 = vunpack.c.l.b16 %v215
      %v244 = vunpack.c.l.b16 %v216
      %v245 = vunpack.c.l.b16 %v217
      %v246 = vpack.c.b16 %v243, %v242
      %v247 = vpack.c.b16 %v245, %v244
      %vm248 = vcmask 785408
      %v250 = vsel %vm248, %v246, 0
      %v253 = vsel %vm248, %v247, 0
      %255 = vmatprep.subr.bf16.mxu0 0
      %256 = vmatpush1.bf16.msra.mxu0 0
      %257 = vmatprep.subr.bf16.mxu0 0
      %258 = vmatpush1.bf16.msra.mxu0 0
      %259 = vmatprep.subr.bf16.mxu0 0
      %260 = vmatpush1.bf16.msra.mxu0 %v213
      %261 = vmatprep.subr.bf16.mxu0 0
      %262 = vmatpush1.bf16.msra.mxu0 %v212
      %263 = vmatprep.subr.bf16.mxu0 0
      %264 = vmatpush1.bf16.msra.mxu0 %v211
      %265 = vmatprep.subr.bf16.mxu0 0
      %266 = vmatpush1.bf16.msra.mxu0 %v210
      %267 = vmatprep.subr.bf16.mxu0 0
      %268 = vmatpush1.bf16.msra.mxu0 %v209
      %269 = vmatprep.subr.bf16.mxu0 0
      %270 = vmatpush1.bf16.msra.mxu0 %v208
      %271 = vmatprep.subr.bf16.mxu0 0
      %272 = vmatpush2.bf16.msra.mxu0 0
      %273 = vmatprep.subr.bf16.mxu0 0
      %274 = vmatpush2.bf16.msra.mxu0 0
      %275 = vmatprep.subr.bf16.mxu0 0
      %276 = vmatpush2.bf16.msra.mxu0 0
      %277 = vmatprep.subr.bf16.mxu0 0
      %278 = vmatpush2.bf16.msra.mxu0 0
      %279 = vmatprep.subr.bf16.mxu0 0
      %280 = vmatpush2.bf16.msra.mxu0 0
      %281 = vmatprep.subr.bf16.mxu0 0
      %282 = vmatpush2.bf16.msra.mxu0 0
      %283 = vmatprep.subr.bf16.mxu0 0
      %284 = vmatpush2.bf16.msra.mxu0 0
      %285 = vmatprep.subr.bf16.mxu0 0
      %286 = vmatpush2.bf16.msra.mxu0 0
      %287 = vmatprep.mubr.bf16.mxu0 0
      %288 = vmatmul.mubr.bf16.gmra.mxu0 %v250
      %v289 = vpop.f32.mrf.mxu0
      %v290 = vadd.f32 %v221, %v289
      %v291 = vpop.f32.mrf.mxu0
      %v292 = vpop.f32.mrf.mxu0
      %v293 = vadd.f32 %v226, %v292
      %v294 = vpop.f32.mrf.mxu0
      %295 = vmatprep.mubr.bf16.mxu0 0
      %296 = vmatmul.mubr.bf16.gmra.mxu0 %v253
      %v297 = vpop.f32.mrf.mxu0
      %v298 = vadd.f32 %v231, %v297
      %v299 = vpop.f32.mrf.mxu0
      %v300 = vpop.f32.mrf.mxu0
      %v301 = vadd.f32 %v236, %v300
      %v302 = vpop.f32.mrf.mxu0
      %303 = vdwg.mxu0
      %vm304 = vcmask 31744
      %v305 = vsel %vm304, %v290, 0.0
      %306 = vadd.xlane.f32.xlu0 %v305
      %v307 = vpop.xlane.xlu0 %306
      %v308 = vsel %vm304, %v293, 0.0
      %309 = vadd.xlane.f32.xlu0 %v308
      %v310 = vpop.xlane.xlu0 %309
      %v311 = vsel %vm304, %v298, 0.0
      %312 = vadd.xlane.f32.xlu0 %v311
      %v313 = vpop.xlane.xlu0 %312
      %v314 = vsel %vm304, %v301, 0.0
      %315 = vadd.xlane.f32.xlu0 %v314
      %v316 = vpop.xlane.xlu0 %315
      %v317 = vmul.f32 %v290, %v290
      %v318 = vmul.f32 %v293, %v293
      %v319 = vmul.f32 %v298, %v298
      %v320 = vmul.f32 %v301, %v301
      %v321 = vsel %vm304, %v317, 0.0
      %322 = vadd.xlane.f32.xlu0 %v321
      %v323 = vpop.xlane.xlu0 %322
      %v324 = vsel %vm304, %v318, 0.0
      %325 = vadd.xlane.f32.xlu0 %v324
      %v326 = vpop.xlane.xlu0 %325
      %v327 = vsel %vm304, %v319, 0.0
      %328 = vadd.xlane.f32.xlu0 %v327
      %v329 = vpop.xlane.xlu0 %328
      %v330 = vsel %vm304, %v320, 0.0
      %331 = vadd.xlane.f32.xlu0 %v330
      %v332 = vpop.xlane.xlu0 %331
      %v333 = vmul.f32 %v307, 0.25
      %v334 = vmul.f32 %v310, 0.25
      %v335 = vmul.f32 %v313, 0.25
      %v336 = vmul.f32 %v316, 0.25
      %v337 = vmul.f32 %v323, 0.25
      %v338 = vmul.f32 %v326, 0.25
      %v339 = vmul.f32 %v329, 0.25
      %v340 = vmul.f32 %v332, 0.25
      %v341 = vmul.f32 %v333, %v333
      %v342 = vmul.f32 %v334, %v334
      %v343 = vmul.f32 %v335, %v335
      %v344 = vmul.f32 %v336, %v336
      %v345 = vsub.f32 %v337, %v341
      %v346 = vsub.f32 %v338, %v342
      %v347 = vsub.f32 %v339, %v343
      %v348 = vsub.f32 %v340, %v344
      %v349 = vmax.f32 %v345, 0.0
      %v350 = vmax.f32 %v346, 0.0
      %v351 = vmax.f32 %v347, 0.0
      %v352 = vmax.f32 %v348, 0.0
      %v353 = vadd.f32 %v349, 1e-05
      %v354 = vadd.f32 %v350, 1e-05
      %v355 = vadd.f32 %v351, 1e-05
      %v356 = vadd.f32 %v352, 1e-05
      %v357 = vrsqrt.pop %v353
      %v358 = vrsqrt.pop %v354
      %v359 = vrsqrt.pop %v355
      %v360 = vrsqrt.pop %v356
      %v361 = vsub.f32 %v290, %v333
      %v362 = vsub.f32 %v293, %v334
      %v363 = vsub.f32 %v298, %v335
      %v364 = vsub.f32 %v301, %v336
      %v365 = vmul.f32 %v361, %v357
      %v366 = vmul.f32 %v362, %v358
      %v367 = vmul.f32 %v363, %v359
      %v368 = vmul.f32 %v364, %v360
      %v369 = vmax.f32 %v365, 0.0
      %v370 = vmax.f32 %v366, 0.0
      %v371 = vmax.f32 %v367, 0.0
      %v372 = vmax.f32 %v368, 0.0
      %373 = vst.msk [vmem:[%s170] sm:$0xff] %vm304, %v369
      %374 = vst.msk [vmem:[%s170 + $0x8] sm:$0xff] %vm304, %v370
      %375 = vst.msk [vmem:[%s170 + $0x10] sm:$0xff] %vm304, %v371
      %376 = vst.msk [vmem:[%s170 + $0x18] sm:$0xff] %vm304, %v372
      %p377 = scmp.lt.s32.totalorder %s14, 1
      %s378 = scalar_select %p377, %s14, 1
      %s379 = smul.addr %s378, 4
      %s380 = smul.addr %s379, 8
      %s381 = scalar_lea.vmem %s3, %s380
      // Predicated region
      $region33: #{a_call__.11} parent=31 // pred_check
        %p382 = pneg %p100
      $region34: #{a_call__.11} parent=31 // pred_check_branch
        %384 = sbr.rel (%p382) target = $region36
      $region35: #{a_call__.11} parent=31 // pred_region
        _
      $region36: #{a_call__.11} parent=31 // pred_fallthru
        _
    $region32: #{a_call__.11} parent=5 // pred_fallthru
      _
    %p385 = scmp.le.s32.totalorder 2, %s9
    // Predicated region
    $region37: #{a_call__.11} parent=5 // pred_check
      %p386 = pneg %p385
    $region38: #{a_call__.11} parent=5 // pred_check_branch
      %388 = sbr.rel (%p386) target = $region40
    $region39: #{a_call__.11} parent=5 // pred_region
      %s389 = ssub.s32 %s9, 2
      // Predicated region
      $region41: #{a_call__.11} parent=39 // pred_check
        %p390 = pneg %p106
      $region42: #{a_call__.11} parent=39 // pred_check_branch
        %392 = sbr.rel (%p390) target = $region44
      $region43: #{a_call__.11} parent=39 // pred_region
        %p393 = scmp.lt.s32.totalorder %s15, 1
        %s394 = scalar_select %p393, %s15, 1
        %s395 = smul.addr %s394, 4
        %s396 = smul.addr %s395, 8
        %s397 = scalar_lea.vmem %s3, %s396
      $region44: #{a_call__.11} parent=39 // pred_fallthru
        _
    $region40: #{a_call__.11} parent=5 // pred_fallthru
      _
  $region6: #{a_call__.11} parent=0 // loop_footer
    %s13 = sadd.s32 1, %s9
  $region7: #{a_call__.11} parent=0 // loop_footer_branch
    %8 = sbr.rel target = $region3
  $region8: #{a_call__.11} parent=0 // loop_exit
    _

// kernel: a_call__.10
$region0: #{a_call__.10}
  #allocation0 [shape = 'u32[]', space=smem, size = 0x4, offset = 0x4, fixed_abs, tag = 'smem constant byte address 0x4 - core index']
  #allocation1 [shape = 'u32[144,128]{1,0:T(1,128)}', space=vmem, size = 0x12000, scoped, tag = 'internal scratch']
  %s0 = inlined_call_operand.vmem [shape: f32[2,32,5], index: 0, kind: input, shape index: {}]
  %s1 = inlined_call_operand.vmem [shape: bf16[1,32,64], index: 1, kind: input, shape index: {}]
  %s2 = inlined_call_operand.vmem [shape: f32[32,1], index: 2, kind: input, shape index: {}]
  %s3 = inlined_call_operand.vmem [shape: f32[2,1,32,4], index: 3, kind: output, shape index: {}]
  %s4 = sld [smem:[#allocation0]]
  $region45: #{a_call__.10} parent=0
    _
  %s6 = ssub.s32 1, %s4
  %s7 = scalar_select 0, %s6, %s4
  loop: start=0, step=1, limit=4
  $region2: #{a_call__.10} parent=0 // loop_pre_header
    _
  $region3: #{a_call__.10} parent=0 // loop_header
    %s9 = sphi 0, %s13
    %p10 = scmp.ge.s32.totalorder %s9, 4
    %s19 = sphi 0, %s21
    %s22 = sphi 0, %s19
    %s23 = sphi 0, %s22
    %s39 = sphi 0, %s23
    %s43 = sphi 0, %s43
    %s45 = sphi 0, %s43
    %s46 = sphi 0, %s45
    %s60 = sphi 0, %s46
    %s64 = sphi 0, %s64
    %s66 = sphi 0, %s64
    %s67 = sphi 0, %s66
    %s81 = sphi 0, %s67
    %s87 = sphi 0, %s89
    %s90 = sphi 0, %s87
    %s91 = sphi 0, %s90
    %s107 = sphi 0, %s91
  $region4: #{a_call__.10} parent=0 // loop_header_branch
    %12 = sbr.rel (%p10) target = $region8
  $region5: #{a_call__.10} parent=0 // loop_body
    %s14 = ssub.s32 %s9, 1
    %s15 = ssub.s32 %s9, 2
    %s16 = sadd.s32 %s9, 1
    %s17 = ssub.s32 %s9, %s16
    %p18 = scmp.eq.s32.totalorder %s17, 0
    %s20 = sadd.s32 %s19, 1
    %s21 = scalar_select %p18, %s19, %s20
    %p24 = pneg %p18
    %p25 = scmp.eq.s32.totalorder %s9, 1
    %p26 = por %p24, %p25
    %p27 = scmp.ne.s32.totalorder %s19, %s22
    %p28 = scmp.eq.s32.totalorder %s9, 0
    %p29 = por %p27, %p28
    %p30 = scmp.ne.s32.totalorder %s19, %s22
    %p31 = scmp.eq.s32.totalorder %s14, 1
    %p32 = por %p30, %p31
    %p33 = scmp.ne.s32.totalorder %s22, %s23
    %p34 = scmp.eq.s32.totalorder %s14, 0
    %p35 = por %p33, %p34
    %p36 = scmp.ne.s32.totalorder %s22, %s23
    %p37 = scmp.eq.s32.totalorder %s15, 1
    %p38 = por %p36, %p37
    %p40 = scmp.ne.s32.totalorder %s23, %s39
    %p41 = scmp.eq.s32.totalorder %s15, 0
    %p42 = por %p40, %p41
    %s44 = sadd.s32 %s43, 1
    %p47 = scmp.eq.s32.totalorder %s9, 1
    %p48 = scmp.ne.s32.totalorder %s43, %s45
    %p49 = scmp.eq.s32.totalorder %s9, 0
    %p50 = por %p48, %p49
    %p51 = scmp.ne.s32.totalorder %s43, %s45
    %p52 = scmp.eq.s32.totalorder %s14, 1
    %p53 = por %p51, %p52
    %p54 = scmp.ne.s32.totalorder %s45, %s46
    %p55 = scmp.eq.s32.totalorder %s14, 0
    %p56 = por %p54, %p55
    %p57 = scmp.ne.s32.totalorder %s45, %s46
    %p58 = scmp.eq.s32.totalorder %s15, 1
    %p59 = por %p57, %p58
    %p61 = scmp.ne.s32.totalorder %s46, %s60
    %p62 = scmp.eq.s32.totalorder %s15, 0
    %p63 = por %p61, %p62
    %s65 = sadd.s32 %s64, 1
    %p68 = scmp.eq.s32.totalorder %s9, 1
    %p69 = scmp.ne.s32.totalorder %s64, %s66
    %p70 = scmp.eq.s32.totalorder %s9, 0
    %p71 = por %p69, %p70
    %p72 = scmp.ne.s32.totalorder %s64, %s66
    %p73 = scmp.eq.s32.totalorder %s14, 1
    %p74 = por %p72, %p73
    %p75 = scmp.ne.s32.totalorder %s66, %s67
    %p76 = scmp.eq.s32.totalorder %s14, 0
    %p77 = por %p75, %p76
    %p78 = scmp.ne.s32.totalorder %s66, %s67
    %p79 = scmp.eq.s32.totalorder %s15, 1
    %p80 = por %p78, %p79
    %p82 = scmp.ne.s32.totalorder %s67, %s81
    %p83 = scmp.eq.s32.totalorder %s15, 0
    %p84 = por %p82, %p83
    %s85 = ssub.s32 %s9, %s16
    %p86 = scmp.eq.s32.totalorder %s85, 0
    %s88 = sadd.s32 %s87, 1
    %s89 = scalar_select %p86, %s87, %s88
    %p92 = pneg %p86
    %p93 = scmp.eq.s32.totalorder %s9, 1
    %p94 = por %p92, %p93
    %p95 = scmp.ne.s32.totalorder %s87, %s90
    %p96 = scmp.eq.s32.totalorder %s9, 0
    %p97 = por %p95, %p96
    %p98 = scmp.ne.s32.totalorder %s87, %s90
    %p99 = scmp.eq.s32.totalorder %s14, 1
    %p100 = por %p98, %p99
    %p101 = scmp.ne.s32.totalorder %s90, %s91
    %p102 = scmp.eq.s32.totalorder %s14, 0
    %p103 = por %p101, %p102
    %p104 = scmp.ne.s32.totalorder %s90, %s91
    %p105 = scmp.eq.s32.totalorder %s15, 1
    %p106 = por %p104, %p105
    %p108 = scmp.ne.s32.totalorder %s91, %s107
    %p109 = scmp.eq.s32.totalorder %s15, 0
    %p110 = por %p108, %p109
    %p111 = scmp.le.s32.totalorder 1, %s9
    %p112 = scmp.lt.s32.totalorder %s9, 3
    %p113 = pnand %p111, %p112
    %p114 = pneg %p113
    // Predicated region
    $region9: #{a_call__.10} parent=5 // pred_check
      _
    $region10: #{a_call__.10} parent=5 // pred_check_branch
      %116 = sbr.rel (%p113) target = $region12
    $region11: #{a_call__.10} parent=5 // pred_region
      %s117 = ssub.s32 %s9, 1
      // Predicated region
      $region13: #{a_call__.10} parent=11 // pred_check
        %p118 = pneg %p56
      $region14: #{a_call__.10} parent=11 // pred_check_branch
        %120 = sbr.rel (%p118) target = $region16
      $region15: #{a_call__.10} parent=11 // pred_region
        _
      $region16: #{a_call__.10} parent=11 // pred_fallthru
        _
      // Predicated region
      $region17: #{a_call__.10} parent=11 // pred_check
        %p121 = pneg %p77
      $region18: #{a_call__.10} parent=11 // pred_check_branch
        %123 = sbr.rel (%p121) target = $region20
      $region19: #{a_call__.10} parent=11 // pred_region
        _
      $region20: #{a_call__.10} parent=11 // pred_fallthru
        _
    $region12: #{a_call__.10} parent=5 // pred_fallthru
      _
    %p124 = scmp.lt.s32.totalorder %s9, 2
    // Predicated region
    $region21: #{a_call__.10} parent=5 // pred_check
      %p125 = pneg %p124
    $region22: #{a_call__.10} parent=5 // pred_check_branch
      %127 = sbr.rel (%p125) target = $region24
    $region23: #{a_call__.10} parent=5 // pred_region
      // Predicated region
      $region25: #{a_call__.10} parent=23 // pred_check
        %p128 = pneg %p29
      $region26: #{a_call__.10} parent=23 // pred_check_branch
        %130 = sbr.rel (%p128) target = $region28
      $region27: #{a_call__.10} parent=23 // pred_region
        %p131 = scmp.lt.s32.totalorder %s9, 1
        %s132 = scalar_select %p131, %s9, 1
        %s133 = smul.addr %s132, 4
        %s134 = smul.addr %s133, 8
        %s135 = scalar_lea.vmem %s0, %s134
      $region28: #{a_call__.10} parent=23 // pred_fallthru
        _
    $region24: #{a_call__.10} parent=5 // pred_fallthru
      _
    %p136 = scmp.le.s32.totalorder 1, %s9
    %p137 = scmp.lt.s32.totalorder %s9, 3
    %p138 = pnand %p136, %p137
    %p139 = pneg %p138
    // Predicated region
    $region29: #{a_call__.10} parent=5 // pred_check
      _
    $region30: #{a_call__.10} parent=5 // pred_check_branch
      %141 = sbr.rel (%p138) target = $region32
    $region31: #{a_call__.10} parent=5 // pred_region
      %s142 = ssub.s32 %s9, 1
      %p143 = scmp.lt.s32.totalorder %s14, 1
      %s144 = scalar_select %p143, %s14, 1
      %s145 = smul.addr %s144, 4
      %s146 = smul.addr %s145, 8
      %s147 = scalar_lea.vmem %s0, %s146
      %p148 = pneg %p35
      %p149 = pneg %p32
      %p150 = pneg %p56
      %p151 = pneg %p53
      %p152 = pneg %p77
      %p153 = pneg %p74
      %p154 = pneg %p103
      %p155 = pneg %p100
      %p156 = scmp.lt.s32.totalorder %s14, 1
      %s157 = scalar_select %p156, %s14, 1
      %s158 = smul.addr %s157, 4
      %s159 = smul.addr %s158, 8
      %s160 = scalar_lea.vmem %s3, %s159
      %p161 = scmp.lt.s32.totalorder %s14, 1
      %s162 = scalar_select %p161, %s14, 1
      %s163 = smul.addr %s162, 4
      %s164 = smul.addr %s163, 8
      %s165 = scalar_lea.vmem %s0, %s164
      %p166 = scmp.lt.s32.totalorder %s14, 1
      %s167 = scalar_select %p166, %s14, 1
      %s168 = smul.addr %s167, 4
      %s169 = smul.addr %s168, 8
      %s170 = scalar_lea.vmem %s3, %s169
      %v172 = vld [vmem:[%s165] sm:$0xff]
      %v173 = vld [vmem:[%s165 + $0x8] sm:$0xff]
      %v174 = vld [vmem:[%s165 + $0x10] sm:$0xff]
      %v175 = vld [vmem:[%s165 + $0x18] sm:$0xff]
      %v176 = vld [vmem:[%s2] sm:$0xff]
      %v177 = vld [vmem:[%s2 + $0x8] sm:$0xff]
      %v178 = vld [vmem:[%s2 + $0x10] sm:$0xff]
      %v179 = vld [vmem:[%s2 + $0x18] sm:$0xff]
      %184 = vrot.lane.b32.xlu0 %v172, 127
      %v185 = vpop.permute.xlu0 %184
      %186 = vrot.lane.b32.xlu0 %v173, 127
      %v187 = vpop.permute.xlu0 %186
      %188 = vrot.lane.b32.xlu0 %v174, 127
      %v189 = vpop.permute.xlu0 %188
      %190 = vrot.lane.b32.xlu0 %v175, 127
      %v191 = vpop.permute.xlu0 %190
      %v196 = vpack.c.bf16 %v173, %v172
      %v197 = vpack.c.bf16 %v175, %v174
      %v198 = vpack.c.bf16 %v187, %v185
      %v199 = vpack.c.bf16 %v191, %v189
      %v200 = vld [vmem:[%s1] sm:$0xf]
      %v201 = vld [vmem:[%s1 + $0x4] sm:$0xf]
      %v202 = vld [vmem:[%s1 + $0x8] sm:$0xf]
      %v203 = vld [vmem:[%s1 + $0xc] sm:$0xf]
      %205 = vset.pattern.permute.xlu0 0
      %206 = vperm.xlu0 %205, %v176
      %v207 = vpop.permute.xlu0 %206
      %210 = vset.pattern.permute.xlu0 0
      %211 = vperm.xlu0 %210, %v177
      %v212 = vpop.permute.xlu0 %211
      %215 = vset.pattern.permute.xlu0 0
      %216 = vperm.xlu0 %215, %v178
      %v217 = vpop.permute.xlu0 %216
      %220 = vset.pattern.permute.xlu0 0
      %221 = vperm.xlu0 %220, %v179
      %v222 = vpop.permute.xlu0 %221
      %v228 = vunpack.c.l.b16 %v200
      %v229 = vunpack.c.l.b16 %v201
      %v230 = vunpack.c.l.b16 %v202
      %v231 = vunpack.c.l.b16 %v203
      %v232 = vpack.c.b16 %v229, %v228
      %v233 = vpack.c.b16 %v231, %v230
      %vm234 = vcmask 523264
      %v236 = vsel %vm234, %v232, 0
      %v239 = vsel %vm234, %v233, 0
      %241 = vmatprep.subr.bf16.mxu0 0
      %242 = vmatpush1.bf16.msra.mxu0 0
      %243 = vmatprep.subr.bf16.mxu0 0
      %244 = vmatpush1.bf16.msra.mxu0 0
      %245 = vmatprep.subr.bf16.mxu0 0
      %246 = vmatpush1.bf16.msra.mxu0 0
      %247 = vmatprep.subr.bf16.mxu0 0
      %248 = vmatpush1.bf16.msra.mxu0 0
      %249 = vmatprep.subr.bf16.mxu0 0
      %250 = vmatpush1.bf16.msra.mxu0 %v199
      %251 = vmatprep.subr.bf16.mxu0 0
      %252 = vmatpush1.bf16.msra.mxu0 %v198
      %253 = vmatprep.subr.bf16.mxu0 0
      %254 = vmatpush1.bf16.msra.mxu0 %v197
      %255 = vmatprep.subr.bf16.mxu0 0
      %256 = vmatpush1.bf16.msra.mxu0 %v196
      %257 = vmatprep.subr.bf16.mxu0 0
      %258 = vmatpush2.bf16.msra.mxu0 0
      %259 = vmatprep.subr.bf16.mxu0 0
      %260 = vmatpush2.bf16.msra.mxu0 0
      %261 = vmatprep.subr.bf16.mxu0 0
      %262 = vmatpush2.bf16.msra.mxu0 0
      %263 = vmatprep.subr.bf16.mxu0 0
      %264 = vmatpush2.bf16.msra.mxu0 0
      %265 = vmatprep.subr.bf16.mxu0 0
      %266 = vmatpush2.bf16.msra.mxu0 0
      %267 = vmatprep.subr.bf16.mxu0 0
      %268 = vmatpush2.bf16.msra.mxu0 0
      %269 = vmatprep.subr.bf16.mxu0 0
      %270 = vmatpush2.bf16.msra.mxu0 0
      %271 = vmatprep.subr.bf16.mxu0 0
      %272 = vmatpush2.bf16.msra.mxu0 0
      %273 = vmatprep.mubr.bf16.mxu0 0
      %274 = vmatmul.mubr.bf16.gmra.mxu0 %v236
      %v275 = vpop.f32.mrf.mxu0
      %v276 = vadd.f32 %v207, %v275
      %v277 = vpop.f32.mrf.mxu0
      %v278 = vpop.f32.mrf.mxu0
      %v279 = vadd.f32 %v212, %v278
      %v280 = vpop.f32.mrf.mxu0
      %281 = vmatprep.mubr.bf16.mxu0 0
      %282 = vmatmul.mubr.bf16.gmra.mxu0 %v239
      %v283 = vpop.f32.mrf.mxu0
      %v284 = vadd.f32 %v217, %v283
      %v285 = vpop.f32.mrf.mxu0
      %v286 = vpop.f32.mrf.mxu0
      %v287 = vadd.f32 %v222, %v286
      %v288 = vpop.f32.mrf.mxu0
      %289 = vdwg.mxu0
      %vm290 = vcmask 31744
      %v291 = vsel %vm290, %v276, 0.0
      %292 = vadd.xlane.f32.xlu0 %v291
      %v293 = vpop.xlane.xlu0 %292
      %v294 = vsel %vm290, %v279, 0.0
      %295 = vadd.xlane.f32.xlu0 %v294
      %v296 = vpop.xlane.xlu0 %295
      %v297 = vsel %vm290, %v284, 0.0
      %298 = vadd.xlane.f32.xlu0 %v297
      %v299 = vpop.xlane.xlu0 %298
      %v300 = vsel %vm290, %v287, 0.0
      %301 = vadd.xlane.f32.xlu0 %v300
      %v302 = vpop.xlane.xlu0 %301
      %v303 = vmul.f32 %v276, %v276
      %v304 = vmul.f32 %v279, %v279
      %v305 = vmul.f32 %v284, %v284
      %v306 = vmul.f32 %v287, %v287
      %v307 = vsel %vm290, %v303, 0.0
      %308 = vadd.xlane.f32.xlu0 %v307
      %v309 = vpop.xlane.xlu0 %308
      %v310 = vsel %vm290, %v304, 0.0
      %311 = vadd.xlane.f32.xlu0 %v310
      %v312 = vpop.xlane.xlu0 %311
      %v313 = vsel %vm290, %v305, 0.0
      %314 = vadd.xlane.f32.xlu0 %v313
      %v315 = vpop.xlane.xlu0 %314
      %v316 = vsel %vm290, %v306, 0.0
      %317 = vadd.xlane.f32.xlu0 %v316
      %v318 = vpop.xlane.xlu0 %317
      %v319 = vmul.f32 %v293, 0.25
      %v320 = vmul.f32 %v296, 0.25
      %v321 = vmul.f32 %v299, 0.25
      %v322 = vmul.f32 %v302, 0.25
      %v323 = vmul.f32 %v309, 0.25
      %v324 = vmul.f32 %v312, 0.25
      %v325 = vmul.f32 %v315, 0.25
      %v326 = vmul.f32 %v318, 0.25
      %v327 = vmul.f32 %v319, %v319
      %v328 = vmul.f32 %v320, %v320
      %v329 = vmul.f32 %v321, %v321
      %v330 = vmul.f32 %v322, %v322
      %v331 = vsub.f32 %v323, %v327
      %v332 = vsub.f32 %v324, %v328
      %v333 = vsub.f32 %v325, %v329
      %v334 = vsub.f32 %v326, %v330
      %v335 = vmax.f32 %v331, 0.0
      %v336 = vmax.f32 %v332, 0.0
      %v337 = vmax.f32 %v333, 0.0
      %v338 = vmax.f32 %v334, 0.0
      %v339 = vadd.f32 %v335, 1e-05
      %v340 = vadd.f32 %v336, 1e-05
      %v341 = vadd.f32 %v337, 1e-05
      %v342 = vadd.f32 %v338, 1e-05
      %v343 = vrsqrt.pop %v339
      %v344 = vrsqrt.pop %v340
      %v345 = vrsqrt.pop %v341
      %v346 = vrsqrt.pop %v342
      %v347 = vsub.f32 %v276, %v319
      %v348 = vsub.f32 %v279, %v320
      %v349 = vsub.f32 %v284, %v321
      %v350 = vsub.f32 %v287, %v322
      %v351 = vmul.f32 %v347, %v343
      %v352 = vmul.f32 %v348, %v344
      %v353 = vmul.f32 %v349, %v345
      %v354 = vmul.f32 %v350, %v346
      %v355 = vmax.f32 %v351, 0.0
      %v356 = vmax.f32 %v352, 0.0
      %v357 = vmax.f32 %v353, 0.0
      %v358 = vmax.f32 %v354, 0.0
      %359 = vst.msk [vmem:[%s170] sm:$0xff] %vm290, %v355
      %360 = vst.msk [vmem:[%s170 + $0x8] sm:$0xff] %vm290, %v356
      %361 = vst.msk [vmem:[%s170 + $0x10] sm:$0xff] %vm290, %v357
      %362 = vst.msk [vmem:[%s170 + $0x18] sm:$0xff] %vm290, %v358
      %p363 = scmp.lt.s32.totalorder %s14, 1
      %s364 = scalar_select %p363, %s14, 1
      %s365 = smul.addr %s364, 4
      %s366 = smul.addr %s365, 8
      %s367 = scalar_lea.vmem %s3, %s366
      // Predicated region
      $region33: #{a_call__.10} parent=31 // pred_check
        %p368 = pneg %p100
      $region34: #{a_call__.10} parent=31 // pred_check_branch
        %370 = sbr.rel (%p368) target = $region36
      $region35: #{a_call__.10} parent=31 // pred_region
        _
      $region36: #{a_call__.10} parent=31 // pred_fallthru
        _
    $region32: #{a_call__.10} parent=5 // pred_fallthru
      _
    %p371 = scmp.le.s32.totalorder 2, %s9
    // Predicated region
    $region37: #{a_call__.10} parent=5 // pred_check
      %p372 = pneg %p371
    $region38: #{a_call__.10} parent=5 // pred_check_branch
      %374 = sbr.rel (%p372) target = $region40
    $region39: #{a_call__.10} parent=5 // pred_region
      %s375 = ssub.s32 %s9, 2
      // Predicated region
      $region41: #{a_call__.10} parent=39 // pred_check
        %p376 = pneg %p106
      $region42: #{a_call__.10} parent=39 // pred_check_branch
        %378 = sbr.rel (%p376) target = $region44
      $region43: #{a_call__.10} parent=39 // pred_region
        %p379 = scmp.lt.s32.totalorder %s15, 1
        %s380 = scalar_select %p379, %s15, 1
        %s381 = smul.addr %s380, 4
        %s382 = smul.addr %s381, 8
        %s383 = scalar_lea.vmem %s3, %s382
      $region44: #{a_call__.10} parent=39 // pred_fallthru
        _
    $region40: #{a_call__.10} parent=5 // pred_fallthru
      _
  $region6: #{a_call__.10} parent=0 // loop_footer
    %s13 = sadd.s32 1, %s9
  $region7: #{a_call__.10} parent=0 // loop_footer_branch
    %8 = sbr.rel target = $region3
  $region8: #{a_call__.10} parent=0 // loop_exit
    _

// kernel: a_call__.13
$region0: #{a_call__.13}
  #allocation0 [shape = 'u32[]', space=smem, size = 0x4, offset = 0x4, fixed_abs, tag = 'smem constant byte address 0x4 - core index']
  #allocation1 [shape = 'u32[144,128]{1,0:T(1,128)}', space=vmem, size = 0x12000, scoped, tag = 'internal scratch']
  %s0 = inlined_call_operand.vmem [shape: f32[2,32,6], index: 0, kind: input, shape index: {}]
  %s1 = inlined_call_operand.vmem [shape: bf16[2,16,64], index: 1, kind: input, shape index: {}]
  %s2 = inlined_call_operand.vmem [shape: f32[16,1], index: 2, kind: input, shape index: {}]
  %s3 = inlined_call_operand.vmem [shape: f32[2,2,16,4], index: 3, kind: output, shape index: {}]
  %s4 = sld [smem:[#allocation0]]
  $region45: #{a_call__.13} parent=0
    _
  %s6 = ssub.s32 1, %s4
  %s7 = scalar_select 0, %s6, %s4
  loop: start=0, step=1, limit=4
  $region2: #{a_call__.13} parent=0 // loop_pre_header
    _
  $region3: #{a_call__.13} parent=0 // loop_header
    %s9 = sphi 0, %s13
    %p10 = scmp.ge.s32.totalorder %s9, 4
    %s19 = sphi 0, %s21
    %s22 = sphi 0, %s19
    %s23 = sphi 0, %s22
    %s39 = sphi 0, %s23
    %s43 = sphi 0, %s43
    %s45 = sphi 0, %s43
    %s46 = sphi 0, %s45
    %s60 = sphi 0, %s46
    %s64 = sphi 0, %s64
    %s66 = sphi 0, %s64
    %s67 = sphi 0, %s66
    %s81 = sphi 0, %s67
    %s87 = sphi 0, %s89
    %s90 = sphi 0, %s87
    %s91 = sphi 0, %s90
    %s107 = sphi 0, %s91
  $region4: #{a_call__.13} parent=0 // loop_header_branch
    %12 = sbr.rel (%p10) target = $region8
  $region5: #{a_call__.13} parent=0 // loop_body
    %s14 = ssub.s32 %s9, 1
    %s15 = ssub.s32 %s9, 2
    %s16 = sadd.s32 %s9, 1
    %s17 = ssub.s32 %s9, %s16
    %p18 = scmp.eq.s32.totalorder %s17, 0
    %s20 = sadd.s32 %s19, 1
    %s21 = scalar_select %p18, %s19, %s20
    %p24 = pneg %p18
    %p25 = scmp.eq.s32.totalorder %s9, 1
    %p26 = por %p24, %p25
    %p27 = scmp.ne.s32.totalorder %s19, %s22
    %p28 = scmp.eq.s32.totalorder %s9, 0
    %p29 = por %p27, %p28
    %p30 = scmp.ne.s32.totalorder %s19, %s22
    %p31 = scmp.eq.s32.totalorder %s14, 1
    %p32 = por %p30, %p31
    %p33 = scmp.ne.s32.totalorder %s22, %s23
    %p34 = scmp.eq.s32.totalorder %s14, 0
    %p35 = por %p33, %p34
    %p36 = scmp.ne.s32.totalorder %s22, %s23
    %p37 = scmp.eq.s32.totalorder %s15, 1
    %p38 = por %p36, %p37
    %p40 = scmp.ne.s32.totalorder %s23, %s39
    %p41 = scmp.eq.s32.totalorder %s15, 0
    %p42 = por %p40, %p41
    %s44 = sadd.s32 %s43, 1
    %p47 = scmp.eq.s32.totalorder %s9, 1
    %p48 = scmp.ne.s32.totalorder %s43, %s45
    %p49 = scmp.eq.s32.totalorder %s9, 0
    %p50 = por %p48, %p49
    %p51 = scmp.ne.s32.totalorder %s43, %s45
    %p52 = scmp.eq.s32.totalorder %s14, 1
    %p53 = por %p51, %p52
    %p54 = scmp.ne.s32.totalorder %s45, %s46
    %p55 = scmp.eq.s32.totalorder %s14, 0
    %p56 = por %p54, %p55
    %p57 = scmp.ne.s32.totalorder %s45, %s46
    %p58 = scmp.eq.s32.totalorder %s15, 1
    %p59 = por %p57, %p58
    %p61 = scmp.ne.s32.totalorder %s46, %s60
    %p62 = scmp.eq.s32.totalorder %s15, 0
    %p63 = por %p61, %p62
    %s65 = sadd.s32 %s64, 1
    %p68 = scmp.eq.s32.totalorder %s9, 1
    %p69 = scmp.ne.s32.totalorder %s64, %s66
    %p70 = scmp.eq.s32.totalorder %s9, 0
    %p71 = por %p69, %p70
    %p72 = scmp.ne.s32.totalorder %s64, %s66
    %p73 = scmp.eq.s32.totalorder %s14, 1
    %p74 = por %p72, %p73
    %p75 = scmp.ne.s32.totalorder %s66, %s67
    %p76 = scmp.eq.s32.totalorder %s14, 0
    %p77 = por %p75, %p76
    %p78 = scmp.ne.s32.totalorder %s66, %s67
    %p79 = scmp.eq.s32.totalorder %s15, 1
    %p80 = por %p78, %p79
    %p82 = scmp.ne.s32.totalorder %s67, %s81
    %p83 = scmp.eq.s32.totalorder %s15, 0
    %p84 = por %p82, %p83
    %s85 = ssub.s32 %s9, %s16
    %p86 = scmp.eq.s32.totalorder %s85, 0
    %s88 = sadd.s32 %s87, 1
    %s89 = scalar_select %p86, %s87, %s88
    %p92 = pneg %p86
    %p93 = scmp.eq.s32.totalorder %s9, 1
    %p94 = por %p92, %p93
    %p95 = scmp.ne.s32.totalorder %s87, %s90
    %p96 = scmp.eq.s32.totalorder %s9, 0
    %p97 = por %p95, %p96
    %p98 = scmp.ne.s32.totalorder %s87, %s90
    %p99 = scmp.eq.s32.totalorder %s14, 1
    %p100 = por %p98, %p99
    %p101 = scmp.ne.s32.totalorder %s90, %s91
    %p102 = scmp.eq.s32.totalorder %s14, 0
    %p103 = por %p101, %p102
    %p104 = scmp.ne.s32.totalorder %s90, %s91
    %p105 = scmp.eq.s32.totalorder %s15, 1
    %p106 = por %p104, %p105
    %p108 = scmp.ne.s32.totalorder %s91, %s107
    %p109 = scmp.eq.s32.totalorder %s15, 0
    %p110 = por %p108, %p109
    %p111 = scmp.le.s32.totalorder 1, %s9
    %p112 = scmp.lt.s32.totalorder %s9, 3
    %p113 = pnand %p111, %p112
    %p114 = pneg %p113
    // Predicated region
    $region9: #{a_call__.13} parent=5 // pred_check
      _
    $region10: #{a_call__.13} parent=5 // pred_check_branch
      %116 = sbr.rel (%p113) target = $region12
    $region11: #{a_call__.13} parent=5 // pred_region
      %s117 = ssub.s32 %s9, 1
      // Predicated region
      $region13: #{a_call__.13} parent=11 // pred_check
        %p118 = pneg %p56
      $region14: #{a_call__.13} parent=11 // pred_check_branch
        %120 = sbr.rel (%p118) target = $region16
      $region15: #{a_call__.13} parent=11 // pred_region
        _
      $region16: #{a_call__.13} parent=11 // pred_fallthru
        _
      // Predicated region
      $region17: #{a_call__.13} parent=11 // pred_check
        %p121 = pneg %p77
      $region18: #{a_call__.13} parent=11 // pred_check_branch
        %123 = sbr.rel (%p121) target = $region20
      $region19: #{a_call__.13} parent=11 // pred_region
        _
      $region20: #{a_call__.13} parent=11 // pred_fallthru
        _
    $region12: #{a_call__.13} parent=5 // pred_fallthru
      _
    %p124 = scmp.lt.s32.totalorder %s9, 2
    // Predicated region
    $region21: #{a_call__.13} parent=5 // pred_check
      %p125 = pneg %p124
    $region22: #{a_call__.13} parent=5 // pred_check_branch
      %127 = sbr.rel (%p125) target = $region24
    $region23: #{a_call__.13} parent=5 // pred_region
      // Predicated region
      $region25: #{a_call__.13} parent=23 // pred_check
        %p128 = pneg %p29
      $region26: #{a_call__.13} parent=23 // pred_check_branch
        %130 = sbr.rel (%p128) target = $region28
      $region27: #{a_call__.13} parent=23 // pred_region
        %p131 = scmp.lt.s32.totalorder %s9, 1
        %s132 = scalar_select %p131, %s9, 1
        %s133 = smul.addr %s132, 4
        %s134 = smul.addr %s133, 8
        %s135 = scalar_lea.vmem %s0, %s134
      $region28: #{a_call__.13} parent=23 // pred_fallthru
        _
    $region24: #{a_call__.13} parent=5 // pred_fallthru
      _
    %p136 = scmp.le.s32.totalorder 1, %s9
    %p137 = scmp.lt.s32.totalorder %s9, 3
    %p138 = pnand %p136, %p137
    %p139 = pneg %p138
    // Predicated region
    $region29: #{a_call__.13} parent=5 // pred_check
      _
    $region30: #{a_call__.13} parent=5 // pred_check_branch
      %141 = sbr.rel (%p138) target = $region32
    $region31: #{a_call__.13} parent=5 // pred_region
      %s142 = ssub.s32 %s9, 1
      %p143 = scmp.lt.s32.totalorder %s14, 1
      %s144 = scalar_select %p143, %s14, 1
      %s145 = smul.addr %s144, 4
      %s146 = smul.addr %s145, 8
      %s147 = scalar_lea.vmem %s0, %s146
      %p148 = pneg %p35
      %p149 = pneg %p32
      %p150 = pneg %p56
      %p151 = pneg %p53
      %p152 = pneg %p77
      %p153 = pneg %p74
      %p154 = pneg %p103
      %p155 = pneg %p100
      %p156 = scmp.lt.s32.totalorder %s14, 1
      %s157 = scalar_select %p156, %s14, 1
      %s158 = smul.addr %s157, 4
      %s159 = smul.addr %s158, 8
      %s160 = scalar_lea.vmem %s3, %s159
      %p161 = scmp.lt.s32.totalorder %s14, 1
      %s162 = scalar_select %p161, %s14, 1
      %s163 = smul.addr %s162, 4
      %s164 = smul.addr %s163, 8
      %s165 = scalar_lea.vmem %s0, %s164
      %p166 = scmp.lt.s32.totalorder %s14, 1
      %s167 = scalar_select %p166, %s14, 1
      %s168 = smul.addr %s167, 4
      %s169 = smul.addr %s168, 8
      %s170 = scalar_lea.vmem %s3, %s169
      %v172 = vld [vmem:[%s165] sm:$0xff]
      %v173 = vld [vmem:[%s165 + $0x8] sm:$0xff]
      %v174 = vld [vmem:[%s165 + $0x10] sm:$0xff]
      %v175 = vld [vmem:[%s165 + $0x18] sm:$0xff]
      %v176 = vld [vmem:[%s2] sm:$0xff]
      %v177 = vld [vmem:[%s2 + $0x8] sm:$0xff]
      %182 = vrot.lane.b32.xlu0 %v172, 127
      %v183 = vpop.permute.xlu0 %182
      %184 = vrot.lane.b32.xlu0 %v173, 127
      %v185 = vpop.permute.xlu0 %184
      %186 = vrot.lane.b32.xlu0 %v174, 127
      %v187 = vpop.permute.xlu0 %186
      %188 = vrot.lane.b32.xlu0 %v175, 127
      %v189 = vpop.permute.xlu0 %188
      %v194 = vpack.c.bf16 %v173, %v172
      %v195 = vpack.c.bf16 %v175, %v174
      %v196 = vpack.c.bf16 %v185, %v183
      %v197 = vpack.c.bf16 %v189, %v187
      %v198 = vld [vmem:[%s1] sm:$0xf]
      %v199 = vld [vmem:[%s1 + $0x4] sm:$0xf]
      %201 = vset.pattern.permute.xlu0 0
      %202 = vperm.xlu0 %201, %v176
      %v203 = vpop.permute.xlu0 %202
      %206 = vset.pattern.permute.xlu0 0
      %207 = vperm.xlu0 %206, %v177
      %v208 = vpop.permute.xlu0 %207
      %v212 = vunpack.c.l.b16 %v198
      %v213 = vunpack.c.l.b16 %v199
      %v214 = vpack.c.b16 %v213, %v212
      %vm215 = vcmask 523264
      %v217 = vsel %vm215, %v214, 0
      %219 = vmatprep.subr.bf16.mxu0 0
      %220 = vmatpush1.bf16.msra.mxu0 0
      %221 = vmatprep.subr.bf16.mxu0 0
      %222 = vmatpush1.bf16.msra.mxu0 0
      %223 = vmatprep.subr.bf16.mxu0 0
      %224 = vmatpush1.bf16.msra.mxu0 0
      %225 = vmatprep.subr.bf16.mxu0 0
      %226 = vmatpush1.bf16.msra.mxu0 0
      %227 = vmatprep.subr.bf16.mxu0 0
      %228 = vmatpush1.bf16.msra.mxu0 %v197
      %229 = vmatprep.subr.bf16.mxu0 0
      %230 = vmatpush1.bf16.msra.mxu0 %v196
      %231 = vmatprep.subr.bf16.mxu0 0
      %232 = vmatpush1.bf16.msra.mxu0 %v195
      %233 = vmatprep.subr.bf16.mxu0 0
      %234 = vmatpush1.bf16.msra.mxu0 %v194
      %235 = vmatprep.subr.bf16.mxu0 0
      %236 = vmatpush2.bf16.msra.mxu0 0
      %237 = vmatprep.subr.bf16.mxu0 0
      %238 = vmatpush2.bf16.msra.mxu0 0
      %239 = vmatprep.subr.bf16.mxu0 0
      %240 = vmatpush2.bf16.msra.mxu0 0
      %241 = vmatprep.subr.bf16.mxu0 0
      %242 = vmatpush2.bf16.msra.mxu0 0
      %243 = vmatprep.subr.bf16.mxu0 0
      %244 = vmatpush2.bf16.msra.mxu0 0
      %245 = vmatprep.subr.bf16.mxu0 0
      %246 = vmatpush2.bf16.msra.mxu0 0
      %247 = vmatprep.subr.bf16.mxu0 0
      %248 = vmatpush2.bf16.msra.mxu0 0
      %249 = vmatprep.subr.bf16.mxu0 0
      %250 = vmatpush2.bf16.msra.mxu0 0
      %251 = vmatprep.mubr.bf16.mxu0 0
      %252 = vmatmul.mubr.bf16.gmra.mxu0 %v217
      %v253 = vpop.f32.mrf.mxu0
      %v254 = vadd.f32 %v203, %v253
      %v255 = vpop.f32.mrf.mxu0
      %v256 = vpop.f32.mrf.mxu0
      %v257 = vadd.f32 %v208, %v256
      %v258 = vpop.f32.mrf.mxu0
      %259 = vdwg.mxu0
      %s260 = scalar_lea.vmem %s1, 8
      %v261 = vld [vmem:[%s260] sm:$0xf]
      %v262 = vld [vmem:[%s260 + $0x4] sm:$0xf]
      %v265 = vunpack.c.l.b16 %v261
      %v266 = vunpack.c.l.b16 %v262
      %v267 = vpack.c.b16 %v266, %v265
      %272 = vrot.lane.b32.xlu0 %v194, 127
      %v273 = vpop.permute.xlu0 %272
      %274 = vrot.lane.b32.xlu0 %v195, 127
      %v275 = vpop.permute.xlu0 %274
      %276 = vrot.lane.b32.xlu0 %v196, 127
      %v277 = vpop.permute.xlu0 %276
      %278 = vrot.lane.b32.xlu0 %v197, 127
      %v279 = vpop.permute.xlu0 %278
      %v285 = vsel %vm215, %v267, 0
      %287 = vmatprep.subr.bf16.mxu0 0
      %288 = vmatpush1.bf16.msra.mxu0 0
      %289 = vmatprep.subr.bf16.mxu0 0
      %290 = vmatpush1.bf16.msra.mxu0 0
      %291 = vmatprep.subr.bf16.mxu0 0
      %292 = vmatpush1.bf16.msra.mxu0 0
      %293 = vmatprep.subr.bf16.mxu0 0
      %294 = vmatpush1.bf16.msra.mxu0 0
      %295 = vmatprep.subr.bf16.mxu0 0
      %296 = vmatpush1.bf16.msra.mxu0 %v279
      %297 = vmatprep.subr.bf16.mxu0 0
      %298 = vmatpush1.bf16.msra.mxu0 %v277
      %299 = vmatprep.subr.bf16.mxu0 0
      %300 = vmatpush1.bf16.msra.mxu0 %v275
      %301 = vmatprep.subr.bf16.mxu0 0
      %302 = vmatpush1.bf16.msra.mxu0 %v273
      %303 = vmatprep.subr.bf16.mxu0 0
      %304 = vmatpush2.bf16.msra.mxu0 0
      %305 = vmatprep.subr.bf16.mxu0 0
      %306 = vmatpush2.bf16.msra.mxu0 0
      %307 = vmatprep.subr.bf16.mxu0 0
      %308 = vmatpush2.bf16.msra.mxu0 0
      %309 = vmatprep.subr.bf16.mxu0 0
      %310 = vmatpush2.bf16.msra.mxu0 0
      %311 = vmatprep.subr.bf16.mxu0 0
      %312 = vmatpush2.bf16.msra.mxu0 0
      %313 = vmatprep.subr.bf16.mxu0 0
      %314 = vmatpush2.bf16.msra.mxu0 0
      %315 = vmatprep.subr.bf16.mxu0 0
      %316 = vmatpush2.bf16.msra.mxu0 0
      %317 = vmatprep.subr.bf16.mxu0 0
      %318 = vmatpush2.bf16.msra.mxu0 0
      %319 = vmatprep.mubr.bf16.mxu0 0
      %320 = vmatmul.mubr.bf16.gmra.mxu0 %v285
      %v321 = vpop.f32.mrf.mxu0
      %v322 = vadd.f32 %v203, %v321
      %v323 = vpop.f32.mrf.mxu0
      %v324 = vpop.f32.mrf.mxu0
      %v325 = vadd.f32 %v208, %v324
      %v326 = vpop.f32.mrf.mxu0
      %327 = vdwg.mxu0
      %vm328 = vcmask 31744
      %v329 = vsel %vm328, %v254, 0.0
      %330 = vadd.xlane.f32.xlu0 %v329
      %v331 = vpop.xlane.xlu0 %330
      %v332 = vsel %vm328, %v257, 0.0
      %333 = vadd.xlane.f32.xlu0 %v332
      %v334 = vpop.xlane.xlu0 %333
      %v335 = vmul.f32 %v254, %v254
      %v336 = vmul.f32 %v257, %v257
      %v337 = vsel %vm328, %v335, 0.0
      %338 = vadd.xlane.f32.xlu0 %v337
      %v339 = vpop.xlane.xlu0 %338
      %v340 = vsel %vm328, %v336, 0.0
      %341 = vadd.xlane.f32.xlu0 %v340
      %v342 = vpop.xlane.xlu0 %341
      %v343 = vsel %vm328, %v322, 0.0
      %344 = vadd.xlane.f32.xlu0 %v343
      %v345 = vpop.xlane.xlu0 %344
      %v346 = vsel %vm328, %v325, 0.0
      %347 = vadd.xlane.f32.xlu0 %v346
      %v348 = vpop.xlane.xlu0 %347
      %v349 = vadd.f32 %v331, %v345
      %v350 = vadd.f32 %v334, %v348
      %v351 = vmul.f32 %v322, %v322
      %v352 = vmul.f32 %v325, %v325
      %v353 = vsel %vm328, %v351, 0.0
      %354 = vadd.xlane.f32.xlu0 %v353
      %v355 = vpop.xlane.xlu0 %354
      %v356 = vsel %vm328, %v352, 0.0
      %357 = vadd.xlane.f32.xlu0 %v356
      %v358 = vpop.xlane.xlu0 %357
      %v359 = vadd.f32 %v339, %v355
      %v360 = vadd.f32 %v342, %v358
      %v361 = vmul.f32 %v349, 0.125
      %v362 = vmul.f32 %v350, 0.125
      %v363 = vmul.f32 %v359, 0.125
      %v364 = vmul.f32 %v360, 0.125
      %v365 = vmul.f32 %v361, %v361
      %v366 = vmul.f32 %v362, %v362
      %v367 = vsub.f32 %v363, %v365
      %v368 = vsub.f32 %v364, %v366
      %v369 = vmax.f32 %v367, 0.0
      %v370 = vmax.f32 %v368, 0.0
      %v371 = vadd.f32 %v369, 1e-05
      %v372 = vadd.f32 %v370, 1e-05
      %v373 = vrsqrt.pop %v371
      %v374 = vrsqrt.pop %v372
      %v375 = vsub.f32 %v254, %v361
      %v376 = vsub.f32 %v257, %v362
      %v377 = vmul.f32 %v375, %v373
      %v378 = vmul.f32 %v376, %v374
      %v379 = vmax.f32 %v377, 0.0
      %v380 = vmax.f32 %v378, 0.0
      %381 = vst.msk [vmem:[%s170] sm:$0xff] %vm328, %v379
      %382 = vst.msk [vmem:[%s170 + $0x8] sm:$0xff] %vm328, %v380
      %v383 = vsub.f32 %v322, %v361
      %v384 = vsub.f32 %v325, %v362
      %v385 = vmul.f32 %v383, %v373
      %v386 = vmul.f32 %v384, %v374
      %v387 = vmax.f32 %v385, 0.0
      %v388 = vmax.f32 %v386, 0.0
      %s389 = scalar_lea.vmem %s170, 16
      %390 = vst.msk [vmem:[%s389] sm:$0xff] %vm328, %v387
      %391 = vst.msk [vmem:[%s389 + $0x8] sm:$0xff] %vm328, %v388
      %p392 = scmp.lt.s32.totalorder %s14, 1
      %s393 = scalar_select %p392, %s14, 1
      %s394 = smul.addr %s393, 4
      %s395 = smul.addr %s394, 8
      %s396 = scalar_lea.vmem %s3, %s395
      // Predicated region
      $region33: #{a_call__.13} parent=31 // pred_check
        %p397 = pneg %p100
      $region34: #{a_call__.13} parent=31 // pred_check_branch
        %399 = sbr.rel (%p397) target = $region36
      $region35: #{a_call__.13} parent=31 // pred_region
        _
      $region36: #{a_call__.13} parent=31 // pred_fallthru
        _
    $region32: #{a_call__.13} parent=5 // pred_fallthru
      _
    %p400 = scmp.le.s32.totalorder 2, %s9
    // Predicated region
    $region37: #{a_call__.13} parent=5 // pred_check
      %p401 = pneg %p400
    $region38: #{a_call__.13} parent=5 // pred_check_branch
      %403 = sbr.rel (%p401) target = $region40
    $region39: #{a_call__.13} parent=5 // pred_region
      %s404 = ssub.s32 %s9, 2
      // Predicated region
      $region41: #{a_call__.13} parent=39 // pred_check
        %p405 = pneg %p106
      $region42: #{a_call__.13} parent=39 // pred_check_branch
        %407 = sbr.rel (%p405) target = $region44
      $region43: #{a_call__.13} parent=39 // pred_region
        %p408 = scmp.lt.s32.totalorder %s15, 1
        %s409 = scalar_select %p408, %s15, 1
        %s410 = smul.addr %s409, 4
        %s411 = smul.addr %s410, 8
        %s412 = scalar_lea.vmem %s3, %s411
      $region44: #{a_call__.13} parent=39 // pred_fallthru
        _
    $region40: #{a_call__.13} parent=5 // pred_fallthru
      _
  $region6: #{a_call__.13} parent=0 // loop_footer
    %s13 = sadd.s32 1, %s9
  $region7: #{a_call__.13} parent=0 // loop_footer_branch
    %8 = sbr.rel target = $region3
  $region8: #{a_call__.13} parent=0 // loop_exit
    _

// kernel: a_call__.15
$region0: #{a_call__.15}
  #allocation0 [shape = 'u32[]', space=smem, size = 0x4, offset = 0x4, fixed_abs, tag = 'smem constant byte address 0x4 - core index']
  #allocation1 [shape = 'u32[144,128]{1,0:T(1,128)}', space=vmem, size = 0x12000, scoped, tag = 'internal scratch']
  %s0 = inlined_call_operand.vmem [shape: f32[2,8,22], index: 0, kind: input, shape index: {}]
  %s1 = inlined_call_operand.vmem [shape: bf16[1,8,56], index: 1, kind: input, shape index: {}]
  %s2 = inlined_call_operand.vmem [shape: f32[8,1], index: 2, kind: input, shape index: {}]
  %s3 = inlined_call_operand.hbm [shape: f32[2,1,8,16], index: 3, kind: output, shape index: {}]
  %s4 = sld [smem:[#allocation0]]
  $region45: #{a_call__.15} parent=0
    _
  %s6 = ssub.s32 1, %s4
  %s7 = scalar_select 0, %s6, %s4
  $region1: #{a_call__.15} parent=0
    #allocation2 [shape = 'u8[8192]{0}', space=vmem, size = 0x2000, scoped, tag = 'output window, operand 0']
    #allocation3 [shape = 's32[2]{0}', space=sflag, size = 0x8, scoped, tag = 'scoped memory for a_call__.15']
    %8 = vsyncpa [#allocation3], 0
    %s9 = scalar_lea.sflag [#allocation3], 1
    %10 = vsyncpa %s9, 0
    loop: start=0, step=1, limit=4
    $region2: #{a_call__.15} parent=1 // loop_pre_header
      _
    $region3: #{a_call__.15} parent=1 // loop_header
      %s12 = sphi 0, %s16
      %p13 = scmp.ge.s32.totalorder %s12, 4
      %s22 = sphi 0, %s24
      %s25 = sphi 0, %s22
      %s26 = sphi 0, %s25
      %s42 = sphi 0, %s26
      %s46 = sphi 0, %s46
      %s48 = sphi 0, %s46
      %s49 = sphi 0, %s48
      %s63 = sphi 0, %s49
      %s67 = sphi 0, %s67
      %s69 = sphi 0, %s67
      %s70 = sphi 0, %s69
      %s84 = sphi 0, %s70
      %s90 = sphi 0, %s92
      %s93 = sphi 0, %s90
      %s94 = sphi 0, %s93
      %s110 = sphi 0, %s94
    $region4: #{a_call__.15} parent=1 // loop_header_branch
      %15 = sbr.rel (%p13) target = $region8
    $region5: #{a_call__.15} parent=1 // loop_body
      %s17 = ssub.s32 %s12, 1
      %s18 = ssub.s32 %s12, 2
      %s19 = sadd.s32 %s12, 1
      %s20 = ssub.s32 %s12, %s19
      %p21 = scmp.eq.s32.totalorder %s20, 0
      %s23 = sadd.s32 %s22, 1
      %s24 = scalar_select %p21, %s22, %s23
      %p27 = pneg %p21
      %p28 = scmp.eq.s32.totalorder %s12, 1
      %p29 = por %p27, %p28
      %p30 = scmp.ne.s32.totalorder %s22, %s25
      %p31 = scmp.eq.s32.totalorder %s12, 0
      %p32 = por %p30, %p31
      %p33 = scmp.ne.s32.totalorder %s22, %s25
      %p34 = scmp.eq.s32.totalorder %s17, 1
      %p35 = por %p33, %p34
      %p36 = scmp.ne.s32.totalorder %s25, %s26
      %p37 = scmp.eq.s32.totalorder %s17, 0
      %p38 = por %p36, %p37
      %p39 = scmp.ne.s32.totalorder %s25, %s26
      %p40 = scmp.eq.s32.totalorder %s18, 1
      %p41 = por %p39, %p40
      %p43 = scmp.ne.s32.totalorder %s26, %s42
      %p44 = scmp.eq.s32.totalorder %s18, 0
      %p45 = por %p43, %p44
      %s47 = sadd.s32 %s46, 1
      %p50 = scmp.eq.s32.totalorder %s12, 1
      %p51 = scmp.ne.s32.totalorder %s46, %s48
      %p52 = scmp.eq.s32.totalorder %s12, 0
      %p53 = por %p51, %p52
      %p54 = scmp.ne.s32.totalorder %s46, %s48
      %p55 = scmp.eq.s32.totalorder %s17, 1
      %p56 = por %p54, %p55
      %p57 = scmp.ne.s32.totalorder %s48, %s49
      %p58 = scmp.eq.s32.totalorder %s17, 0
      %p59 = por %p57, %p58
      %p60 = scmp.ne.s32.totalorder %s48, %s49
      %p61 = scmp.eq.s32.totalorder %s18, 1
      %p62 = por %p60, %p61
      %p64 = scmp.ne.s32.totalorder %s49, %s63
      %p65 = scmp.eq.s32.totalorder %s18, 0
      %p66 = por %p64, %p65
      %s68 = sadd.s32 %s67, 1
      %p71 = scmp.eq.s32.totalorder %s12, 1
      %p72 = scmp.ne.s32.totalorder %s67, %s69
      %p73 = scmp.eq.s32.totalorder %s12, 0
      %p74 = por %p72, %p73
      %p75 = scmp.ne.s32.totalorder %s67, %s69
      %p76 = scmp.eq.s32.totalorder %s17, 1
      %p77 = por %p75, %p76
      %p78 = scmp.ne.s32.totalorder %s69, %s70
      %p79 = scmp.eq.s32.totalorder %s17, 0
      %p80 = por %p78, %p79
      %p81 = scmp.ne.s32.totalorder %s69, %s70
      %p82 = scmp.eq.s32.totalorder %s18, 1
      %p83 = por %p81, %p82
      %p85 = scmp.ne.s32.totalorder %s70, %s84
      %p86 = scmp.eq.s32.totalorder %s18, 0
      %p87 = por %p85, %p86
      %s88 = ssub.s32 %s12, %s19
      %p89 = scmp.eq.s32.totalorder %s88, 0
      %s91 = sadd.s32 %s90, 1
      %s92 = scalar_select %p89, %s90, %s91
      %p95 = pneg %p89
      %p96 = scmp.eq.s32.totalorder %s12, 1
      %p97 = por %p95, %p96
      %p98 = scmp.ne.s32.totalorder %s90, %s93
      %p99 = scmp.eq.s32.totalorder %s12, 0
      %p100 = por %p98, %p99
      %p101 = scmp.ne.s32.totalorder %s90, %s93
      %p102 = scmp.eq.s32.totalorder %s17, 1
      %p103 = por %p101, %p102
      %p104 = scmp.ne.s32.totalorder %s93, %s94
      %p105 = scmp.eq.s32.totalorder %s17, 0
      %p106 = por %p104, %p105
      %p107 = scmp.ne.s32.totalorder %s93, %s94
      %p108 = scmp.eq.s32.totalorder %s18, 1
      %p109 = por %p107, %p108
      %p111 = scmp.ne.s32.totalorder %s94, %s110
      %p112 = scmp.eq.s32.totalorder %s18, 0
      %p113 = por %p111, %p112
      %p114 = scmp.le.s32.totalorder 1, %s12
      %p115 = scmp.lt.s32.totalorder %s12, 3
      %p116 = pnand %p114, %p115
      %p117 = pneg %p116
      // Predicated region
      $region9: #{a_call__.15} parent=5 // pred_check
        _
      $region10: #{a_call__.15} parent=5 // pred_check_branch
        %119 = sbr.rel (%p116) target = $region12
      $region11: #{a_call__.15} parent=5 // pred_region
        %s120 = ssub.s32 %s12, 1
        // Predicated region
        $region13: #{a_call__.15} parent=11 // pred_check
          %p121 = pneg %p59
        $region14: #{a_call__.15} parent=11 // pred_check_branch
          %123 = sbr.rel (%p121) target = $region16
        $region15: #{a_call__.15} parent=11 // pred_region
          _
        $region16: #{a_call__.15} parent=11 // pred_fallthru
          _
        // Predicated region
        $region17: #{a_call__.15} parent=11 // pred_check
          %p124 = pneg %p80
        $region18: #{a_call__.15} parent=11 // pred_check_branch
          %126 = sbr.rel (%p124) target = $region20
        $region19: #{a_call__.15} parent=11 // pred_region
          _
        $region20: #{a_call__.15} parent=11 // pred_fallthru
          _
      $region12: #{a_call__.15} parent=5 // pred_fallthru
        _
      %p127 = scmp.lt.s32.totalorder %s12, 2
      // Predicated region
      $region21: #{a_call__.15} parent=5 // pred_check
        %p128 = pneg %p127
      $region22: #{a_call__.15} parent=5 // pred_check_branch
        %130 = sbr.rel (%p128) target = $region24
      $region23: #{a_call__.15} parent=5 // pred_region
        // Predicated region
        $region25: #{a_call__.15} parent=23 // pred_check
          %p131 = pneg %p32
        $region26: #{a_call__.15} parent=23 // pred_check_branch
          %133 = sbr.rel (%p131) target = $region28
        $region27: #{a_call__.15} parent=23 // pred_region
          %p134 = scmp.lt.s32.totalorder %s12, 1
          %s135 = scalar_select %p134, %s12, 1
          %s136 = smul.addr %s135, 8
          %s137 = scalar_lea.vmem %s0, %s136
        $region28: #{a_call__.15} parent=23 // pred_fallthru
          _
      $region24: #{a_call__.15} parent=5 // pred_fallthru
        _
      %p138 = scmp.le.s32.totalorder 1, %s12
      %p139 = scmp.lt.s32.totalorder %s12, 3
      %p140 = pnand %p138, %p139
      %p141 = pneg %p140
      // Predicated region
      $region29: #{a_call__.15} parent=5 // pred_check
        _
      $region30: #{a_call__.15} parent=5 // pred_check_branch
        %143 = sbr.rel (%p140) target = $region32
      $region31: #{a_call__.15} parent=5 // pred_region
        %s144 = ssub.s32 %s12, 1
        %p145 = scmp.lt.s32.totalorder %s17, 1
        %s146 = scalar_select %p145, %s17, 1
        %s147 = smul.addr %s146, 8
        %s148 = scalar_lea.vmem %s0, %s147
        %p149 = pneg %p38
        %p150 = pneg %p35
        %p151 = pneg %p59
        %p152 = pneg %p56
        %p153 = pneg %p80
        %p154 = pneg %p77
        %p155 = pneg %p106
        %p156 = pneg %p103
        %s157 = sand.u32 %s93, 1
        %s158 = scalar_lea.sflag [#allocation3], %s157
        %s159 = sand.u32 %s93, 1
        %s160 = smul.addr %s159, 8
        %s161 = scalar_lea.vmem [#allocation2], %s160
        %p162 = scmp.lt.s32.totalorder %s17, 1
        %s163 = scalar_select %p162, %s17, 1
        %s164 = smul.addr %s163, 8
        %s165 = scalar_lea.vmem %s0, %s164
        %v167 = vld [vmem:[%s165] sm:$0xff]
        %v168 = vld [vmem:[%s2] sm:$0xff]
        %170 = vrot.lane.b32.xlu0 %v167, 127
        %v171 = vpop.permute.xlu0 %170
        %173 = vrot.lane.b32.xlu0 %v167, 126
        %v174 = vpop.permute.xlu0 %173
        %176 = vrot.lane.b32.xlu0 %v167, 125
        %v177 = vpop.permute.xlu0 %176
        %179 = vrot.lane.b32.xlu0 %v167, 124
        %v180 = vpop.permute.xlu0 %179
        %182 = vrot.lane.b32.xlu0 %v167, 123
        %v183 = vpop.permute.xlu0 %182
        %185 = vrot.lane.b32.xlu0 %v167, 122
        %v186 = vpop.permute.xlu0 %185
        %v188 = vpack.c.bf16 %v171, %v167
        %v189 = vpack.c.bf16 %v177, %v174
        %v190 = vpack.c.bf16 %v183, %v180
        %v191 = vpack.c.bf16 %v186, %v186
        %v192 = vld [vmem:[%s1] sm:$0xf]
        %194 = vset.pattern.permute.xlu0 0
        %195 = vperm.xlu0 %194, %v168
        %v196 = vpop.permute.xlu0 %195
        %vm198 = vcmask 457728
        %v200 = vsel %vm198, %v192, 0
        %vm202 = vcmask 1043456
        %v204 = vsel %vm202, %v191, 0
        %206 = vmatprep.subr.bf16.mxu0 0
        %207 = vmatpush1.bf16.msra.mxu0 0
        %208 = vmatprep.subr.bf16.mxu0 0
        %209 = vmatpush1.bf16.msra.mxu0 0
        %210 = vmatprep.subr.bf16.mxu0 0
        %211 = vmatpush1.bf16.msra.mxu0 0
        %212 = vmatprep.subr.bf16.mxu0 0
        %213 = vmatpush1.bf16.msra.mxu0 0
        %214 = vmatprep.subr.bf16.mxu0 0
        %215 = vmatpush1.bf16.msra.mxu0 %v204
        %216 = vmatprep.subr.bf16.mxu0 0
        %217 = vmatpush1.bf16.msra.mxu0 %v190
        %218 = vmatprep.subr.bf16.mxu0 0
        %219 = vmatpush1.bf16.msra.mxu0 %v189
        %220 = vmatprep.subr.bf16.mxu0 0
        %221 = vmatpush1.bf16.msra.mxu0 %v188
        %222 = vmatprep.subr.bf16.mxu0 0
        %223 = vmatpush2.bf16.msra.mxu0 0
        %224 = vmatprep.subr.bf16.mxu0 0
        %225 = vmatpush2.bf16.msra.mxu0 0
        %226 = vmatprep.subr.bf16.mxu0 0
        %227 = vmatpush2.bf16.msra.mxu0 0
        %228 = vmatprep.subr.bf16.mxu0 0
        %229 = vmatpush2.bf16.msra.mxu0 0
        %230 = vmatprep.subr.bf16.mxu0 0
        %231 = vmatpush2.bf16.msra.mxu0 0
        %232 = vmatprep.subr.bf16.mxu0 0
        %233 = vmatpush2.bf16.msra.mxu0 0
        %234 = vmatprep.subr.bf16.mxu0 0
        %235 = vmatpush2.bf16.msra.mxu0 0
        %236 = vmatprep.subr.bf16.mxu0 0
        %237 = vmatpush2.bf16.msra.mxu0 0
        %238 = vmatprep.mubr.bf16.mxu0 0
        %239 = vmatmul.mubr.bf16.gmra.mxu0 %v200
        %v240 = vpop.f32.mrf.mxu0
        %v241 = vadd.f32 %v196, %v240
        %v242 = vpop.f32.mrf.mxu0
        %v243 = vpop.f32.mrf.mxu0
        %v244 = vpop.f32.mrf.mxu0
        %245 = vdwg.mxu0
        %v246 = vmul.f32 %v241, 0.5
        %v247 = vtanh.pop %v246
        %v248 = vadd.f32 %v247, 1.0
        %v249 = vmul.f32 %v248, 0.5
        %vm250 = vcmask 130048
        %251 = vst.msk [vmem:[%s161] sm:$0xff] %vm250, %v249
        %s252 = sand.u32 %s93, 1
        %s253 = scalar_lea.sflag [#allocation3], %s252
        %s254 = sand.u32 %s93, 1
        %s255 = smul.addr %s254, 8
        %s256 = scalar_lea.vmem [#allocation2], %s255
        // Predicated region
        $region33: #{a_call__.15} parent=31 // pred_check
          %p257 = pneg %p103
        $region34: #{a_call__.15} parent=31 // pred_check_branch
          %259 = sbr.rel (%p257) target = $region36
        $region35: #{a_call__.15} parent=31 // pred_region
          %s261 = ssub.s32 128, 128
          %262 = vsyncadd %s253, %s261
          %s263 = smul.addr %s17, 128
          %s264 = scalar_lea.hbm %s3, %s263
          %s266 = sshll.u32 %s256, 4
          %s267 = int_to_ptr.vmem [resolvable:$true] %s266
          %269 = dma.vmem_to_hbm [thread:$0]  %s267, 128, %s264, %s253
        $region36: #{a_call__.15} parent=31 // pred_fallthru
          _
      $region32: #{a_call__.15} parent=5 // pred_fallthru
        _
      %p270 = scmp.le.s32.totalorder 2, %s12
      // Predicated region
      $region37: #{a_call__.15} parent=5 // pred_check
        %p271 = pneg %p270
      $region38: #{a_call__.15} parent=5 // pred_check_branch
        %273 = sbr.rel (%p271) target = $region40
      $region39: #{a_call__.15} parent=5 // pred_region
        %s274 = ssub.s32 %s12, 2
        // Predicated region
        $region41: #{a_call__.15} parent=39 // pred_check
          %p275 = pneg %p109
        $region42: #{a_call__.15} parent=39 // pred_check_branch
          %277 = sbr.rel (%p275) target = $region44
        $region43: #{a_call__.15} parent=39 // pred_region
          %s278 = sand.u32 %s94, 1
          %s279 = scalar_lea.sflag [#allocation3], %s278
          %s280 = sand.u32 %s94, 1
          %s281 = smul.addr %s280, 8
          %s282 = scalar_lea.vmem [#allocation2], %s281
          %283 = dma.done %s279, 128
        $region44: #{a_call__.15} parent=39 // pred_fallthru
          _
      $region40: #{a_call__.15} parent=5 // pred_fallthru
        _
    $region6: #{a_call__.15} parent=1 // loop_footer
      %s16 = sadd.s32 1, %s12
    $region7: #{a_call__.15} parent=1 // loop_footer_branch
      %11 = sbr.rel target = $region3
    $region8: #{a_call__.15} parent=1 // loop_exit
      _
    %284 = vsyncpa [#allocation3], 1
    %s285 = scalar_lea.sflag [#allocation3], 1
    %286 = vsyncpa %s285, 1

// kernel: a_call__.14
$region0: #{a_call__.14}
  #allocation0 [shape = 'u32[]', space=smem, size = 0x4, offset = 0x4, fixed_abs, tag = 'smem constant byte address 0x4 - core index']
  #allocation1 [shape = 'u32[144,128]{1,0:T(1,128)}', space=vmem, size = 0x12000, scoped, tag = 'internal scratch']
  %s0 = inlined_call_operand.vmem [shape: f32[2,16,10], index: 0, kind: input, shape index: {}]
  %s1 = inlined_call_operand.vmem [shape: bf16[2,8,32], index: 1, kind: input, shape index: {}]
  %s2 = inlined_call_operand.vmem [shape: f32[8,1], index: 2, kind: input, shape index: {}]
  %s3 = inlined_call_operand.vmem [shape: f32[2,2,8,8], index: 3, kind: output, shape index: {}]
  %s4 = sld [smem:[#allocation0]]
  $region45: #{a_call__.14} parent=0
    _
  %s6 = ssub.s32 1, %s4
  %s7 = scalar_select 0, %s6, %s4
  loop: start=0, step=1, limit=4
  $region2: #{a_call__.14} parent=0 // loop_pre_header
    _
  $region3: #{a_call__.14} parent=0 // loop_header
    %s9 = sphi 0, %s13
    %p10 = scmp.ge.s32.totalorder %s9, 4
    %s19 = sphi 0, %s21
    %s22 = sphi 0, %s19
    %s23 = sphi 0, %s22
    %s39 = sphi 0, %s23
    %s43 = sphi 0, %s43
    %s45 = sphi 0, %s43
    %s46 = sphi 0, %s45
    %s60 = sphi 0, %s46
    %s64 = sphi 0, %s64
    %s66 = sphi 0, %s64
    %s67 = sphi 0, %s66
    %s81 = sphi 0, %s67
    %s87 = sphi 0, %s89
    %s90 = sphi 0, %s87
    %s91 = sphi 0, %s90
    %s107 = sphi 0, %s91
  $region4: #{a_call__.14} parent=0 // loop_header_branch
    %12 = sbr.rel (%p10) target = $region8
  $region5: #{a_call__.14} parent=0 // loop_body
    %s14 = ssub.s32 %s9, 1
    %s15 = ssub.s32 %s9, 2
    %s16 = sadd.s32 %s9, 1
    %s17 = ssub.s32 %s9, %s16
    %p18 = scmp.eq.s32.totalorder %s17, 0
    %s20 = sadd.s32 %s19, 1
    %s21 = scalar_select %p18, %s19, %s20
    %p24 = pneg %p18
    %p25 = scmp.eq.s32.totalorder %s9, 1
    %p26 = por %p24, %p25
    %p27 = scmp.ne.s32.totalorder %s19, %s22
    %p28 = scmp.eq.s32.totalorder %s9, 0
    %p29 = por %p27, %p28
    %p30 = scmp.ne.s32.totalorder %s19, %s22
    %p31 = scmp.eq.s32.totalorder %s14, 1
    %p32 = por %p30, %p31
    %p33 = scmp.ne.s32.totalorder %s22, %s23
    %p34 = scmp.eq.s32.totalorder %s14, 0
    %p35 = por %p33, %p34
    %p36 = scmp.ne.s32.totalorder %s22, %s23
    %p37 = scmp.eq.s32.totalorder %s15, 1
    %p38 = por %p36, %p37
    %p40 = scmp.ne.s32.totalorder %s23, %s39
    %p41 = scmp.eq.s32.totalorder %s15, 0
    %p42 = por %p40, %p41
    %s44 = sadd.s32 %s43, 1
    %p47 = scmp.eq.s32.totalorder %s9, 1
    %p48 = scmp.ne.s32.totalorder %s43, %s45
    %p49 = scmp.eq.s32.totalorder %s9, 0
    %p50 = por %p48, %p49
    %p51 = scmp.ne.s32.totalorder %s43, %s45
    %p52 = scmp.eq.s32.totalorder %s14, 1
    %p53 = por %p51, %p52
    %p54 = scmp.ne.s32.totalorder %s45, %s46
    %p55 = scmp.eq.s32.totalorder %s14, 0
    %p56 = por %p54, %p55
    %p57 = scmp.ne.s32.totalorder %s45, %s46
    %p58 = scmp.eq.s32.totalorder %s15, 1
    %p59 = por %p57, %p58
    %p61 = scmp.ne.s32.totalorder %s46, %s60
    %p62 = scmp.eq.s32.totalorder %s15, 0
    %p63 = por %p61, %p62
    %s65 = sadd.s32 %s64, 1
    %p68 = scmp.eq.s32.totalorder %s9, 1
    %p69 = scmp.ne.s32.totalorder %s64, %s66
    %p70 = scmp.eq.s32.totalorder %s9, 0
    %p71 = por %p69, %p70
    %p72 = scmp.ne.s32.totalorder %s64, %s66
    %p73 = scmp.eq.s32.totalorder %s14, 1
    %p74 = por %p72, %p73
    %p75 = scmp.ne.s32.totalorder %s66, %s67
    %p76 = scmp.eq.s32.totalorder %s14, 0
    %p77 = por %p75, %p76
    %p78 = scmp.ne.s32.totalorder %s66, %s67
    %p79 = scmp.eq.s32.totalorder %s15, 1
    %p80 = por %p78, %p79
    %p82 = scmp.ne.s32.totalorder %s67, %s81
    %p83 = scmp.eq.s32.totalorder %s15, 0
    %p84 = por %p82, %p83
    %s85 = ssub.s32 %s9, %s16
    %p86 = scmp.eq.s32.totalorder %s85, 0
    %s88 = sadd.s32 %s87, 1
    %s89 = scalar_select %p86, %s87, %s88
    %p92 = pneg %p86
    %p93 = scmp.eq.s32.totalorder %s9, 1
    %p94 = por %p92, %p93
    %p95 = scmp.ne.s32.totalorder %s87, %s90
    %p96 = scmp.eq.s32.totalorder %s9, 0
    %p97 = por %p95, %p96
    %p98 = scmp.ne.s32.totalorder %s87, %s90
    %p99 = scmp.eq.s32.totalorder %s14, 1
    %p100 = por %p98, %p99
    %p101 = scmp.ne.s32.totalorder %s90, %s91
    %p102 = scmp.eq.s32.totalorder %s14, 0
    %p103 = por %p101, %p102
    %p104 = scmp.ne.s32.totalorder %s90, %s91
    %p105 = scmp.eq.s32.totalorder %s15, 1
    %p106 = por %p104, %p105
    %p108 = scmp.ne.s32.totalorder %s91, %s107
    %p109 = scmp.eq.s32.totalorder %s15, 0
    %p110 = por %p108, %p109
    %p111 = scmp.le.s32.totalorder 1, %s9
    %p112 = scmp.lt.s32.totalorder %s9, 3
    %p113 = pnand %p111, %p112
    %p114 = pneg %p113
    // Predicated region
    $region9: #{a_call__.14} parent=5 // pred_check
      _
    $region10: #{a_call__.14} parent=5 // pred_check_branch
      %116 = sbr.rel (%p113) target = $region12
    $region11: #{a_call__.14} parent=5 // pred_region
      %s117 = ssub.s32 %s9, 1
      // Predicated region
      $region13: #{a_call__.14} parent=11 // pred_check
        %p118 = pneg %p56
      $region14: #{a_call__.14} parent=11 // pred_check_branch
        %120 = sbr.rel (%p118) target = $region16
      $region15: #{a_call__.14} parent=11 // pred_region
        _
      $region16: #{a_call__.14} parent=11 // pred_fallthru
        _
      // Predicated region
      $region17: #{a_call__.14} parent=11 // pred_check
        %p121 = pneg %p77
      $region18: #{a_call__.14} parent=11 // pred_check_branch
        %123 = sbr.rel (%p121) target = $region20
      $region19: #{a_call__.14} parent=11 // pred_region
        _
      $region20: #{a_call__.14} parent=11 // pred_fallthru
        _
    $region12: #{a_call__.14} parent=5 // pred_fallthru
      _
    %p124 = scmp.lt.s32.totalorder %s9, 2
    // Predicated region
    $region21: #{a_call__.14} parent=5 // pred_check
      %p125 = pneg %p124
    $region22: #{a_call__.14} parent=5 // pred_check_branch
      %127 = sbr.rel (%p125) target = $region24
    $region23: #{a_call__.14} parent=5 // pred_region
      // Predicated region
      $region25: #{a_call__.14} parent=23 // pred_check
        %p128 = pneg %p29
      $region26: #{a_call__.14} parent=23 // pred_check_branch
        %130 = sbr.rel (%p128) target = $region28
      $region27: #{a_call__.14} parent=23 // pred_region
        %p131 = scmp.lt.s32.totalorder %s9, 1
        %s132 = scalar_select %p131, %s9, 1
        %s133 = smul.addr %s132, 2
        %s134 = smul.addr %s133, 8
        %s135 = scalar_lea.vmem %s0, %s134
      $region28: #{a_call__.14} parent=23 // pred_fallthru
        _
    $region24: #{a_call__.14} parent=5 // pred_fallthru
      _
    %p136 = scmp.le.s32.totalorder 1, %s9
    %p137 = scmp.lt.s32.totalorder %s9, 3
    %p138 = pnand %p136, %p137
    %p139 = pneg %p138
    // Predicated region
    $region29: #{a_call__.14} parent=5 // pred_check
      _
    $region30: #{a_call__.14} parent=5 // pred_check_branch
      %141 = sbr.rel (%p138) target = $region32
    $region31: #{a_call__.14} parent=5 // pred_region
      %s142 = ssub.s32 %s9, 1
      %p143 = scmp.lt.s32.totalorder %s14, 1
      %s144 = scalar_select %p143, %s14, 1
      %s145 = smul.addr %s144, 2
      %s146 = smul.addr %s145, 8
      %s147 = scalar_lea.vmem %s0, %s146
      %p148 = pneg %p35
      %p149 = pneg %p32
      %p150 = pneg %p56
      %p151 = pneg %p53
      %p152 = pneg %p77
      %p153 = pneg %p74
      %p154 = pneg %p103
      %p155 = pneg %p100
      %p156 = scmp.lt.s32.totalorder %s14, 1
      %s157 = scalar_select %p156, %s14, 1
      %s158 = smul.addr %s157, 2
      %s159 = smul.addr %s158, 8
      %s160 = scalar_lea.vmem %s3, %s159
      %p161 = scmp.lt.s32.totalorder %s14, 1
      %s162 = scalar_select %p161, %s14, 1
      %s163 = smul.addr %s162, 2
      %s164 = smul.addr %s163, 8
      %s165 = scalar_lea.vmem %s0, %s164
      %p166 = scmp.lt.s32.totalorder %s14, 1
      %s167 = scalar_select %p166, %s14, 1
      %s168 = smul.addr %s167, 2
      %s169 = smul.addr %s168, 8
      %s170 = scalar_lea.vmem %s3, %s169
      %v172 = vld [vmem:[%s165] sm:$0xff]
      %v173 = vld [vmem:[%s165 + $0x8] sm:$0xff]
      %v174 = vld [vmem:[%s2] sm:$0xff]
      %177 = vrot.lane.b32.xlu0 %v172, 127
      %v178 = vpop.permute.xlu0 %177
      %179 = vrot.lane.b32.xlu0 %v173, 127
      %v180 = vpop.permute.xlu0 %179
      %v183 = vpack.c.bf16 %v173, %v172
      %v184 = vpack.c.bf16 %v180, %v178
      %v185 = vld [vmem:[%s1] sm:$0xf]
      %187 = vset.pattern.permute.xlu0 0
      %188 = vperm.xlu0 %187, %v174
      %v189 = vpop.permute.xlu0 %188
      %vm191 = vcmask 261120
      %v193 = vsel %vm191, %v185, 0
      %195 = vmatprep.subr.bf16.mxu0 0
      %196 = vmatpush1.bf16.msra.mxu0 0
      %197 = vmatprep.subr.bf16.mxu0 0
      %198 = vmatpush1.bf16.msra.mxu0 0
      %199 = vmatprep.subr.bf16.mxu0 0
      %200 = vmatpush1.bf16.msra.mxu0 0
      %201 = vmatprep.subr.bf16.mxu0 0
      %202 = vmatpush1.bf16.msra.mxu0 0
      %203 = vmatprep.subr.bf16.mxu0 0
      %204 = vmatpush1.bf16.msra.mxu0 0
      %205 = vmatprep.subr.bf16.mxu0 0
      %206 = vmatpush1.bf16.msra.mxu0 0
      %207 = vmatprep.subr.bf16.mxu0 0
      %208 = vmatpush1.bf16.msra.mxu0 %v184
      %209 = vmatprep.subr.bf16.mxu0 0
      %210 = vmatpush1.bf16.msra.mxu0 %v183
      %211 = vmatprep.subr.bf16.mxu0 0
      %212 = vmatpush2.bf16.msra.mxu0 0
      %213 = vmatprep.subr.bf16.mxu0 0
      %214 = vmatpush2.bf16.msra.mxu0 0
      %215 = vmatprep.subr.bf16.mxu0 0
      %216 = vmatpush2.bf16.msra.mxu0 0
      %217 = vmatprep.subr.bf16.mxu0 0
      %218 = vmatpush2.bf16.msra.mxu0 0
      %219 = vmatprep.subr.bf16.mxu0 0
      %220 = vmatpush2.bf16.msra.mxu0 0
      %221 = vmatprep.subr.bf16.mxu0 0
      %222 = vmatpush2.bf16.msra.mxu0 0
      %223 = vmatprep.subr.bf16.mxu0 0
      %224 = vmatpush2.bf16.msra.mxu0 0
      %225 = vmatprep.subr.bf16.mxu0 0
      %226 = vmatpush2.bf16.msra.mxu0 0
      %227 = vmatprep.mubr.bf16.mxu0 0
      %228 = vmatmul.mubr.bf16.gmra.mxu0 %v193
      %v229 = vpop.f32.mrf.mxu0
      %v230 = vadd.f32 %v189, %v229
      %v231 = vpop.f32.mrf.mxu0
      %v232 = vpop.f32.mrf.mxu0
      %v233 = vpop.f32.mrf.mxu0
      %234 = vdwg.mxu0
      %s235 = scalar_lea.vmem %s1, 4
      %v236 = vld [vmem:[%s235] sm:$0xf]
      %239 = vrot.lane.b32.xlu0 %v183, 127
      %v240 = vpop.permute.xlu0 %239
      %241 = vrot.lane.b32.xlu0 %v184, 127
      %v242 = vpop.permute.xlu0 %241
      %v246 = vsel %vm191, %v236, 0
      %248 = vmatprep.subr.bf16.mxu0 0
      %249 = vmatpush1.bf16.msra.mxu0 0
      %250 = vmatprep.subr.bf16.mxu0 0
      %251 = vmatpush1.bf16.msra.mxu0 0
      %252 = vmatprep.subr.bf16.mxu0 0
      %253 = vmatpush1.bf16.msra.mxu0 0
      %254 = vmatprep.subr.bf16.mxu0 0
      %255 = vmatpush1.bf16.msra.mxu0 0
      %256 = vmatprep.subr.bf16.mxu0 0
      %257 = vmatpush1.bf16.msra.mxu0 0
      %258 = vmatprep.subr.bf16.mxu0 0
      %259 = vmatpush1.bf16.msra.mxu0 0
      %260 = vmatprep.subr.bf16.mxu0 0
      %261 = vmatpush1.bf16.msra.mxu0 %v242
      %262 = vmatprep.subr.bf16.mxu0 0
      %263 = vmatpush1.bf16.msra.mxu0 %v240
      %264 = vmatprep.subr.bf16.mxu0 0
      %265 = vmatpush2.bf16.msra.mxu0 0
      %266 = vmatprep.subr.bf16.mxu0 0
      %267 = vmatpush2.bf16.msra.mxu0 0
      %268 = vmatprep.subr.bf16.mxu0 0
      %269 = vmatpush2.bf16.msra.mxu0 0
      %270 = vmatprep.subr.bf16.mxu0 0
      %271 = vmatpush2.bf16.msra.mxu0 0
      %272 = vmatprep.subr.bf16.mxu0 0
      %273 = vmatpush2.bf16.msra.mxu0 0
      %274 = vmatprep.subr.bf16.mxu0 0
      %275 = vmatpush2.bf16.msra.mxu0 0
      %276 = vmatprep.subr.bf16.mxu0 0
      %277 = vmatpush2.bf16.msra.mxu0 0
      %278 = vmatprep.subr.bf16.mxu0 0
      %279 = vmatpush2.bf16.msra.mxu0 0
      %280 = vmatprep.mubr.bf16.mxu0 0
      %281 = vmatmul.mubr.bf16.gmra.mxu0 %v246
      %v282 = vpop.f32.mrf.mxu0
      %v283 = vadd.f32 %v189, %v282
      %v284 = vpop.f32.mrf.mxu0
      %v285 = vpop.f32.mrf.mxu0
      %v286 = vpop.f32.mrf.mxu0
      %287 = vdwg.mxu0
      %vm288 = vcmask 64512
      %v289 = vsel %vm288, %v230, 0.0
      %290 = vadd.xlane.f32.xlu0 %v289
      %v291 = vpop.xlane.xlu0 %290
      %v292 = vmul.f32 %v230, %v230
      %v293 = vsel %vm288, %v292, 0.0
      %294 = vadd.xlane.f32.xlu0 %v293
      %v295 = vpop.xlane.xlu0 %294
      %v296 = vsel %vm288, %v283, 0.0
      %297 = vadd.xlane.f32.xlu0 %v296
      %v298 = vpop.xlane.xlu0 %297
      %v299 = vadd.f32 %v291, %v298
      %v300 = vmul.f32 %v283, %v283
      %v301 = vsel %vm288, %v300, 0.0
      %302 = vadd.xlane.f32.xlu0 %v301
      %v303 = vpop.xlane.xlu0 %302
      %v304 = vadd.f32 %v295, %v303
      %v305 = vmul.f32 %v299, 0.0625
      %v306 = vmul.f32 %v304, 0.0625
      %v307 = vmul.f32 %v305, %v305
      %v308 = vsub.f32 %v306, %v307
      %v309 = vmax.f32 %v308, 0.0
      %v310 = vadd.f32 %v309, 1e-05
      %v311 = vrsqrt.pop %v310
      %v312 = vsub.f32 %v230, %v305
      %v313 = vmul.f32 %v312, %v311
      %v314 = vmax.f32 %v313, 0.0
      %315 = vst.msk [vmem:[%s170] sm:$0xff] %vm288, %v314
      %v316 = vsub.f32 %v283, %v305
      %v317 = vmul.f32 %v316, %v311
      %v318 = vmax.f32 %v317, 0.0
      %s319 = scalar_lea.vmem %s170, 8
      %320 = vst.msk [vmem:[%s319] sm:$0xff] %vm288, %v318
      %p321 = scmp.lt.s32.totalorder %s14, 1
      %s322 = scalar_select %p321, %s14, 1
      %s323 = smul.addr %s322, 2
      %s324 = smul.addr %s323, 8
      %s325 = scalar_lea.vmem %s3, %s324
      // Predicated region
      $region33: #{a_call__.14} parent=31 // pred_check
        %p326 = pneg %p100
      $region34: #{a_call__.14} parent=31 // pred_check_branch
        %328 = sbr.rel (%p326) target = $region36
      $region35: #{a_call__.14} parent=31 // pred_region
        _
      $region36: #{a_call__.14} parent=31 // pred_fallthru
        _
    $region32: #{a_call__.14} parent=5 // pred_fallthru
      _
    %p329 = scmp.le.s32.totalorder 2, %s9
    // Predicated region
    $region37: #{a_call__.14} parent=5 // pred_check
      %p330 = pneg %p329
    $region38: #{a_call__.14} parent=5 // pred_check_branch
      %332 = sbr.rel (%p330) target = $region40
    $region39: #{a_call__.14} parent=5 // pred_region
      %s333 = ssub.s32 %s9, 2
      // Predicated region
      $region41: #{a_call__.14} parent=39 // pred_check
        %p334 = pneg %p106
      $region42: #{a_call__.14} parent=39 // pred_check_branch
        %336 = sbr.rel (%p334) target = $region44
      $region43: #{a_call__.14} parent=39 // pred_region
        %p337 = scmp.lt.s32.totalorder %s15, 1
        %s338 = scalar_select %p337, %s15, 1
        %s339 = smul.addr %s338, 2
        %s340 = smul.addr %s339, 8
        %s341 = scalar_lea.vmem %s3, %s340
      $region44: #{a_call__.14} parent=39 // pred_fallthru
        _
    $region40: #{a_call__.14} parent=5 // pred_fallthru
      _
  $region6: #{a_call__.14} parent=0 // loop_footer
    %s13 = sadd.s32 1, %s9
  $region7: #{a_call__.14} parent=0 // loop_footer_branch
    %8 = sbr.rel target = $region3
  $region8: #{a_call__.14} parent=0 // loop_exit
    _

</llo_original>
